<compile_context>
chip_gen: v5e
topology: v5e:2x2
jax: 0.10.0
libtpu: 0.0.40
codegen_flags: <defaults>
</compile_context>

<pallas_src>
import functools

import jax
import jax.numpy as jnp
from jax.experimental import pallas as pl
from jax.experimental.pallas import tpu as pltpu

_TAU = 2.0
_VTH = 1.0


def _round_up(x, m):
    return (x + m - 1) // m * m


# ----------------------------------------------------------------------------
# Pallas kernel 1: tiled matmul (bf16 MXU inputs, f32 accumulation)
#   optional epilogue: per-block column sum / sum-of-squares for BatchNorm stats.
# ----------------------------------------------------------------------------
def _write_stats(st_ref, y):
    s = jnp.sum(y, axis=0, keepdims=True)            # (1, bn)
    sq = jnp.sum(y * y, axis=0, keepdims=True)       # (1, bn)
    rows = jax.lax.broadcasted_iota(jnp.int32, st_ref.shape[1:], 0)  # (8, bn)
    st_ref[0] = jnp.where(rows == 0, s, jnp.where(rows == 1, sq, 0.0))


def _mm_single(a_ref, b_ref, o_ref):
    o_ref[...] = jnp.dot(a_ref[...], b_ref[...],
                         preferred_element_type=jnp.float32).astype(o_ref.dtype)


def _mm_single_stats(a_ref, b_ref, o_ref, st_ref):
    y = jnp.dot(a_ref[...], b_ref[...], preferred_element_type=jnp.float32)
    o_ref[...] = y.astype(o_ref.dtype)
    _write_stats(st_ref, y)


def _mm_acc(a_ref, b_ref, o_ref):
    @pl.when(pl.program_id(2) == 0)
    def _():
        o_ref[...] = jnp.zeros_like(o_ref)
    o_ref[...] += jnp.dot(a_ref[...], b_ref[...], preferred_element_type=jnp.float32)


def _mm_acc_stats(a_ref, b_ref, o_ref, st_ref):
    @pl.when(pl.program_id(2) == 0)
    def _():
        o_ref[...] = jnp.zeros_like(o_ref)
    o_ref[...] += jnp.dot(a_ref[...], b_ref[...], preferred_element_type=jnp.float32)

    @pl.when(pl.program_id(2) == pl.num_programs(2) - 1)
    def _():
        _write_stats(st_ref, o_ref[...])


def matmul_pallas(a, b, *, out_dtype=jnp.bfloat16, with_stats=False,
                  bm=512, bn=256, bk=512):
    """a: (M, K), b: (K, N). bf16 MXU inputs, f32 accumulate, bf16 output by default.
    with_stats=True additionally returns a (gm, 8, Np) f32 array whose rows 0/1 hold
    per-block column sum / sum-of-squares (for BatchNorm stats)."""
    M, K = a.shape
    K2, N = b.shape
    assert K == K2
    bm_ = min(bm, _round_up(M, 8))
    bn_ = min(bn, _round_up(N, 128))
    bk_ = min(bk, _round_up(K, 128))
    Mp, Np, Kp = _round_up(M, bm_), _round_up(N, bn_), _round_up(K, bk_)

    a_p = a.astype(jnp.bfloat16)     # no-op when operands are already bf16
    b_p = b.astype(jnp.bfloat16)
    if (Mp, Kp) != (M, K):
        a_p = jnp.pad(a_p, ((0, Mp - M), (0, Kp - K)))
    if (Kp, Np) != (K, N):
        b_p = jnp.pad(b_p, ((0, Kp - K), (0, Np - N)))
    gm, gn, gk = Mp // bm_, Np // bn_, Kp // bk_

    if gk == 1:     # whole K in one block: no accumulation, no k axis
        o_dtype = out_dtype
        grid = (gm, gn)
        in_specs = [pl.BlockSpec((bm_, bk_), lambda i, j: (i, 0)),
                    pl.BlockSpec((bk_, bn_), lambda i, j: (0, j))]
        o_spec = pl.BlockSpec((bm_, bn_), lambda i, j: (i, j))
        st_spec = pl.BlockSpec((1, 8, bn_), lambda i, j: (i, 0, j))
        kernel = _mm_single_stats if with_stats else _mm_single
        sem = ("parallel", "parallel")
    else:           # accumulate directly into the VMEM-resident f32 output block
        o_dtype = jnp.float32
        grid = (gm, gn, gk)
        in_specs = [pl.BlockSpec((bm_, bk_), lambda i, j, k: (i, k)),
                    pl.BlockSpec((bk_, bn_), lambda i, j, k: (k, j))]
        o_spec = pl.BlockSpec((bm_, bn_), lambda i, j, k: (i, j))
        st_spec = pl.BlockSpec((1, 8, bn_), lambda i, j, k: (i, 0, j))
        kernel = _mm_acc_stats if with_stats else _mm_acc
        sem = ("parallel", "parallel", "arbitrary")

    if with_stats:
        out_shape = (jax.ShapeDtypeStruct((Mp, Np), o_dtype),
                     jax.ShapeDtypeStruct((gm, 8, Np), jnp.float32))
        out_specs = (o_spec, st_spec)
    else:
        out_shape = jax.ShapeDtypeStruct((Mp, Np), o_dtype)
        out_specs = o_spec

    res = pl.pallas_call(
        kernel,
        out_shape=out_shape,
        grid_spec=pltpu.PrefetchScalarGridSpec(
            num_scalar_prefetch=0, grid=grid,
            in_specs=in_specs, out_specs=out_specs),
        compiler_params=pltpu.CompilerParams(dimension_semantics=sem),
    )(a_p, b_p)

    if with_stats:
        out, stats = res
    else:
        out, stats = res, None
    if (Mp, Np) != (M, N):
        out = out[:M, :N]
    if out.dtype != out_dtype:
        # TODO(synk): extra cast pass only happens on the (rare) k-accumulating path.
        out = out.astype(out_dtype)
    return (out, stats) if with_stats else out


def matmul_bn_pallas(a, b, *, eps=1e-5, **kw):
    """Matmul + in-kernel BN statistics. Returns (y, scale, bias) so the consumer can
    apply training-mode BatchNorm normalization (weight=1, bias=0) without re-reading y."""
    y, stats = matmul_pallas(a, b, with_stats=True, **kw)
    M, N = a.shape[0], b.shape[1]
    s = jnp.sum(stats[:, 0, :N], axis=0)
    sq = jnp.sum(stats[:, 1, :N], axis=0)
    mean = s / M
    var = jnp.maximum(sq / M - mean * mean, 0.0)
    scale = jax.lax.rsqrt(var + eps)
    return y, scale, -mean * scale


# ----------------------------------------------------------------------------
# Pallas kernel 2: fused (per-channel BN normalize) + multi-step LIF
#   grid = (row_tiles ["parallel"], T ["arbitrary"]); membrane scratch per tile.
#   Small-C inputs are lane-folded by the wrapper so stores are full 128-lane vst.
# ----------------------------------------------------------------------------
def _bn_lif_kernel(x_ref, scale_ref, bias_ref, s_ref, v_ref):
    @pl.when(pl.program_id(1) == 0)
    def _():
        v_ref[...] = jnp.zeros_like(v_ref)

    x = x_ref[0].astype(jnp.float32) * scale_ref[...] + bias_ref[...]   # (rt, C)
    v = v_ref[...]
    h = v + (x - v) * (1.0 / _TAU)                   # charge (v_reset = 0)
    spike = h >= _VTH
    s_ref[0] = spike.astype(s_ref.dtype)
    v_ref[...] = jnp.where(spike, 0.0, h)            # hard reset to 0


def lif_bn(x, scale=None, bias=None, *, out_T=None, row_tile=2048,
           out_dtype=jnp.bfloat16):
    """Fused BN-normalize (optional) + multi-step LIF.
    x: (Tx, ..., C). If Tx == 1 and out_T > 1, the input is time-broadcast and read
    once from HBM via a t-independent index_map. Returns bf16 spikes (T, ..., C)."""
    Tx = x.shape[0]
    T = Tx if out_T is None else out_T
    C = x.shape[-1]
    R = x.size // (Tx * C)
    if scale is None:
        scale = jnp.ones((C,), jnp.float32)
        bias = jnp.zeros((C,), jnp.float32)
    scale = jnp.asarray(scale, jnp.float32)
    bias = jnp.asarray(bias, jnp.float32)

    # Lane-dense folding for small channel counts (SPS stages): fold g rows into lanes.
    g = 1
    if C < 128 and 128 % C == 0:
        g0 = 128 // C
        if R % g0 == 0:
            g = g0
    Rf, Cf = R // g, g * C
    x3 = x.reshape(Tx, Rf, Cf)
    scale2 = jnp.tile(scale, g).reshape(1, Cf)
    bias2 = jnp.tile(bias, g).reshape(1, Cf)

    rt = min(row_tile, _round_up(Rf, 8))
    if Rf >= 16:
        # Keep >= 2 blocks on the parallel row axis so both v7x TensorCores get work.
        rt = min(rt, _round_up((Rf + 1) // 2, 8))
    Rp = _round_up(Rf, rt)
    if Rp != Rf:
        x3 = jnp.pad(x3, ((0, 0), (0, Rp - Rf), (0, 0)))

    time_bcast = (Tx == 1 and T > 1)
    x_map = (lambda r, t: (0, r, 0)) if time_bcast else (lambda r, t: (t, r, 0))

    out = pl.pallas_call(
        _bn_lif_kernel,
        out_shape=jax.ShapeDtypeStruct((T, Rp, Cf), out_dtype),
        grid_spec=pltpu.PrefetchScalarGridSpec(
            num_scalar_prefetch=0,
            grid=(Rp // rt, T),
            in_specs=[pl.BlockSpec((1, rt, Cf), x_map),
                      pl.BlockSpec((1, Cf), lambda r, t: (0, 0)),
                      pl.BlockSpec((1, Cf), lambda r, t: (0, 0))],
            out_specs=pl.BlockSpec((1, rt, Cf), lambda r, t: (t, r, 0)),
            scratch_shapes=[pltpu.VMEM((rt, Cf), jnp.float32)],
        ),
        compiler_params=pltpu.CompilerParams(
            dimension_semantics=("parallel", "arbitrary")),
    )(x3, scale2, bias2)
    if Rp != Rf:
        out = out[:, :Rf, :]
    return out.reshape((T,) + x.shape[1:-1] + (C,))


# ----------------------------------------------------------------------------
# Pallas kernel 3: fused qkv BN + qkv LIF + spike-driven self-attention core
#   y = pre-BN qkv (T, B, N, 3C)  ->  out_t = q_t * LIF_t( sum_tokens(k_t * v_t) )
#   The 3NC qkv spike tensor never leaves VMEM.
# ----------------------------------------------------------------------------
def _qkv_sdsa_kernel(y_ref, scale_ref, bias_ref, o_ref, vq_ref, vkv_ref):
    @pl.when(pl.program_id(1) == 0)
    def _():
        vq_ref[...] = jnp.zeros_like(vq_ref)
        vkv_ref[...] = jnp.zeros_like(vkv_ref)

    y = y_ref[0, 0].astype(jnp.float32) * scale_ref[...] + bias_ref[...]   # (N, 3C)
    v = vq_ref[...]
    h = v + (y - v) * (1.0 / _TAU)
    spk = (h >= _VTH).astype(jnp.float32)            # fused q/k/v spikes
    vq_ref[...] = h * (1.0 - spk)

    C = o_ref.shape[-1]
    q = spk[:, :C]
    k = spk[:, C:2 * C]
    vv = spk[:, 2 * C:3 * C]
    kv = jnp.sum(k * vv, axis=0, keepdims=True)      # (1, C) token reduction

    vm = vkv_ref[...]
    h2 = vm + (kv - vm) * (1.0 / _TAU)
    spk2 = (h2 >= _VTH).astype(jnp.float32)
    vkv_ref[...] = h2 * (1.0 - spk2)
    o_ref[0, 0] = (q * spk2).astype(o_ref.dtype)     # broadcast over tokens


def qkv_sdsa_pallas(y, scale, bias):
    """y: (T, B, N, 3C) pre-BN qkv activations -> (T, B, N, C) bf16 SDSA output.
    Per-channel SDSA, so the head split is numerically irrelevant and channels stay
    on the lane axis."""
    T, B, N, C3 = y.shape
    C = C3 // 3
    scale2 = jnp.asarray(scale, jnp.float32).reshape(1, C3)
    bias2 = jnp.asarray(bias, jnp.float32).reshape(1, C3)
    return pl.pallas_call(
        _qkv_sdsa_kernel,
        out_shape=jax.ShapeDtypeStruct((T, B, N, C), jnp.bfloat16),
        grid_spec=pltpu.PrefetchScalarGridSpec(
            num_scalar_prefetch=0,
            grid=(B, T),
            in_specs=[pl.BlockSpec((1, 1, N, C3), lambda b, t: (t, b, 0, 0)),
                      pl.BlockSpec((1, C3), lambda b, t: (0, 0)),
                      pl.BlockSpec((1, C3), lambda b, t: (0, 0))],
            out_specs=pl.BlockSpec((1, 1, N, C), lambda b, t: (t, b, 0, 0)),
            scratch_shapes=[pltpu.VMEM((N, C3), jnp.float32),   # qkv LIF membrane
                            pltpu.VMEM((1, C), jnp.float32)],   # kv LIF membrane
        ),
        compiler_params=pltpu.CompilerParams(
            dimension_semantics=("parallel", "arbitrary")),
    )(y, scale2, bias2)


# ----------------------------------------------------------------------------
# XLA glue: 3x3 conv, BN statistics, maxpool
# ----------------------------------------------------------------------------
def conv3x3_xla(x, w_hwio):
    """x: (M, H, W, Cin) NHWC; w: (3, 3, Cin, Cout) HWIO bf16. stride 1, pad 1."""
    # TODO(synk): 3x3 conv stays in XLA (lax.conv); a direct Pallas conv needs
    # halo/overlapping-block DMA. im2col was removed per earlier perf feedback.
    y = jax.lax.conv_general_dilated(
        x.astype(jnp.bfloat16), w_hwio,
        window_strides=(1, 1), padding="SAME",
        dimension_numbers=("NHWC", "HWIO", "NHWC"),
        preferred_element_type=jnp.float32)
    return y.astype(jnp.bfloat16)


def bn_scale_bias(x2d, eps=1e-5):
    """Training-mode BN (weight=1, bias=0) -> per-channel (scale, bias); f32 stats."""
    m = x2d.shape[0]
    xf = x2d.astype(jnp.float32)
    s = jnp.sum(xf, axis=0)
    sq = jnp.sum(xf * xf, axis=0)
    mean = s / m
    var = jnp.maximum(sq / m - mean * mean, 0.0)
    scale = jax.lax.rsqrt(var + eps)
    return scale, -mean * scale


def maxpool3x3s2(x):
    # nn.MaxPool2d(kernel_size=3, stride=2, padding=1) on NHWC.
    # TODO(synk): window-max kept in plain JAX (lax.reduce_window), not a Pallas kernel.
    return jax.lax.reduce_window(
        x, jnp.array(-jnp.inf, x.dtype), jax.lax.max,
        (1, 3, 3, 1), (1, 2, 2, 1),
        [(0, 0), (1, 1), (1, 1), (0, 0)])


# ----------------------------------------------------------------------------
# Model pieces
# ----------------------------------------------------------------------------
def sps_forward(x_img, p, spike_T, pooling_stat="1111"):
    """MS_SPS patch embedding. x_img: (B, H, W, Cin) -> (T, B, H/16, W/16, E) bf16."""
    T = spike_T
    B, H, W, _ = x_img.shape

    # Stage 0: conv + BN are time-invariant (input broadcast over T) -> computed once;
    # the LIF kernel reads the un-broadcast tensor via a t-independent index_map.
    y = conv3x3_xla(x_img, p["sps_conv0"])                  # (B, H, W, C0) bf16
    C0 = y.shape[-1]
    s0, b0 = bn_scale_bias(y.reshape(-1, C0))
    sp = lif_bn(y[None], s0, b0, out_T=T)                   # (T, B, H, W, C0) bf16
    xb = sp.reshape(T * B, H, W, C0)
    if pooling_stat[0] == "1":
        xb = maxpool3x3s2(xb)

    for i in range(1, 4):
        y = conv3x3_xla(xb, p[f"sps_conv{i}"])
        _, Hc, Wc, Cc = y.shape
        s, b_ = bn_scale_bias(y.reshape(-1, Cc))
        xb = lif_bn(y.reshape(T, B, Hc, Wc, Cc), s, b_).reshape(T * B, Hc, Wc, Cc)
        if pooling_stat[i] == "1":
            xb = maxpool3x3s2(xb)

    x_feat = xb
    y = conv3x3_xla(xb, p["sps_rpe"])
    _, Hc, Wc, E = y.shape
    s, b_ = bn_scale_bias(y.reshape(-1, E))
    xb = (y.astype(jnp.float32) * s + b_
          + x_feat.astype(jnp.float32)).astype(jnp.bfloat16)   # RPE membrane shortcut
    return xb.reshape(T, B, Hc, Wc, E)


def ssa_forward(x, bp, num_heads):
    """Spike-driven self-attention (MS_SSA_Conv). x: (T, B, H, W, C) bf16."""
    del num_heads  # SDSA is per-channel elementwise + token sum; head split is a no-op.
    # TODO(synk): no attention scale factor applied (matches the spike-driven SDSA
    # formulation without softmax); verify against the exact reference variant.
    T, B, H, W, C = x.shape
    N = H * W
    rows = T * B * N

    xs = lif_bn(x)                                          # head_lif -> bf16 spikes

    # Fused q/k/v projection (pre-concatenated bf16 weight) + in-kernel BN stats.
    y, s_qkv, b_qkv = matmul_bn_pallas(xs.reshape(rows, C), bp["w_qkv"])   # (rows, 3C)

    # Fused qkv BN + qkv LIF + SDSA core (kv token-sum, kv LIF, q*kv).
    o = qkv_sdsa_pallas(y.reshape(T, B, N, 3 * C), s_qkv, b_qkv)           # (T,B,N,C)

    # Output projection + BN (stats from the matmul epilogue).
    o2, s_p, b_p = matmul_bn_pallas(o.reshape(rows, C), bp["w_proj"])
    o2 = (o2.astype(jnp.float32) * s_p + b_p).astype(jnp.bfloat16)
    return o2.reshape(T, B, H, W, C)


def mlp_forward(x, bp):
    """MS_MLP_Conv (1x1 conv MLP). x: (T, B, H, W, C) bf16."""
    T, B, H, W, C = x.shape
    rows = T * B * H * W
    y = lif_bn(x)                                           # fc1 LIF
    y, s1, b1 = matmul_bn_pallas(y.reshape(rows, C), bp["w_fc1"])
    Ch = bp["w_fc1"].shape[1]
    y = lif_bn(y.reshape(T, B * H * W, Ch), s1, b1)         # fused fc1 BN + fc2 LIF
    y, s2, b2 = matmul_bn_pallas(y.reshape(rows, Ch), bp["w_fc2"])
    y = (y.astype(jnp.float32) * s2 + b2).astype(jnp.bfloat16)
    return y.reshape(T, B, H, W, C)


def decoder_forward(x, p):
    """Decoder: LIF + Linear head. x: (T, B, C) -> (T, B, num_classes) f32."""
    # TODO(synk): Decoder internals not given in the prompt; assumed LIF -> nn.Linear.
    T, B, C = x.shape
    xs = lif_bn(x)
    y = matmul_pallas(xs.reshape(T * B, C), p["head_w"], out_dtype=jnp.float32)
    y = y + p["head_b"][None, :]
    return y.reshape(T, B, -1)


def spike_driven_transformer(x_img, params, *, spike_T, num_heads,
                             pooling_stat="1111", TET=False):
    """Forward pass. x_img: (B, Cin, H, W) NCHW (PyTorch convention)."""
    x = jnp.transpose(x_img, (0, 2, 3, 1))                   # NHWC once at entry
    x = sps_forward(x, params, spike_T, pooling_stat)        # patch_embed
    for bp in params["blocks"]:                              # encoder
        x = x + ssa_forward(x, bp, num_heads)
        x = x + mlp_forward(x, bp)
    x = x.mean(axis=(2, 3), dtype=jnp.float32)               # flatten(3).mean(3) -> (T,B,C)
    x = decoder_forward(x, params)                           # decoder
    if not TET:
        x = x.mean(axis=0)                                   # (B, num_classes)
    return x


# ----------------------------------------------------------------------------
# Deterministic synthetic parameter init (std=0.02, biases zero).
# Weights are stored matmul-ready: bf16, transposed / concatenated / HWIO.
# ----------------------------------------------------------------------------
def init_params(key, in_channels, embed_dims, num_heads, num_classes,
                mlp_ratio, depths):
    keys = jax.random.split(key, 8 + depths * 8)
    ki = iter(keys)

    def conv_w(cout, cin, k):
        w = jax.random.normal(next(ki), (cout, cin, k, k), jnp.float32) * 0.02
        return jnp.transpose(w, (2, 3, 1, 0)).astype(jnp.bfloat16)   # HWIO

    def lin_w(cout, cin):
        w = jax.random.normal(next(ki), (cout, cin), jnp.float32) * 0.02
        return w.T.astype(jnp.bfloat16)                              # (cin, cout)

    p = {}
    chans = [in_channels, embed_dims // 8, embed_dims // 4, embed_dims // 2, embed_dims]
    for i in range(4):
        p[f"sps_conv{i}"] = conv_w(chans[i + 1], chans[i], 3)
    p["sps_rpe"] = conv_w(embed_dims, embed_dims, 3)

    hidden = int(embed_dims * mlp_ratio)
    blocks = []
    for _ in range(depths):
        wq = lin_w(embed_dims, embed_dims)
        wk = lin_w(embed_dims, embed_dims)
        wv = lin_w(embed_dims, embed_dims)
        blocks.append({
            "w_qkv": jnp.concatenate([wq, wk, wv], axis=1),    # (C, 3C) bf16
            "w_proj": lin_w(embed_dims, embed_dims),
            "w_fc1": lin_w(hidden, embed_dims),
            "w_fc2": lin_w(embed_dims, hidden),
        })
    p["blocks"] = blocks
    p["head_w"] = lin_w(num_classes, embed_dims)               # (C, num_classes)
    p["head_b"] = jnp.zeros((num_classes,), jnp.float32)
    return p


if __name__ == "__main__":
    key = jax.random.PRNGKey(0)
    k_x, k_p = jax.random.split(key)

    # Small shapes consistent with the module (patch_size=16 downsampling -> 2x2 tokens).
    B, Cin, H, W = 2, 3, 32, 32
    embed_dims, num_heads, num_classes = 32, 4, 10
    spike_T, depths, mlp_ratio = 2, 2, 1.0

    x = jax.random.normal(k_x, (B, Cin, H, W), jnp.float32)
    params = init_params(k_p, Cin, embed_dims, num_heads, num_classes, mlp_ratio, depths)

    fwd = jax.jit(functools.partial(spike_driven_transformer,
                                    spike_T=spike_T, num_heads=num_heads))
    out = fwd(x, params)
    jax.block_until_ready(out)
    assert out.shape == (B, num_classes), out.shape
    print("KERNEL_OK")
</pallas_src>

<mosaic_0001>
module attributes {stable_mosaic.version = 11 : i64} {
  func.func @_bn_lif_kernel(%arg0: i32, %arg1: i32, %arg2: memref<1x32x128xbf16, #tpu.memory_space<vmem>>, %arg3: memref<1x128xf32, #tpu.memory_space<vmem>>, %arg4: memref<1x128xf32, #tpu.memory_space<vmem>>, %arg5: memref<1x32x128xbf16, #tpu.memory_space<vmem>>, %arg6: memref<32x128xf32, #tpu.memory_space<vmem>>) attributes {dimension_semantics = [#tpu.dimension_semantics<parallel>, #tpu.dimension_semantics<arbitrary>], iteration_bounds = array<i64: 2, 2>, scalar_prefetch = 0 : i64, scratch_operands = 1 : i64, tpu.core_type = #tpu.core_type<tc>, window_params = [{transform_indices = @transform_0, window_bounds = array<i64: 1, 32, 128>}, {pipeline_mode = #tpu.pipeline_mode<synchronous>, transform_indices = @transform_1, window_bounds = array<i64: 1, 128>}, {pipeline_mode = #tpu.pipeline_mode<synchronous>, transform_indices = @transform_2, window_bounds = array<i64: 1, 128>}, {transform_indices = @transform_3, window_bounds = array<i64: 1, 32, 128>}]} {
    %c0_i32 = arith.constant 0 : i32
    %0 = arith.cmpi eq, %arg1, %c0_i32 : i32
    %1 = arith.extui %0 : i1 to i32
    %c0_i32_0 = arith.constant 0 : i32
    %2 = arith.cmpi ne, %1, %c0_i32_0 : i32
    scf.if %2 {
      %cst_16 = arith.constant 0.000000e+00 : f32
      %28 = vector.broadcast %cst_16 : f32 to vector<32x128xf32>
      %c0_17 = arith.constant 0 : index
      %c0_18 = arith.constant 0 : index
      %29 = vector.load %arg6[%c0_17, %c0_18] : memref<32x128xf32, #tpu.memory_space<vmem>>, vector<32x128xf32>
      tpu.vector_store %arg6[%c0_17, %c0_18], %28 {strides = array<i32>} : memref<32x128xf32, #tpu.memory_space<vmem>>, vector<32x128xf32>,
    } else {
    }
    %c0 = arith.constant 0 : index
    %c0_1 = arith.constant 0 : index
    %c0_2 = arith.constant 0 : index
    %3 = vector.load %arg2[%c0, %c0_1, %c0_2] : memref<1x32x128xbf16, #tpu.memory_space<vmem>>, vector<1x32x128xbf16>
    %4 = vector.shape_cast %3 : vector<1x32x128xbf16> to vector<32x128xbf16>
    %5 = arith.extf %4 : vector<32x128xbf16> to vector<32x128xf32>
    %c0_3 = arith.constant 0 : index
    %c0_4 = arith.constant 0 : index
    %6 = vector.load %arg3[%c0_3, %c0_4] : memref<1x128xf32, #tpu.memory_space<vmem>>, vector<1x128xf32>
    %7 = vector.broadcast %6 : vector<1x128xf32> to vector<32x128xf32>
    %8 = arith.mulf %5, %7 : vector<32x128xf32>
    %c0_5 = arith.constant 0 : index
    %c0_6 = arith.constant 0 : index
    %9 = vector.load %arg4[%c0_5, %c0_6] : memref<1x128xf32, #tpu.memory_space<vmem>>, vector<1x128xf32>
    %10 = vector.broadcast %9 : vector<1x128xf32> to vector<32x128xf32>
    %11 = arith.addf %8, %10 : vector<32x128xf32>
    %c0_7 = arith.constant 0 : index
    %c0_8 = arith.constant 0 : index
    %12 = vector.load %arg6[%c0_7, %c0_8] : memref<32x128xf32, #tpu.memory_space<vmem>>, vector<32x128xf32>
    %13 = arith.subf %11, %12 : vector<32x128xf32>
    %cst = arith.constant 5.000000e-01 : f32
    %14 = vector.broadcast %cst : f32 to vector<32x128xf32>
    %15 = arith.mulf %13, %14 : vector<32x128xf32>
    %16 = arith.addf %12, %15 : vector<32x128xf32>
    %cst_9 = arith.constant 1.000000e+00 : f32
    %17 = vector.broadcast %cst_9 : f32 to vector<32x128xf32>
    %18 = arith.cmpf oge, %16, %17 : vector<32x128xf32>
    %19 = arith.extui %18 : vector<32x128xi1> to vector<32x128xi32>
    %20 = arith.sitofp %19 : vector<32x128xi32> to vector<32x128xf32>
    %21 = arith.truncf %20 : vector<32x128xf32> to vector<32x128xbf16>
    %c0_10 = arith.constant 0 : index
    %c0_11 = arith.constant 0 : index
    %c0_12 = arith.constant 0 : index
    %22 = vector.load %arg5[%c0_10, %c0_11, %c0_12] : memref<1x32x128xbf16, #tpu.memory_space<vmem>>, vector<1x32x128xbf16>
    %23 = vector.shape_cast %22 : vector<1x32x128xbf16> to vector<32x128xbf16>
    %24 = vector.shape_cast %21 : vector<32x128xbf16> to vector<1x32x128xbf16>
    tpu.vector_store %arg5[%c0_10, %c0_11, %c0_12], %24 {strides = array<i32>} : memref<1x32x128xbf16, #tpu.memory_space<vmem>>, vector<1x32x128xbf16>,
    %cst_13 = arith.constant 0.000000e+00 : f32
    %25 = vector.broadcast %cst_13 : f32 to vector<32x128xf32>
    %26 = arith.select %18, %25, %16 : vector<32x128xi1>, vector<32x128xf32>
    %c0_14 = arith.constant 0 : index
    %c0_15 = arith.constant 0 : index
    %27 = vector.load %arg6[%c0_14, %c0_15] : memref<32x128xf32, #tpu.memory_space<vmem>>, vector<32x128xf32>
    tpu.vector_store %arg6[%c0_14, %c0_15], %26 {strides = array<i32>} : memref<32x128xf32, #tpu.memory_space<vmem>>, vector<32x128xf32>,
    return
  }
  func.func @transform_0(%arg0: i32, %arg1: i32) -> (i32, i32, i32) {
    %c0_i32 = arith.constant 0 : i32
    %c0_i32_0 = arith.constant 0 : i32
    %c0_i32_1 = arith.constant 0 : i32
    return %c0_i32, %arg0, %c0_i32_0 : i32, i32, i32
  }
  func.func @transform_1(%arg0: i32, %arg1: i32) -> (i32, i32) {
    %c0_i32 = arith.constant 0 : i32
    %c0_i32_0 = arith.constant 0 : i32
    %c0_i32_1 = arith.constant 0 : i32
    return %c0_i32, %c0_i32_0 : i32, i32
  }
  func.func @transform_2(%arg0: i32, %arg1: i32) -> (i32, i32) {
    %c0_i32 = arith.constant 0 : i32
    %c0_i32_0 = arith.constant 0 : i32
    %c0_i32_1 = arith.constant 0 : i32
    return %c0_i32, %c0_i32_0 : i32, i32
  }
  func.func @transform_3(%arg0: i32, %arg1: i32) -> (i32, i32, i32) {
    %c0_i32 = arith.constant 0 : i32
    %c0_i32_0 = arith.constant 0 : i32
    return %arg1, %arg0, %c0_i32 : i32, i32, i32
  }
}

module attributes {stable_mosaic.version = 11 : i64} {
  func.func @_bn_lif_kernel(%arg0: i32, %arg1: i32, %arg2: memref<1x16x128xbf16, #tpu.memory_space<vmem>>, %arg3: memref<1x128xf32, #tpu.memory_space<vmem>>, %arg4: memref<1x128xf32, #tpu.memory_space<vmem>>, %arg5: memref<1x16x128xbf16, #tpu.memory_space<vmem>>, %arg6: memref<16x128xf32, #tpu.memory_space<vmem>>) attributes {dimension_semantics = [#tpu.dimension_semantics<parallel>, #tpu.dimension_semantics<arbitrary>], iteration_bounds = array<i64: 2, 2>, scalar_prefetch = 0 : i64, scratch_operands = 1 : i64, tpu.core_type = #tpu.core_type<tc>, window_params = [{transform_indices = @transform_0, window_bounds = array<i64: 1, 16, 128>}, {pipeline_mode = #tpu.pipeline_mode<synchronous>, transform_indices = @transform_1, window_bounds = array<i64: 1, 128>}, {pipeline_mode = #tpu.pipeline_mode<synchronous>, transform_indices = @transform_2, window_bounds = array<i64: 1, 128>}, {transform_indices = @transform_3, window_bounds = array<i64: 1, 16, 128>}]} {
    %c0_i32 = arith.constant 0 : i32
    %0 = arith.cmpi eq, %arg1, %c0_i32 : i32
    %1 = arith.extui %0 : i1 to i32
    %c0_i32_0 = arith.constant 0 : i32
    %2 = arith.cmpi ne, %1, %c0_i32_0 : i32
    scf.if %2 {
      %cst_16 = arith.constant 0.000000e+00 : f32
      %28 = vector.broadcast %cst_16 : f32 to vector<16x128xf32>
      %c0_17 = arith.constant 0 : index
      %c0_18 = arith.constant 0 : index
      %29 = vector.load %arg6[%c0_17, %c0_18] : memref<16x128xf32, #tpu.memory_space<vmem>>, vector<16x128xf32>
      tpu.vector_store %arg6[%c0_17, %c0_18], %28 {strides = array<i32>} : memref<16x128xf32, #tpu.memory_space<vmem>>, vector<16x128xf32>,
    } else {
    }
    %c0 = arith.constant 0 : index
    %c0_1 = arith.constant 0 : index
    %c0_2 = arith.constant 0 : index
    %3 = vector.load %arg2[%c0, %c0_1, %c0_2] : memref<1x16x128xbf16, #tpu.memory_space<vmem>>, vector<1x16x128xbf16>
    %4 = vector.shape_cast %3 : vector<1x16x128xbf16> to vector<16x128xbf16>
    %5 = arith.extf %4 : vector<16x128xbf16> to vector<16x128xf32>
    %c0_3 = arith.constant 0 : index
    %c0_4 = arith.constant 0 : index
    %6 = vector.load %arg3[%c0_3, %c0_4] : memref<1x128xf32, #tpu.memory_space<vmem>>, vector<1x128xf32>
    %7 = vector.broadcast %6 : vector<1x128xf32> to vector<16x128xf32>
    %8 = arith.mulf %5, %7 : vector<16x128xf32>
    %c0_5 = arith.constant 0 : index
    %c0_6 = arith.constant 0 : index
    %9 = vector.load %arg4[%c0_5, %c0_6] : memref<1x128xf32, #tpu.memory_space<vmem>>, vector<1x128xf32>
    %10 = vector.broadcast %9 : vector<1x128xf32> to vector<16x128xf32>
    %11 = arith.addf %8, %10 : vector<16x128xf32>
    %c0_7 = arith.constant 0 : index
    %c0_8 = arith.constant 0 : index
    %12 = vector.load %arg6[%c0_7, %c0_8] : memref<16x128xf32, #tpu.memory_space<vmem>>, vector<16x128xf32>
    %13 = arith.subf %11, %12 : vector<16x128xf32>
    %cst = arith.constant 5.000000e-01 : f32
    %14 = vector.broadcast %cst : f32 to vector<16x128xf32>
    %15 = arith.mulf %13, %14 : vector<16x128xf32>
    %16 = arith.addf %12, %15 : vector<16x128xf32>
    %cst_9 = arith.constant 1.000000e+00 : f32
    %17 = vector.broadcast %cst_9 : f32 to vector<16x128xf32>
    %18 = arith.cmpf oge, %16, %17 : vector<16x128xf32>
    %19 = arith.extui %18 : vector<16x128xi1> to vector<16x128xi32>
    %20 = arith.sitofp %19 : vector<16x128xi32> to vector<16x128xf32>
    %21 = arith.truncf %20 : vector<16x128xf32> to vector<16x128xbf16>
    %c0_10 = arith.constant 0 : index
    %c0_11 = arith.constant 0 : index
    %c0_12 = arith.constant 0 : index
    %22 = vector.load %arg5[%c0_10, %c0_11, %c0_12] : memref<1x16x128xbf16, #tpu.memory_space<vmem>>, vector<1x16x128xbf16>
    %23 = vector.shape_cast %22 : vector<1x16x128xbf16> to vector<16x128xbf16>
    %24 = vector.shape_cast %21 : vector<16x128xbf16> to vector<1x16x128xbf16>
    tpu.vector_store %arg5[%c0_10, %c0_11, %c0_12], %24 {strides = array<i32>} : memref<1x16x128xbf16, #tpu.memory_space<vmem>>, vector<1x16x128xbf16>,
    %cst_13 = arith.constant 0.000000e+00 : f32
    %25 = vector.broadcast %cst_13 : f32 to vector<16x128xf32>
    %26 = arith.select %18, %25, %16 : vector<16x128xi1>, vector<16x128xf32>
    %c0_14 = arith.constant 0 : index
    %c0_15 = arith.constant 0 : index
    %27 = vector.load %arg6[%c0_14, %c0_15] : memref<16x128xf32, #tpu.memory_space<vmem>>, vector<16x128xf32>
    tpu.vector_store %arg6[%c0_14, %c0_15], %26 {strides = array<i32>} : memref<16x128xf32, #tpu.memory_space<vmem>>, vector<16x128xf32>,
    return
  }
  func.func @transform_0(%arg0: i32, %arg1: i32) -> (i32, i32, i32) {
    %c0_i32 = arith.constant 0 : i32
    %c0_i32_0 = arith.constant 0 : i32
    return %arg1, %arg0, %c0_i32 : i32, i32, i32
  }
  func.func @transform_1(%arg0: i32, %arg1: i32) -> (i32, i32) {
    %c0_i32 = arith.constant 0 : i32
    %c0_i32_0 = arith.constant 0 : i32
    %c0_i32_1 = arith.constant 0 : i32
    return %c0_i32, %c0_i32_0 : i32, i32
  }
  func.func @transform_2(%arg0: i32, %arg1: i32) -> (i32, i32) {
    %c0_i32 = arith.constant 0 : i32
    %c0_i32_0 = arith.constant 0 : i32
    %c0_i32_1 = arith.constant 0 : i32
    return %c0_i32, %c0_i32_0 : i32, i32
  }
  func.func @transform_3(%arg0: i32, %arg1: i32) -> (i32, i32, i32) {
    %c0_i32 = arith.constant 0 : i32
    %c0_i32_0 = arith.constant 0 : i32
    return %arg1, %arg0, %c0_i32 : i32, i32, i32
  }
}

module attributes {stable_mosaic.version = 11 : i64} {
  func.func @_bn_lif_kernel(%arg0: i32, %arg1: i32, %arg2: memref<1x8x128xbf16, #tpu.memory_space<vmem>>, %arg3: memref<1x128xf32, #tpu.memory_space<vmem>>, %arg4: memref<1x128xf32, #tpu.memory_space<vmem>>, %arg5: memref<1x8x128xbf16, #tpu.memory_space<vmem>>, %arg6: memref<8x128xf32, #tpu.memory_space<vmem>>) attributes {dimension_semantics = [#tpu.dimension_semantics<parallel>, #tpu.dimension_semantics<arbitrary>], iteration_bounds = array<i64: 2, 2>, scalar_prefetch = 0 : i64, scratch_operands = 1 : i64, tpu.core_type = #tpu.core_type<tc>, window_params = [{transform_indices = @transform_0, window_bounds = array<i64: 1, 8, 128>}, {pipeline_mode = #tpu.pipeline_mode<synchronous>, transform_indices = @transform_1, window_bounds = array<i64: 1, 128>}, {pipeline_mode = #tpu.pipeline_mode<synchronous>, transform_indices = @transform_2, window_bounds = array<i64: 1, 128>}, {transform_indices = @transform_3, window_bounds = array<i64: 1, 8, 128>}]} {
    %c0_i32 = arith.constant 0 : i32
    %0 = arith.cmpi eq, %arg1, %c0_i32 : i32
    %1 = arith.extui %0 : i1 to i32
    %c0_i32_0 = arith.constant 0 : i32
    %2 = arith.cmpi ne, %1, %c0_i32_0 : i32
    scf.if %2 {
      %cst_16 = arith.constant 0.000000e+00 : f32
      %28 = vector.broadcast %cst_16 : f32 to vector<8x128xf32>
      %c0_17 = arith.constant 0 : index
      %c0_18 = arith.constant 0 : index
      %29 = vector.load %arg6[%c0_17, %c0_18] : memref<8x128xf32, #tpu.memory_space<vmem>>, vector<8x128xf32>
      tpu.vector_store %arg6[%c0_17, %c0_18], %28 {strides = array<i32>} : memref<8x128xf32, #tpu.memory_space<vmem>>, vector<8x128xf32>,
    } else {
    }
    %c0 = arith.constant 0 : index
    %c0_1 = arith.constant 0 : index
    %c0_2 = arith.constant 0 : index
    %3 = vector.load %arg2[%c0, %c0_1, %c0_2] : memref<1x8x128xbf16, #tpu.memory_space<vmem>>, vector<1x8x128xbf16>
    %4 = vector.shape_cast %3 : vector<1x8x128xbf16> to vector<8x128xbf16>
    %5 = arith.extf %4 : vector<8x128xbf16> to vector<8x128xf32>
    %c0_3 = arith.constant 0 : index
    %c0_4 = arith.constant 0 : index
    %6 = vector.load %arg3[%c0_3, %c0_4] : memref<1x128xf32, #tpu.memory_space<vmem>>, vector<1x128xf32>
    %7 = vector.broadcast %6 : vector<1x128xf32> to vector<8x128xf32>
    %8 = arith.mulf %5, %7 : vector<8x128xf32>
    %c0_5 = arith.constant 0 : index
    %c0_6 = arith.constant 0 : index
    %9 = vector.load %arg4[%c0_5, %c0_6] : memref<1x128xf32, #tpu.memory_space<vmem>>, vector<1x128xf32>
    %10 = vector.broadcast %9 : vector<1x128xf32> to vector<8x128xf32>
    %11 = arith.addf %8, %10 : vector<8x128xf32>
    %c0_7 = arith.constant 0 : index
    %c0_8 = arith.constant 0 : index
    %12 = vector.load %arg6[%c0_7, %c0_8] : memref<8x128xf32, #tpu.memory_space<vmem>>, vector<8x128xf32>
    %13 = arith.subf %11, %12 : vector<8x128xf32>
    %cst = arith.constant 5.000000e-01 : f32
    %14 = vector.broadcast %cst : f32 to vector<8x128xf32>
    %15 = arith.mulf %13, %14 : vector<8x128xf32>
    %16 = arith.addf %12, %15 : vector<8x128xf32>
    %cst_9 = arith.constant 1.000000e+00 : f32
    %17 = vector.broadcast %cst_9 : f32 to vector<8x128xf32>
    %18 = arith.cmpf oge, %16, %17 : vector<8x128xf32>
    %19 = arith.extui %18 : vector<8x128xi1> to vector<8x128xi32>
    %20 = arith.sitofp %19 : vector<8x128xi32> to vector<8x128xf32>
    %21 = arith.truncf %20 : vector<8x128xf32> to vector<8x128xbf16>
    %c0_10 = arith.constant 0 : index
    %c0_11 = arith.constant 0 : index
    %c0_12 = arith.constant 0 : index
    %22 = vector.load %arg5[%c0_10, %c0_11, %c0_12] : memref<1x8x128xbf16, #tpu.memory_space<vmem>>, vector<1x8x128xbf16>
    %23 = vector.shape_cast %22 : vector<1x8x128xbf16> to vector<8x128xbf16>
    %24 = vector.shape_cast %21 : vector<8x128xbf16> to vector<1x8x128xbf16>
    tpu.vector_store %arg5[%c0_10, %c0_11, %c0_12], %24 {strides = array<i32>} : memref<1x8x128xbf16, #tpu.memory_space<vmem>>, vector<1x8x128xbf16>,
    %cst_13 = arith.constant 0.000000e+00 : f32
    %25 = vector.broadcast %cst_13 : f32 to vector<8x128xf32>
    %26 = arith.select %18, %25, %16 : vector<8x128xi1>, vector<8x128xf32>
    %c0_14 = arith.constant 0 : index
    %c0_15 = arith.constant 0 : index
    %27 = vector.load %arg6[%c0_14, %c0_15] : memref<8x128xf32, #tpu.memory_space<vmem>>, vector<8x128xf32>
    tpu.vector_store %arg6[%c0_14, %c0_15], %26 {strides = array<i32>} : memref<8x128xf32, #tpu.memory_space<vmem>>, vector<8x128xf32>,
    return
  }
  func.func @transform_0(%arg0: i32, %arg1: i32) -> (i32, i32, i32) {
    %c0_i32 = arith.constant 0 : i32
    %c0_i32_0 = arith.constant 0 : i32
    return %arg1, %arg0, %c0_i32 : i32, i32, i32
  }
  func.func @transform_1(%arg0: i32, %arg1: i32) -> (i32, i32) {
    %c0_i32 = arith.constant 0 : i32
    %c0_i32_0 = arith.constant 0 : i32
    %c0_i32_1 = arith.constant 0 : i32
    return %c0_i32, %c0_i32_0 : i32, i32
  }
  func.func @transform_2(%arg0: i32, %arg1: i32) -> (i32, i32) {
    %c0_i32 = arith.constant 0 : i32
    %c0_i32_0 = arith.constant 0 : i32
    %c0_i32_1 = arith.constant 0 : i32
    return %c0_i32, %c0_i32_0 : i32, i32
  }
  func.func @transform_3(%arg0: i32, %arg1: i32) -> (i32, i32, i32) {
    %c0_i32 = arith.constant 0 : i32
    %c0_i32_0 = arith.constant 0 : i32
    return %arg1, %arg0, %c0_i32 : i32, i32, i32
  }
}

module attributes {stable_mosaic.version = 11 : i64} {
  func.func @_bn_lif_kernel(%arg0: i32, %arg1: i32, %arg2: memref<1x8x128xbf16, #tpu.memory_space<vmem>>, %arg3: memref<1x128xf32, #tpu.memory_space<vmem>>, %arg4: memref<1x128xf32, #tpu.memory_space<vmem>>, %arg5: memref<1x8x128xbf16, #tpu.memory_space<vmem>>, %arg6: memref<8x128xf32, #tpu.memory_space<vmem>>) attributes {dimension_semantics = [#tpu.dimension_semantics<parallel>, #tpu.dimension_semantics<arbitrary>], iteration_bounds = array<i64: 1, 2>, scalar_prefetch = 0 : i64, scratch_operands = 1 : i64, tpu.core_type = #tpu.core_type<tc>, window_params = [{transform_indices = @transform_0, window_bounds = array<i64: 1, 8, 128>}, {pipeline_mode = #tpu.pipeline_mode<synchronous>, transform_indices = @transform_1, window_bounds = array<i64: 1, 128>}, {pipeline_mode = #tpu.pipeline_mode<synchronous>, transform_indices = @transform_2, window_bounds = array<i64: 1, 128>}, {transform_indices = @transform_3, window_bounds = array<i64: 1, 8, 128>}]} {
    %c0_i32 = arith.constant 0 : i32
    %0 = arith.cmpi eq, %arg1, %c0_i32 : i32
    %1 = arith.extui %0 : i1 to i32
    %c0_i32_0 = arith.constant 0 : i32
    %2 = arith.cmpi ne, %1, %c0_i32_0 : i32
    scf.if %2 {
      %cst_16 = arith.constant 0.000000e+00 : f32
      %28 = vector.broadcast %cst_16 : f32 to vector<8x128xf32>
      %c0_17 = arith.constant 0 : index
      %c0_18 = arith.constant 0 : index
      %29 = vector.load %arg6[%c0_17, %c0_18] : memref<8x128xf32, #tpu.memory_space<vmem>>, vector<8x128xf32>
      tpu.vector_store %arg6[%c0_17, %c0_18], %28 {strides = array<i32>} : memref<8x128xf32, #tpu.memory_space<vmem>>, vector<8x128xf32>,
    } else {
    }
    %c0 = arith.constant 0 : index
    %c0_1 = arith.constant 0 : index
    %c0_2 = arith.constant 0 : index
    %3 = vector.load %arg2[%c0, %c0_1, %c0_2] : memref<1x8x128xbf16, #tpu.memory_space<vmem>>, vector<1x8x128xbf16>
    %4 = vector.shape_cast %3 : vector<1x8x128xbf16> to vector<8x128xbf16>
    %5 = arith.extf %4 : vector<8x128xbf16> to vector<8x128xf32>
    %c0_3 = arith.constant 0 : index
    %c0_4 = arith.constant 0 : index
    %6 = vector.load %arg3[%c0_3, %c0_4] : memref<1x128xf32, #tpu.memory_space<vmem>>, vector<1x128xf32>
    %7 = vector.broadcast %6 : vector<1x128xf32> to vector<8x128xf32>
    %8 = arith.mulf %5, %7 : vector<8x128xf32>
    %c0_5 = arith.constant 0 : index
    %c0_6 = arith.constant 0 : index
    %9 = vector.load %arg4[%c0_5, %c0_6] : memref<1x128xf32, #tpu.memory_space<vmem>>, vector<1x128xf32>
    %10 = vector.broadcast %9 : vector<1x128xf32> to vector<8x128xf32>
    %11 = arith.addf %8, %10 : vector<8x128xf32>
    %c0_7 = arith.constant 0 : index
    %c0_8 = arith.constant 0 : index
    %12 = vector.load %arg6[%c0_7, %c0_8] : memref<8x128xf32, #tpu.memory_space<vmem>>, vector<8x128xf32>
    %13 = arith.subf %11, %12 : vector<8x128xf32>
    %cst = arith.constant 5.000000e-01 : f32
    %14 = vector.broadcast %cst : f32 to vector<8x128xf32>
    %15 = arith.mulf %13, %14 : vector<8x128xf32>
    %16 = arith.addf %12, %15 : vector<8x128xf32>
    %cst_9 = arith.constant 1.000000e+00 : f32
    %17 = vector.broadcast %cst_9 : f32 to vector<8x128xf32>
    %18 = arith.cmpf oge, %16, %17 : vector<8x128xf32>
    %19 = arith.extui %18 : vector<8x128xi1> to vector<8x128xi32>
    %20 = arith.sitofp %19 : vector<8x128xi32> to vector<8x128xf32>
    %21 = arith.truncf %20 : vector<8x128xf32> to vector<8x128xbf16>
    %c0_10 = arith.constant 0 : index
    %c0_11 = arith.constant 0 : index
    %c0_12 = arith.constant 0 : index
    %22 = vector.load %arg5[%c0_10, %c0_11, %c0_12] : memref<1x8x128xbf16, #tpu.memory_space<vmem>>, vector<1x8x128xbf16>
    %23 = vector.shape_cast %22 : vector<1x8x128xbf16> to vector<8x128xbf16>
    %24 = vector.shape_cast %21 : vector<8x128xbf16> to vector<1x8x128xbf16>
    tpu.vector_store %arg5[%c0_10, %c0_11, %c0_12], %24 {strides = array<i32>} : memref<1x8x128xbf16, #tpu.memory_space<vmem>>, vector<1x8x128xbf16>,
    %cst_13 = arith.constant 0.000000e+00 : f32
    %25 = vector.broadcast %cst_13 : f32 to vector<8x128xf32>
    %26 = arith.select %18, %25, %16 : vector<8x128xi1>, vector<8x128xf32>
    %c0_14 = arith.constant 0 : index
    %c0_15 = arith.constant 0 : index
    %27 = vector.load %arg6[%c0_14, %c0_15] : memref<8x128xf32, #tpu.memory_space<vmem>>, vector<8x128xf32>
    tpu.vector_store %arg6[%c0_14, %c0_15], %26 {strides = array<i32>} : memref<8x128xf32, #tpu.memory_space<vmem>>, vector<8x128xf32>,
    return
  }
  func.func @transform_0(%arg0: i32, %arg1: i32) -> (i32, i32, i32) {
    %c0_i32 = arith.constant 0 : i32
    %c0_i32_0 = arith.constant 0 : i32
    return %arg1, %arg0, %c0_i32 : i32, i32, i32
  }
  func.func @transform_1(%arg0: i32, %arg1: i32) -> (i32, i32) {
    %c0_i32 = arith.constant 0 : i32
    %c0_i32_0 = arith.constant 0 : i32
    %c0_i32_1 = arith.constant 0 : i32
    return %c0_i32, %c0_i32_0 : i32, i32
  }
  func.func @transform_2(%arg0: i32, %arg1: i32) -> (i32, i32) {
    %c0_i32 = arith.constant 0 : i32
    %c0_i32_0 = arith.constant 0 : i32
    %c0_i32_1 = arith.constant 0 : i32
    return %c0_i32, %c0_i32_0 : i32, i32
  }
  func.func @transform_3(%arg0: i32, %arg1: i32) -> (i32, i32, i32) {
    %c0_i32 = arith.constant 0 : i32
    %c0_i32_0 = arith.constant 0 : i32
    return %arg1, %arg0, %c0_i32 : i32, i32, i32
  }
}

module attributes {stable_mosaic.version = 11 : i64} {
  func.func @_mm_single_stats(%arg0: i32, %arg1: i32, %arg2: memref<16x128xbf16, #tpu.memory_space<vmem>>, %arg3: memref<128x128xbf16, #tpu.memory_space<vmem>>, %arg4: memref<16x128xbf16, #tpu.memory_space<vmem>>, %arg5: memref<1x8x128xf32, #tpu.memory_space<vmem>>) attributes {dimension_semantics = [#tpu.dimension_semantics<parallel>, #tpu.dimension_semantics<parallel>], iteration_bounds = array<i64: 1, 1>, scalar_prefetch = 0 : i64, scratch_operands = 0 : i64, tpu.core_type = #tpu.core_type<tc>, window_params = [{transform_indices = @transform_0, window_bounds = array<i64: 16, 128>}, {transform_indices = @transform_1, window_bounds = array<i64: 128, 128>}, {transform_indices = @transform_2, window_bounds = array<i64: 16, 128>}, {transform_indices = @transform_3, window_bounds = array<i64: 1, 8, 128>}]} {
    %c0 = arith.constant 0 : index
    %c0_0 = arith.constant 0 : index
    %0 = vector.load %arg2[%c0, %c0_0] : memref<16x128xbf16, #tpu.memory_space<vmem>>, vector<16x128xbf16>
    %c0_1 = arith.constant 0 : index
    %c0_2 = arith.constant 0 : index
    %1 = vector.load %arg3[%c0_1, %c0_2] : memref<128x128xbf16, #tpu.memory_space<vmem>>, vector<128x128xbf16>
    %cst = arith.constant dense<0.000000e+00> : vector<16x128xf32>
    %2 = tpu.matmul %0, %1, %cst {dimension_numbers = #tpu.dot_dimension_numbers<[1], [0], [0], [1], [0, 0, 1, 1], [], []>} : vector<16x128xbf16>, vector<128x128xbf16>, vector<16x128xf32> -> vector<16x128xf32>
    %3 = arith.truncf %2 : vector<16x128xf32> to vector<16x128xbf16>
    %c0_3 = arith.constant 0 : index
    %c0_4 = arith.constant 0 : index
    %4 = vector.load %arg4[%c0_3, %c0_4] : memref<16x128xbf16, #tpu.memory_space<vmem>>, vector<16x128xbf16>
    tpu.vector_store %arg4[%c0_3, %c0_4], %3 {strides = array<i32>} : memref<16x128xbf16, #tpu.memory_space<vmem>>, vector<16x128xbf16>,
    %cst_5 = arith.constant dense<0.000000e+00> : vector<128xf32>
    %5 = vector.multi_reduction <add>, %2, %cst_5 [0] : vector<16x128xf32> to vector<128xf32>
    %6 = vector.shape_cast %5 : vector<128xf32> to vector<1x128xf32>
    %7 = arith.mulf %2, %2 : vector<16x128xf32>
    %cst_6 = arith.constant dense<0.000000e+00> : vector<128xf32>
    %8 = vector.multi_reduction <add>, %7, %cst_6 [0] : vector<16x128xf32> to vector<128xf32>
    %9 = vector.shape_cast %8 : vector<128xf32> to vector<1x128xf32>
    %10 = tpu.iota {dimensions = array<i32: 0>} : vector<8x128xi32>
    %c0_i32 = arith.constant 0 : i32
    %11 = vector.broadcast %c0_i32 : i32 to vector<8x128xi32>
    %12 = arith.cmpi eq, %10, %11 : vector<8x128xi32>
    %c1_i32 = arith.constant 1 : i32
    %13 = vector.broadcast %c1_i32 : i32 to vector<8x128xi32>
    %14 = arith.cmpi eq, %10, %13 : vector<8x128xi32>
    %cst_7 = arith.constant 0.000000e+00 : f32
    %15 = vector.shape_cast %9 : vector<1x128xf32> to vector<1x128xf32>
    %16 = vector.broadcast %15 : vector<1x128xf32> to vector<8x128xf32>
    %17 = vector.broadcast %cst_7 : f32 to vector<8x128xf32>
    %18 = arith.select %14, %16, %17 : vector<8x128xi1>, vector<8x128xf32>
    %19 = vector.shape_cast %6 : vector<1x128xf32> to vector<1x128xf32>
    %20 = vector.broadcast %19 : vector<1x128xf32> to vector<8x128xf32>
    %21 = arith.select %12, %20, %18 : vector<8x128xi1>, vector<8x128xf32>
    %c0_8 = arith.constant 0 : index
    %c0_9 = arith.constant 0 : index
    %c0_10 = arith.constant 0 : index
    %22 = vector.load %arg5[%c0_8, %c0_9, %c0_10] : memref<1x8x128xf32, #tpu.memory_space<vmem>>, vector<1x8x128xf32>
    %23 = vector.shape_cast %22 : vector<1x8x128xf32> to vector<8x128xf32>
    %24 = vector.shape_cast %21 : vector<8x128xf32> to vector<1x8x128xf32>
    tpu.vector_store %arg5[%c0_8, %c0_9, %c0_10], %24 {strides = array<i32>} : memref<1x8x128xf32, #tpu.memory_space<vmem>>, vector<1x8x128xf32>,
    return
  }
  func.func @transform_0(%arg0: i32, %arg1: i32) -> (i32, i32) {
    %c0_i32 = arith.constant 0 : i32
    %c0_i32_0 = arith.constant 0 : i32
    return %arg0, %c0_i32 : i32, i32
  }
  func.func @transform_1(%arg0: i32, %arg1: i32) -> (i32, i32) {
    %c0_i32 = arith.constant 0 : i32
    %c0_i32_0 = arith.constant 0 : i32
    return %c0_i32, %arg1 : i32, i32
  }
  func.func @transform_2(%arg0: i32, %arg1: i32) -> (i32, i32) {
    %c0_i32 = arith.constant 0 : i32
    return %arg0, %arg1 : i32, i32
  }
  func.func @transform_3(%arg0: i32, %arg1: i32) -> (i32, i32, i32) {
    %c0_i32 = arith.constant 0 : i32
    %c0_i32_0 = arith.constant 0 : i32
    return %arg0, %c0_i32, %arg1 : i32, i32, i32
  }
}

module attributes {stable_mosaic.version = 11 : i64} {
  func.func @_qkv_sdsa_kernel(%arg0: i32, %arg1: i32, %arg2: memref<1x1x4x96xbf16, #tpu.memory_space<vmem>>, %arg3: memref<1x96xf32, #tpu.memory_space<vmem>>, %arg4: memref<1x96xf32, #tpu.memory_space<vmem>>, %arg5: memref<1x1x4x32xbf16, #tpu.memory_space<vmem>>, %arg6: memref<4x96xf32, #tpu.memory_space<vmem>>, %arg7: memref<1x32xf32, #tpu.memory_space<vmem>>) attributes {dimension_semantics = [#tpu.dimension_semantics<parallel>, #tpu.dimension_semantics<arbitrary>], iteration_bounds = array<i64: 2, 2>, scalar_prefetch = 0 : i64, scratch_operands = 2 : i64, tpu.core_type = #tpu.core_type<tc>, window_params = [{transform_indices = @transform_0, window_bounds = array<i64: 1, 1, 4, 96>}, {pipeline_mode = #tpu.pipeline_mode<synchronous>, transform_indices = @transform_1, window_bounds = array<i64: 1, 96>}, {pipeline_mode = #tpu.pipeline_mode<synchronous>, transform_indices = @transform_2, window_bounds = array<i64: 1, 96>}, {transform_indices = @transform_3, window_bounds = array<i64: 1, 1, 4, 32>}]} {
    %c0_i32 = arith.constant 0 : i32
    %0 = arith.cmpi eq, %arg1, %c0_i32 : i32
    %1 = arith.extui %0 : i1 to i32
    %c0_i32_0 = arith.constant 0 : i32
    %2 = arith.cmpi ne, %1, %c0_i32_0 : i32
    scf.if %2 {
      %cst_26 = arith.constant 0.000000e+00 : f32
      %50 = vector.broadcast %cst_26 : f32 to vector<4x96xf32>
      %c0_27 = arith.constant 0 : index
      %c0_28 = arith.constant 0 : index
      %51 = vector.load %arg6[%c0_27, %c0_28] : memref<4x96xf32, #tpu.memory_space<vmem>>, vector<4x96xf32>
      tpu.vector_store %arg6[%c0_27, %c0_28], %50 {strides = array<i32>} : memref<4x96xf32, #tpu.memory_space<vmem>>, vector<4x96xf32>,
      %cst_29 = arith.constant 0.000000e+00 : f32
      %52 = vector.broadcast %cst_29 : f32 to vector<1x32xf32>
      %c0_30 = arith.constant 0 : index
      %c0_31 = arith.constant 0 : index
      %53 = vector.load %arg7[%c0_30, %c0_31] : memref<1x32xf32, #tpu.memory_space<vmem>>, vector<1x32xf32>
      tpu.vector_store %arg7[%c0_30, %c0_31], %52 {strides = array<i32>} : memref<1x32xf32, #tpu.memory_space<vmem>>, vector<1x32xf32>,
    } else {
    }
    %c0 = arith.constant 0 : index
    %c0_1 = arith.constant 0 : index
    %c0_2 = arith.constant 0 : index
    %c0_3 = arith.constant 0 : index
    %3 = vector.load %arg2[%c0, %c0_1, %c0_2, %c0_3] : memref<1x1x4x96xbf16, #tpu.memory_space<vmem>>, vector<1x1x4x96xbf16>
    %4 = vector.shape_cast %3 : vector<1x1x4x96xbf16> to vector<4x96xbf16>
    %5 = arith.extf %4 : vector<4x96xbf16> to vector<4x96xf32>
    %c0_4 = arith.constant 0 : index
    %c0_5 = arith.constant 0 : index
    %6 = vector.load %arg3[%c0_4, %c0_5] : memref<1x96xf32, #tpu.memory_space<vmem>>, vector<1x96xf32>
    %7 = vector.broadcast %6 : vector<1x96xf32> to vector<4x96xf32>
    %8 = arith.mulf %5, %7 : vector<4x96xf32>
    %c0_6 = arith.constant 0 : index
    %c0_7 = arith.constant 0 : index
    %9 = vector.load %arg4[%c0_6, %c0_7] : memref<1x96xf32, #tpu.memory_space<vmem>>, vector<1x96xf32>
    %10 = vector.broadcast %9 : vector<1x96xf32> to vector<4x96xf32>
    %11 = arith.addf %8, %10 : vector<4x96xf32>
    %c0_8 = arith.constant 0 : index
    %c0_9 = arith.constant 0 : index
    %12 = vector.load %arg6[%c0_8, %c0_9] : memref<4x96xf32, #tpu.memory_space<vmem>>, vector<4x96xf32>
    %13 = arith.subf %11, %12 : vector<4x96xf32>
    %cst = arith.constant 5.000000e-01 : f32
    %14 = vector.broadcast %cst : f32 to vector<4x96xf32>
    %15 = arith.mulf %13, %14 : vector<4x96xf32>
    %16 = arith.addf %12, %15 : vector<4x96xf32>
    %cst_10 = arith.constant 1.000000e+00 : f32
    %17 = vector.broadcast %cst_10 : f32 to vector<4x96xf32>
    %18 = arith.cmpf oge, %16, %17 : vector<4x96xf32>
    %19 = arith.extui %18 : vector<4x96xi1> to vector<4x96xi32>
    %20 = arith.sitofp %19 : vector<4x96xi32> to vector<4x96xf32>
    %cst_11 = arith.constant 1.000000e+00 : f32
    %21 = vector.broadcast %cst_11 : f32 to vector<4x96xf32>
    %22 = arith.subf %21, %20 : vector<4x96xf32>
    %23 = arith.mulf %16, %22 : vector<4x96xf32>
    %c0_12 = arith.constant 0 : index
    %c0_13 = arith.constant 0 : index
    %24 = vector.load %arg6[%c0_12, %c0_13] : memref<4x96xf32, #tpu.memory_space<vmem>>, vector<4x96xf32>
    tpu.vector_store %arg6[%c0_12, %c0_13], %23 {strides = array<i32>} : memref<4x96xf32, #tpu.memory_space<vmem>>, vector<4x96xf32>,
    %25 = vector.extract_strided_slice %20 {offsets = [0, 0], sizes = [4, 32], strides = [1, 1]} : vector<4x96xf32> to vector<4x32xf32>
    %26 = vector.extract_strided_slice %20 {offsets = [0, 32], sizes = [4, 32], strides = [1, 1]} : vector<4x96xf32> to vector<4x32xf32>
    %27 = vector.extract_strided_slice %20 {offsets = [0, 64], sizes = [4, 32], strides = [1, 1]} : vector<4x96xf32> to vector<4x32xf32>
    %28 = arith.mulf %26, %27 : vector<4x32xf32>
    %cst_14 = arith.constant dense<0.000000e+00> : vector<32xf32>
    %29 = vector.multi_reduction <add>, %28, %cst_14 [0] : vector<4x32xf32> to vector<32xf32>
    %30 = vector.shape_cast %29 : vector<32xf32> to vector<1x32xf32>
    %c0_15 = arith.constant 0 : index
    %c0_16 = arith.constant 0 : index
    %31 = vector.load %arg7[%c0_15, %c0_16] : memref<1x32xf32, #tpu.memory_space<vmem>>, vector<1x32xf32>
    %32 = arith.subf %30, %31 : vector<1x32xf32>
    %cst_17 = arith.constant 5.000000e-01 : f32
    %33 = vector.broadcast %cst_17 : f32 to vector<1x32xf32>
    %34 = arith.mulf %32, %33 : vector<1x32xf32>
    %35 = arith.addf %31, %34 : vector<1x32xf32>
    %cst_18 = arith.constant 1.000000e+00 : f32
    %36 = vector.broadcast %cst_18 : f32 to vector<1x32xf32>
    %37 = arith.cmpf oge, %35, %36 : vector<1x32xf32>
    %38 = arith.extui %37 : vector<1x32xi1> to vector<1x32xi32>
    %39 = arith.sitofp %38 : vector<1x32xi32> to vector<1x32xf32>
    %cst_19 = arith.constant 1.000000e+00 : f32
    %40 = vector.broadcast %cst_19 : f32 to vector<1x32xf32>
    %41 = arith.subf %40, %39 : vector<1x32xf32>
    %42 = arith.mulf %35, %41 : vector<1x32xf32>
    %c0_20 = arith.constant 0 : index
    %c0_21 = arith.constant 0 : index
    %43 = vector.load %arg7[%c0_20, %c0_21] : memref<1x32xf32, #tpu.memory_space<vmem>>, vector<1x32xf32>
    tpu.vector_store %arg7[%c0_20, %c0_21], %42 {strides = array<i32>} : memref<1x32xf32, #tpu.memory_space<vmem>>, vector<1x32xf32>,
    %44 = vector.broadcast %39 : vector<1x32xf32> to vector<4x32xf32>
    %45 = arith.mulf %25, %44 : vector<4x32xf32>
    %46 = arith.truncf %45 : vector<4x32xf32> to vector<4x32xbf16>
    %c0_22 = arith.constant 0 : index
    %c0_23 = arith.constant 0 : index
    %c0_24 = arith.constant 0 : index
    %c0_25 = arith.constant 0 : index
    %47 = vector.load %arg5[%c0_22, %c0_23, %c0_24, %c0_25] : memref<1x1x4x32xbf16, #tpu.memory_space<vmem>>, vector<1x1x4x32xbf16>
    %48 = vector.shape_cast %47 : vector<1x1x4x32xbf16> to vector<4x32xbf16>
    %49 = vector.shape_cast %46 : vector<4x32xbf16> to vector<1x1x4x32xbf16>
    tpu.vector_store %arg5[%c0_22, %c0_23, %c0_24, %c0_25], %49 {strides = array<i32>} : memref<1x1x4x32xbf16, #tpu.memory_space<vmem>>, vector<1x1x4x32xbf16>,
    return
  }
  func.func @transform_0(%arg0: i32, %arg1: i32) -> (i32, i32, i32, i32) {
    %c0_i32 = arith.constant 0 : i32
    %c0_i32_0 = arith.constant 0 : i32
    %c0_i32_1 = arith.constant 0 : i32
    return %arg1, %arg0, %c0_i32, %c0_i32_0 : i32, i32, i32, i32
  }
  func.func @transform_1(%arg0: i32, %arg1: i32) -> (i32, i32) {
    %c0_i32 = arith.constant 0 : i32
    %c0_i32_0 = arith.constant 0 : i32
    %c0_i32_1 = arith.constant 0 : i32
    return %c0_i32, %c0_i32_0 : i32, i32
  }
  func.func @transform_2(%arg0: i32, %arg1: i32) -> (i32, i32) {
    %c0_i32 = arith.constant 0 : i32
    %c0_i32_0 = arith.constant 0 : i32
    %c0_i32_1 = arith.constant 0 : i32
    return %c0_i32, %c0_i32_0 : i32, i32
  }
  func.func @transform_3(%arg0: i32, %arg1: i32) -> (i32, i32, i32, i32) {
    %c0_i32 = arith.constant 0 : i32
    %c0_i32_0 = arith.constant 0 : i32
    %c0_i32_1 = arith.constant 0 : i32
    return %arg1, %arg0, %c0_i32, %c0_i32_0 : i32, i32, i32, i32
  }
}

module attributes {stable_mosaic.version = 11 : i64} {
  func.func @_bn_lif_kernel(%arg0: i32, %arg1: i32, %arg2: memref<1x8x32xf32, #tpu.memory_space<vmem>>, %arg3: memref<1x32xf32, #tpu.memory_space<vmem>>, %arg4: memref<1x32xf32, #tpu.memory_space<vmem>>, %arg5: memref<1x8x32xbf16, #tpu.memory_space<vmem>>, %arg6: memref<8x32xf32, #tpu.memory_space<vmem>>) attributes {dimension_semantics = [#tpu.dimension_semantics<parallel>, #tpu.dimension_semantics<arbitrary>], iteration_bounds = array<i64: 1, 2>, scalar_prefetch = 0 : i64, scratch_operands = 1 : i64, tpu.core_type = #tpu.core_type<tc>, window_params = [{transform_indices = @transform_0, window_bounds = array<i64: 1, 8, 32>}, {pipeline_mode = #tpu.pipeline_mode<synchronous>, transform_indices = @transform_1, window_bounds = array<i64: 1, 32>}, {pipeline_mode = #tpu.pipeline_mode<synchronous>, transform_indices = @transform_2, window_bounds = array<i64: 1, 32>}, {transform_indices = @transform_3, window_bounds = array<i64: 1, 8, 32>}]} {
    %c0_i32 = arith.constant 0 : i32
    %0 = arith.cmpi eq, %arg1, %c0_i32 : i32
    %1 = arith.extui %0 : i1 to i32
    %c0_i32_0 = arith.constant 0 : i32
    %2 = arith.cmpi ne, %1, %c0_i32_0 : i32
    scf.if %2 {
      %cst_16 = arith.constant 0.000000e+00 : f32
      %27 = vector.broadcast %cst_16 : f32 to vector<8x32xf32>
      %c0_17 = arith.constant 0 : index
      %c0_18 = arith.constant 0 : index
      %28 = vector.load %arg6[%c0_17, %c0_18] : memref<8x32xf32, #tpu.memory_space<vmem>>, vector<8x32xf32>
      tpu.vector_store %arg6[%c0_17, %c0_18], %27 {strides = array<i32>} : memref<8x32xf32, #tpu.memory_space<vmem>>, vector<8x32xf32>,
    } else {
    }
    %c0 = arith.constant 0 : index
    %c0_1 = arith.constant 0 : index
    %c0_2 = arith.constant 0 : index
    %3 = vector.load %arg2[%c0, %c0_1, %c0_2] : memref<1x8x32xf32, #tpu.memory_space<vmem>>, vector<1x8x32xf32>
    %4 = vector.shape_cast %3 : vector<1x8x32xf32> to vector<8x32xf32>
    %c0_3 = arith.constant 0 : index
    %c0_4 = arith.constant 0 : index
    %5 = vector.load %arg3[%c0_3, %c0_4] : memref<1x32xf32, #tpu.memory_space<vmem>>, vector<1x32xf32>
    %6 = vector.broadcast %5 : vector<1x32xf32> to vector<8x32xf32>
    %7 = arith.mulf %4, %6 : vector<8x32xf32>
    %c0_5 = arith.constant 0 : index
    %c0_6 = arith.constant 0 : index
    %8 = vector.load %arg4[%c0_5, %c0_6] : memref<1x32xf32, #tpu.memory_space<vmem>>, vector<1x32xf32>
    %9 = vector.broadcast %8 : vector<1x32xf32> to vector<8x32xf32>
    %10 = arith.addf %7, %9 : vector<8x32xf32>
    %c0_7 = arith.constant 0 : index
    %c0_8 = arith.constant 0 : index
    %11 = vector.load %arg6[%c0_7, %c0_8] : memref<8x32xf32, #tpu.memory_space<vmem>>, vector<8x32xf32>
    %12 = arith.subf %10, %11 : vector<8x32xf32>
    %cst = arith.constant 5.000000e-01 : f32
    %13 = vector.broadcast %cst : f32 to vector<8x32xf32>
    %14 = arith.mulf %12, %13 : vector<8x32xf32>
    %15 = arith.addf %11, %14 : vector<8x32xf32>
    %cst_9 = arith.constant 1.000000e+00 : f32
    %16 = vector.broadcast %cst_9 : f32 to vector<8x32xf32>
    %17 = arith.cmpf oge, %15, %16 : vector<8x32xf32>
    %18 = arith.extui %17 : vector<8x32xi1> to vector<8x32xi32>
    %19 = arith.sitofp %18 : vector<8x32xi32> to vector<8x32xf32>
    %20 = arith.truncf %19 : vector<8x32xf32> to vector<8x32xbf16>
    %c0_10 = arith.constant 0 : index
    %c0_11 = arith.constant 0 : index
    %c0_12 = arith.constant 0 : index
    %21 = vector.load %arg5[%c0_10, %c0_11, %c0_12] : memref<1x8x32xbf16, #tpu.memory_space<vmem>>, vector<1x8x32xbf16>
    %22 = vector.shape_cast %21 : vector<1x8x32xbf16> to vector<8x32xbf16>
    %23 = vector.shape_cast %20 : vector<8x32xbf16> to vector<1x8x32xbf16>
    tpu.vector_store %arg5[%c0_10, %c0_11, %c0_12], %23 {strides = array<i32>} : memref<1x8x32xbf16, #tpu.memory_space<vmem>>, vector<1x8x32xbf16>,
    %cst_13 = arith.constant 0.000000e+00 : f32
    %24 = vector.broadcast %cst_13 : f32 to vector<8x32xf32>
    %25 = arith.select %17, %24, %15 : vector<8x32xi1>, vector<8x32xf32>
    %c0_14 = arith.constant 0 : index
    %c0_15 = arith.constant 0 : index
    %26 = vector.load %arg6[%c0_14, %c0_15] : memref<8x32xf32, #tpu.memory_space<vmem>>, vector<8x32xf32>
    tpu.vector_store %arg6[%c0_14, %c0_15], %25 {strides = array<i32>} : memref<8x32xf32, #tpu.memory_space<vmem>>, vector<8x32xf32>,
    return
  }
  func.func @transform_0(%arg0: i32, %arg1: i32) -> (i32, i32, i32) {
    %c0_i32 = arith.constant 0 : i32
    %c0_i32_0 = arith.constant 0 : i32
    return %arg1, %arg0, %c0_i32 : i32, i32, i32
  }
  func.func @transform_1(%arg0: i32, %arg1: i32) -> (i32, i32) {
    %c0_i32 = arith.constant 0 : i32
    %c0_i32_0 = arith.constant 0 : i32
    %c0_i32_1 = arith.constant 0 : i32
    return %c0_i32, %c0_i32_0 : i32, i32
  }
  func.func @transform_2(%arg0: i32, %arg1: i32) -> (i32, i32) {
    %c0_i32 = arith.constant 0 : i32
    %c0_i32_0 = arith.constant 0 : i32
    %c0_i32_1 = arith.constant 0 : i32
    return %c0_i32, %c0_i32_0 : i32, i32
  }
  func.func @transform_3(%arg0: i32, %arg1: i32) -> (i32, i32, i32) {
    %c0_i32 = arith.constant 0 : i32
    %c0_i32_0 = arith.constant 0 : i32
    return %arg1, %arg0, %c0_i32 : i32, i32, i32
  }
}

module attributes {stable_mosaic.version = 11 : i64} {
  func.func @_mm_single(%arg0: i32, %arg1: i32, %arg2: memref<8x128xbf16, #tpu.memory_space<vmem>>, %arg3: memref<128x128xbf16, #tpu.memory_space<vmem>>, %arg4: memref<8x128xf32, #tpu.memory_space<vmem>>) attributes {dimension_semantics = [#tpu.dimension_semantics<parallel>, #tpu.dimension_semantics<parallel>], iteration_bounds = array<i64: 1, 1>, scalar_prefetch = 0 : i64, scratch_operands = 0 : i64, tpu.core_type = #tpu.core_type<tc>, window_params = [{transform_indices = @transform_0, window_bounds = array<i64: 8, 128>}, {transform_indices = @transform_1, window_bounds = array<i64: 128, 128>}, {transform_indices = @transform_2, window_bounds = array<i64: 8, 128>}]} {
    %c0 = arith.constant 0 : index
    %c0_0 = arith.constant 0 : index
    %0 = vector.load %arg2[%c0, %c0_0] : memref<8x128xbf16, #tpu.memory_space<vmem>>, vector<8x128xbf16>
    %c0_1 = arith.constant 0 : index
    %c0_2 = arith.constant 0 : index
    %1 = vector.load %arg3[%c0_1, %c0_2] : memref<128x128xbf16, #tpu.memory_space<vmem>>, vector<128x128xbf16>
    %cst = arith.constant dense<0.000000e+00> : vector<8x128xf32>
    %2 = tpu.matmul %0, %1, %cst {dimension_numbers = #tpu.dot_dimension_numbers<[1], [0], [0], [1], [0, 0, 1, 1], [], []>} : vector<8x128xbf16>, vector<128x128xbf16>, vector<8x128xf32> -> vector<8x128xf32>
    %c0_3 = arith.constant 0 : index
    %c0_4 = arith.constant 0 : index
    %3 = vector.load %arg4[%c0_3, %c0_4] : memref<8x128xf32, #tpu.memory_space<vmem>>, vector<8x128xf32>
    tpu.vector_store %arg4[%c0_3, %c0_4], %2 {strides = array<i32>} : memref<8x128xf32, #tpu.memory_space<vmem>>, vector<8x128xf32>,
    return
  }
  func.func @transform_0(%arg0: i32, %arg1: i32) -> (i32, i32) {
    %c0_i32 = arith.constant 0 : i32
    %c0_i32_0 = arith.constant 0 : i32
    return %arg0, %c0_i32 : i32, i32
  }
  func.func @transform_1(%arg0: i32, %arg1: i32) -> (i32, i32) {
    %c0_i32 = arith.constant 0 : i32
    %c0_i32_0 = arith.constant 0 : i32
    return %c0_i32, %arg1 : i32, i32
  }
  func.func @transform_2(%arg0: i32, %arg1: i32) -> (i32, i32) {
    %c0_i32 = arith.constant 0 : i32
    return %arg0, %arg1 : i32, i32
  }
}

</mosaic_0001>

<llo_original>
// kernel: tile.67
$region0: #{tile.67}
  #allocation0 [shape = 's32[1]{0}', space=sflag, size = 0x4, scoped, tag = 'scoped memory for tile.67']
  %s0 = inlined_call_operand.vmem [shape: f32[4], index: 0, kind: input, shape index: {}]
  %s1 = inlined_call_operand.vmem [shape: f32[32,4], index: 1, kind: output, shape index: {}]
  // Predicated region
  $region2: #{tile.67} parent=0 // pred_check
    _
  $region3: #{tile.67} parent=0 // pred_check_branch
    %3 = sbr.rel (0) target = $region5
  $region4: #{tile.67} parent=0 // pred_region
    _
  $region5: #{tile.67} parent=0 // pred_fallthru
    _
  %v4 = vld [vmem:[%s0] ss:$0 sm:$0xff]
  %5 = vst [vmem:[%s1] sm:$0xff] %v4
  %s6 = scalar_lea.vmem %s1, 8
  %7 = vst [vmem:[%s6] sm:$0xff] %v4
  %s8 = scalar_lea.vmem %s1, 16
  %9 = vst [vmem:[%s8] sm:$0xff] %v4
  %s10 = scalar_lea.vmem %s1, 24
  %11 = vst [vmem:[%s10] sm:$0xff] %v4

// kernel: tile.68
$region0: #{tile.68}
  %s0 = inlined_call_operand.vmem [shape: f32[32,4], index: 0, kind: input, shape index: {}]
  %s1 = inlined_call_operand.vmem [shape: f32[1,128], index: 1, kind: output, shape index: {}]
  $region1: #{tile.68} parent=0
    #allocation0 [shape = 'u8[4096]{0}', space=vmem, size = 0x1000, scoped, tag = 'scoped mem for output reshape']
    %v2 = vld [vmem:[%s0] sm:$0x1]
    %vm3 = vcmask 31744
    %4 = vst.msk [vmem:[#allocation0] sm:$0x1] %vm3, %v2
    %s5 = scalar_lea.vmem %s0, 31
    %v6 = vld [vmem:[%s5] sm:$0x1]
    %7 = vrot.lane.b32.xlu0 %v6, 124
    %v8 = vpop.permute.xlu0 %7
    %vm9 = vcmask 1048544
    %10 = vst.msk [vmem:[#allocation0] sm:$0x1] %vm9, %v8
    %s11 = scalar_lea.vmem %s0, 30
    %v12 = vld [vmem:[%s11] sm:$0x1]
    %13 = vrot.lane.b32.xlu0 %v12, 120
    %v14 = vpop.permute.xlu0 %13
    %vm15 = vcmask 1015744
    %16 = vst.msk [vmem:[#allocation0] sm:$0x1] %vm15, %v14
    %s17 = scalar_lea.vmem %s0, 29
    %v18 = vld [vmem:[%s17] sm:$0x1]
    %19 = vrot.lane.b32.xlu0 %v18, 116
    %v20 = vpop.permute.xlu0 %19
    %vm21 = vcmask 982944
    %22 = vst.msk [vmem:[#allocation0] sm:$0x1] %vm21, %v20
    %s23 = scalar_lea.vmem %s0, 28
    %v24 = vld [vmem:[%s23] sm:$0x1]
    %25 = vrot.lane.b32.xlu0 %v24, 112
    %v26 = vpop.permute.xlu0 %25
    %vm27 = vcmask 950144
    %28 = vst.msk [vmem:[#allocation0] sm:$0x1] %vm27, %v26
    %s29 = scalar_lea.vmem %s0, 27
    %v30 = vld [vmem:[%s29] sm:$0x1]
    %31 = vrot.lane.b32.xlu0 %v30, 108
    %v32 = vpop.permute.xlu0 %31
    %vm33 = vcmask 917344
    %34 = vst.msk [vmem:[#allocation0] sm:$0x1] %vm33, %v32
    %s35 = scalar_lea.vmem %s0, 26
    %v36 = vld [vmem:[%s35] sm:$0x1]
    %37 = vrot.lane.b32.xlu0 %v36, 104
    %v38 = vpop.permute.xlu0 %37
    %vm39 = vcmask 884544
    %40 = vst.msk [vmem:[#allocation0] sm:$0x1] %vm39, %v38
    %s41 = scalar_lea.vmem %s0, 25
    %v42 = vld [vmem:[%s41] sm:$0x1]
    %43 = vrot.lane.b32.xlu0 %v42, 100
    %v44 = vpop.permute.xlu0 %43
    %vm45 = vcmask 851744
    %46 = vst.msk [vmem:[#allocation0] sm:$0x1] %vm45, %v44
    %s47 = scalar_lea.vmem %s0, 24
    %v48 = vld [vmem:[%s47] sm:$0x1]
    %49 = vrot.lane.b32.xlu0 %v48, 96
    %v50 = vpop.permute.xlu0 %49
    %vm51 = vcmask 818944
    %52 = vst.msk [vmem:[#allocation0] sm:$0x1] %vm51, %v50
    %s53 = scalar_lea.vmem %s0, 23
    %v54 = vld [vmem:[%s53] sm:$0x1]
    %55 = vrot.lane.b32.xlu0 %v54, 92
    %v56 = vpop.permute.xlu0 %55
    %vm57 = vcmask 786144
    %58 = vst.msk [vmem:[#allocation0] sm:$0x1] %vm57, %v56
    %s59 = scalar_lea.vmem %s0, 22
    %v60 = vld [vmem:[%s59] sm:$0x1]
    %61 = vrot.lane.b32.xlu0 %v60, 88
    %v62 = vpop.permute.xlu0 %61
    %vm63 = vcmask 753344
    %64 = vst.msk [vmem:[#allocation0] sm:$0x1] %vm63, %v62
    %s65 = scalar_lea.vmem %s0, 21
    %v66 = vld [vmem:[%s65] sm:$0x1]
    %67 = vrot.lane.b32.xlu0 %v66, 84
    %v68 = vpop.permute.xlu0 %67
    %vm69 = vcmask 720544
    %70 = vst.msk [vmem:[#allocation0] sm:$0x1] %vm69, %v68
    %s71 = scalar_lea.vmem %s0, 20
    %v72 = vld [vmem:[%s71] sm:$0x1]
    %73 = vrot.lane.b32.xlu0 %v72, 80
    %v74 = vpop.permute.xlu0 %73
    %vm75 = vcmask 687744
    %76 = vst.msk [vmem:[#allocation0] sm:$0x1] %vm75, %v74
    %s77 = scalar_lea.vmem %s0, 19
    %v78 = vld [vmem:[%s77] sm:$0x1]
    %79 = vrot.lane.b32.xlu0 %v78, 76
    %v80 = vpop.permute.xlu0 %79
    %vm81 = vcmask 654944
    %82 = vst.msk [vmem:[#allocation0] sm:$0x1] %vm81, %v80
    %s83 = scalar_lea.vmem %s0, 18
    %v84 = vld [vmem:[%s83] sm:$0x1]
    %85 = vrot.lane.b32.xlu0 %v84, 72
    %v86 = vpop.permute.xlu0 %85
    %vm87 = vcmask 622144
    %88 = vst.msk [vmem:[#allocation0] sm:$0x1] %vm87, %v86
    %s89 = scalar_lea.vmem %s0, 17
    %v90 = vld [vmem:[%s89] sm:$0x1]
    %91 = vrot.lane.b32.xlu0 %v90, 68
    %v92 = vpop.permute.xlu0 %91
    %vm93 = vcmask 589344
    %94 = vst.msk [vmem:[#allocation0] sm:$0x1] %vm93, %v92
    %s95 = scalar_lea.vmem %s0, 16
    %v96 = vld [vmem:[%s95] sm:$0x1]
    %97 = vrot.lane.b32.xlu0 %v96, 64
    %v98 = vpop.permute.xlu0 %97
    %vm99 = vcmask 556544
    %100 = vst.msk [vmem:[#allocation0] sm:$0x1] %vm99, %v98
    %s101 = scalar_lea.vmem %s0, 15
    %v102 = vld [vmem:[%s101] sm:$0x1]
    %103 = vrot.lane.b32.xlu0 %v102, 60
    %v104 = vpop.permute.xlu0 %103
    %vm105 = vcmask 523744
    %106 = vst.msk [vmem:[#allocation0] sm:$0x1] %vm105, %v104
    %s107 = scalar_lea.vmem %s0, 14
    %v108 = vld [vmem:[%s107] sm:$0x1]
    %109 = vrot.lane.b32.xlu0 %v108, 56
    %v110 = vpop.permute.xlu0 %109
    %vm111 = vcmask 490944
    %112 = vst.msk [vmem:[#allocation0] sm:$0x1] %vm111, %v110
    %s113 = scalar_lea.vmem %s0, 13
    %v114 = vld [vmem:[%s113] sm:$0x1]
    %115 = vrot.lane.b32.xlu0 %v114, 52
    %v116 = vpop.permute.xlu0 %115
    %vm117 = vcmask 458144
    %118 = vst.msk [vmem:[#allocation0] sm:$0x1] %vm117, %v116
    %s119 = scalar_lea.vmem %s0, 12
    %v120 = vld [vmem:[%s119] sm:$0x1]
    %121 = vrot.lane.b32.xlu0 %v120, 48
    %v122 = vpop.permute.xlu0 %121
    %vm123 = vcmask 425344
    %124 = vst.msk [vmem:[#allocation0] sm:$0x1] %vm123, %v122
    %s125 = scalar_lea.vmem %s0, 11
    %v126 = vld [vmem:[%s125] sm:$0x1]
    %127 = vrot.lane.b32.xlu0 %v126, 44
    %v128 = vpop.permute.xlu0 %127
    %vm129 = vcmask 392544
    %130 = vst.msk [vmem:[#allocation0] sm:$0x1] %vm129, %v128
    %s131 = scalar_lea.vmem %s0, 10
    %v132 = vld [vmem:[%s131] sm:$0x1]
    %133 = vrot.lane.b32.xlu0 %v132, 40
    %v134 = vpop.permute.xlu0 %133
    %vm135 = vcmask 359744
    %136 = vst.msk [vmem:[#allocation0] sm:$0x1] %vm135, %v134
    %s137 = scalar_lea.vmem %s0, 9
    %v138 = vld [vmem:[%s137] sm:$0x1]
    %139 = vrot.lane.b32.xlu0 %v138, 36
    %v140 = vpop.permute.xlu0 %139
    %vm141 = vcmask 326944
    %142 = vst.msk [vmem:[#allocation0] sm:$0x1] %vm141, %v140
    %s143 = scalar_lea.vmem %s0, 8
    %v144 = vld [vmem:[%s143] sm:$0x1]
    %145 = vrot.lane.b32.xlu0 %v144, 32
    %v146 = vpop.permute.xlu0 %145
    %vm147 = vcmask 294144
    %148 = vst.msk [vmem:[#allocation0] sm:$0x1] %vm147, %v146
    %s149 = scalar_lea.vmem %s0, 7
    %v150 = vld [vmem:[%s149] sm:$0x1]
    %151 = vrot.lane.b32.xlu0 %v150, 28
    %v152 = vpop.permute.xlu0 %151
    %vm153 = vcmask 261344
    %154 = vst.msk [vmem:[#allocation0] sm:$0x1] %vm153, %v152
    %s155 = scalar_lea.vmem %s0, 6
    %v156 = vld [vmem:[%s155] sm:$0x1]
    %157 = vrot.lane.b32.xlu0 %v156, 24
    %v158 = vpop.permute.xlu0 %157
    %vm159 = vcmask 228544
    %160 = vst.msk [vmem:[#allocation0] sm:$0x1] %vm159, %v158
    %s161 = scalar_lea.vmem %s0, 5
    %v162 = vld [vmem:[%s161] sm:$0x1]
    %163 = vrot.lane.b32.xlu0 %v162, 20
    %v164 = vpop.permute.xlu0 %163
    %vm165 = vcmask 195744
    %166 = vst.msk [vmem:[#allocation0] sm:$0x1] %vm165, %v164
    %s167 = scalar_lea.vmem %s0, 4
    %v168 = vld [vmem:[%s167] sm:$0x1]
    %169 = vrot.lane.b32.xlu0 %v168, 16
    %v170 = vpop.permute.xlu0 %169
    %vm171 = vcmask 162944
    %172 = vst.msk [vmem:[#allocation0] sm:$0x1] %vm171, %v170
    %s173 = scalar_lea.vmem %s0, 3
    %v174 = vld [vmem:[%s173] sm:$0x1]
    %175 = vrot.lane.b32.xlu0 %v174, 12
    %v176 = vpop.permute.xlu0 %175
    %vm177 = vcmask 130144
    %178 = vst.msk [vmem:[#allocation0] sm:$0x1] %vm177, %v176
    %s179 = scalar_lea.vmem %s0, 2
    %v180 = vld [vmem:[%s179] sm:$0x1]
    %181 = vrot.lane.b32.xlu0 %v180, 8
    %v182 = vpop.permute.xlu0 %181
    %vm183 = vcmask 97344
    %184 = vst.msk [vmem:[#allocation0] sm:$0x1] %vm183, %v182
    %s185 = scalar_lea.vmem %s0, 1
    %v186 = vld [vmem:[%s185] sm:$0x1]
    %187 = vrot.lane.b32.xlu0 %v186, 4
    %v188 = vpop.permute.xlu0 %187
    %vm189 = vcmask 64544
    %190 = vst.msk [vmem:[#allocation0] sm:$0x1] %vm189, %v188
    %s192 = ssub.s32 2, 1
    %v193 = vld [vmem:[#allocation0] sm:%s192]
    %s195 = ssub.s32 2, 1
    %196 = vst [vmem:[%s1] sm:%s195] %v193

// kernel: spike_driven_transformer.22
$region0: #{spike_driven_transformer.22}
  #allocation0 [shape = 'u32[]', space=smem, size = 0x4, offset = 0x4, fixed_abs, tag = 'smem constant byte address 0x4 - core index']
  #allocation1 [shape = 'u32[72,128]{1,0:T(1,128)}', space=vmem, size = 0x9000, scoped, tag = 'internal scratch']
  #allocation2 [shape = 'f32[32,128]{1,0:T(8,128)}', space=vmem, size = 0x4000, scoped, tag = 'scratch operand']
  %s0 = inlined_call_operand.vmem [shape: bf16[1,64,128], index: 0, kind: input, shape index: {}]
  %s1 = inlined_call_operand.vmem [shape: f32[1,128], index: 1, kind: input, shape index: {}]
  %s2 = inlined_call_operand.vmem [shape: f32[1,128], index: 2, kind: input, shape index: {}]
  %s3 = inlined_call_operand.vmem [shape: bf16[2,64,128], index: 3, kind: output, shape index: {}]
  %s4 = sld [smem:[#allocation0]]
  $region49: #{spike_driven_transformer.22} parent=0
    _
  %s6 = ssub.s32 1, %s4
  %s7 = scalar_select 0, %s6, %s4
  loop: start=0, step=1, limit=6
  $region2: #{spike_driven_transformer.22} parent=0 // loop_pre_header
    _
  $region3: #{spike_driven_transformer.22} parent=0 // loop_header
    %s9 = sphi 0, %s13
    %p10 = scmp.ge.s32.totalorder %s9, 6
    %s16 = sphi 0, %s28
    %s17 = sphi 0, %s24
    %s18 = sphi 0, %s16
    %s19 = sphi 0, %s17
    %s20 = sphi 0, %s18
    %s21 = sphi 0, %s19
    %s31 = sphi 0, %s33
    %s34 = sphi 0, %s31
    %s35 = sphi 0, %s34
    %s51 = sphi 0, %s35
    %s55 = sphi 0, %s55
    %s57 = sphi 0, %s55
    %s58 = sphi 0, %s57
    %s72 = sphi 0, %s58
    %s76 = sphi 0, %s76
    %s78 = sphi 0, %s76
    %s79 = sphi 0, %s78
    %s93 = sphi 0, %s79
    %s101 = sphi 0, %s103
    %s104 = sphi 0, %s101
    %s105 = sphi 0, %s104
    %s121 = sphi 0, %s105
  $region4: #{spike_driven_transformer.22} parent=0 // loop_header_branch
    %12 = sbr.rel (%p10) target = $region8
  $region5: #{spike_driven_transformer.22} parent=0 // loop_body
    %s14 = ssub.s32 %s9, 1
    %s15 = ssub.s32 %s9, 2
    %s22 = sadd.s32 1, %s17
    %p23 = scmp.ge.s32.totalorder %s22, 2
    %s24 = scalar_select %p23, 0, %s22
    %s25 = sadd.s32 1, %s16
    %s26 = scalar_select %p23, %s25, %s16
    %p27 = scmp.ge.s32.totalorder %s26, 2
    %s28 = scalar_select %p27, 0, %s26
    %s29 = ssub.s32 %s16, %s28
    %p30 = scmp.eq.s32.totalorder %s29, 0
    %s32 = sadd.s32 %s31, 1
    %s33 = scalar_select %p30, %s31, %s32
    %p36 = pneg %p30
    %p37 = scmp.eq.s32.totalorder %s9, 3
    %p38 = por %p36, %p37
    %p39 = scmp.ne.s32.totalorder %s31, %s34
    %p40 = scmp.eq.s32.totalorder %s9, 0
    %p41 = por %p39, %p40
    %p42 = scmp.ne.s32.totalorder %s31, %s34
    %p43 = scmp.eq.s32.totalorder %s14, 3
    %p44 = por %p42, %p43
    %p45 = scmp.ne.s32.totalorder %s34, %s35
    %p46 = scmp.eq.s32.totalorder %s14, 0
    %p47 = por %p45, %p46
    %p48 = scmp.ne.s32.totalorder %s34, %s35
    %p49 = scmp.eq.s32.totalorder %s15, 3
    %p50 = por %p48, %p49
    %p52 = scmp.ne.s32.totalorder %s35, %s51
    %p53 = scmp.eq.s32.totalorder %s15, 0
    %p54 = por %p52, %p53
    %s56 = sadd.s32 %s55, 1
    %p59 = scmp.eq.s32.totalorder %s9, 3
    %p60 = scmp.ne.s32.totalorder %s55, %s57
    %p61 = scmp.eq.s32.totalorder %s9, 0
    %p62 = por %p60, %p61
    %p63 = scmp.ne.s32.totalorder %s55, %s57
    %p64 = scmp.eq.s32.totalorder %s14, 3
    %p65 = por %p63, %p64
    %p66 = scmp.ne.s32.totalorder %s57, %s58
    %p67 = scmp.eq.s32.totalorder %s14, 0
    %p68 = por %p66, %p67
    %p69 = scmp.ne.s32.totalorder %s57, %s58
    %p70 = scmp.eq.s32.totalorder %s15, 3
    %p71 = por %p69, %p70
    %p73 = scmp.ne.s32.totalorder %s58, %s72
    %p74 = scmp.eq.s32.totalorder %s15, 0
    %p75 = por %p73, %p74
    %s77 = sadd.s32 %s76, 1
    %p80 = scmp.eq.s32.totalorder %s9, 3
    %p81 = scmp.ne.s32.totalorder %s76, %s78
    %p82 = scmp.eq.s32.totalorder %s9, 0
    %p83 = por %p81, %p82
    %p84 = scmp.ne.s32.totalorder %s76, %s78
    %p85 = scmp.eq.s32.totalorder %s14, 3
    %p86 = por %p84, %p85
    %p87 = scmp.ne.s32.totalorder %s78, %s79
    %p88 = scmp.eq.s32.totalorder %s14, 0
    %p89 = por %p87, %p88
    %p90 = scmp.ne.s32.totalorder %s78, %s79
    %p91 = scmp.eq.s32.totalorder %s15, 3
    %p92 = por %p90, %p91
    %p94 = scmp.ne.s32.totalorder %s79, %s93
    %p95 = scmp.eq.s32.totalorder %s15, 0
    %p96 = por %p94, %p95
    %s97 = ssub.s32 %s17, %s24
    %s98 = ssub.s32 %s16, %s28
    %s99 = sor.u32 %s97, %s98
    %p100 = scmp.eq.s32.totalorder %s99, 0
    %s102 = sadd.s32 %s101, 1
    %s103 = scalar_select %p100, %s101, %s102
    %p106 = pneg %p100
    %p107 = scmp.eq.s32.totalorder %s9, 3
    %p108 = por %p106, %p107
    %p109 = scmp.ne.s32.totalorder %s101, %s104
    %p110 = scmp.eq.s32.totalorder %s9, 0
    %p111 = por %p109, %p110
    %p112 = scmp.ne.s32.totalorder %s101, %s104
    %p113 = scmp.eq.s32.totalorder %s14, 3
    %p114 = por %p112, %p113
    %p115 = scmp.ne.s32.totalorder %s104, %s105
    %p116 = scmp.eq.s32.totalorder %s14, 0
    %p117 = por %p115, %p116
    %p118 = scmp.ne.s32.totalorder %s104, %s105
    %p119 = scmp.eq.s32.totalorder %s15, 3
    %p120 = por %p118, %p119
    %p122 = scmp.ne.s32.totalorder %s105, %s121
    %p123 = scmp.eq.s32.totalorder %s15, 0
    %p124 = por %p122, %p123
    %p125 = scmp.le.s32.totalorder 1, %s9
    %p126 = scmp.lt.s32.totalorder %s9, 5
    %p127 = pnand %p125, %p126
    %p128 = pneg %p127
    // Predicated region
    $region9: #{spike_driven_transformer.22} parent=5 // pred_check
      _
    $region10: #{spike_driven_transformer.22} parent=5 // pred_check_branch
      %130 = sbr.rel (%p127) target = $region12
    $region11: #{spike_driven_transformer.22} parent=5 // pred_region
      %s131 = ssub.s32 %s9, 1
      // Predicated region
      $region13: #{spike_driven_transformer.22} parent=11 // pred_check
        %p132 = pneg %p68
      $region14: #{spike_driven_transformer.22} parent=11 // pred_check_branch
        %134 = sbr.rel (%p132) target = $region16
      $region15: #{spike_driven_transformer.22} parent=11 // pred_region
        _
      $region16: #{spike_driven_transformer.22} parent=11 // pred_fallthru
        _
      // Predicated region
      $region17: #{spike_driven_transformer.22} parent=11 // pred_check
        %p135 = pneg %p89
      $region18: #{spike_driven_transformer.22} parent=11 // pred_check_branch
        %137 = sbr.rel (%p135) target = $region20
      $region19: #{spike_driven_transformer.22} parent=11 // pred_region
        _
      $region20: #{spike_driven_transformer.22} parent=11 // pred_fallthru
        _
    $region12: #{spike_driven_transformer.22} parent=5 // pred_fallthru
      _
    %p138 = scmp.lt.s32.totalorder %s9, 4
    // Predicated region
    $region21: #{spike_driven_transformer.22} parent=5 // pred_check
      %p139 = pneg %p138
    $region22: #{spike_driven_transformer.22} parent=5 // pred_check_branch
      %141 = sbr.rel (%p139) target = $region24
    $region23: #{spike_driven_transformer.22} parent=5 // pred_region
      // Predicated region
      $region25: #{spike_driven_transformer.22} parent=23 // pred_check
        %p142 = pneg %p41
      $region26: #{spike_driven_transformer.22} parent=23 // pred_check_branch
        %144 = sbr.rel (%p142) target = $region28
      $region27: #{spike_driven_transformer.22} parent=23 // pred_region
        %s145 = smul.u32 4, %s16
        %p146 = scmp.lt.s32.totalorder %s145, 7
        %s147 = scalar_select %p146, %s145, 7
        %s148 = smul.addr %s147, 4
        %s149 = scalar_lea.vmem %s0, %s148
        %s150 = smul.u32 4, %s16
      $region28: #{spike_driven_transformer.22} parent=23 // pred_fallthru
        _
    $region24: #{spike_driven_transformer.22} parent=5 // pred_fallthru
      _
    %p151 = scmp.le.s32.totalorder 1, %s9
    %p152 = scmp.lt.s32.totalorder %s9, 5
    %p153 = pnand %p151, %p152
    %p154 = pneg %p153
    // Predicated region
    $region29: #{spike_driven_transformer.22} parent=5 // pred_check
      _
    $region30: #{spike_driven_transformer.22} parent=5 // pred_check_branch
      %156 = sbr.rel (%p153) target = $region32
    $region31: #{spike_driven_transformer.22} parent=5 // pred_region
      %s157 = ssub.s32 %s9, 1
      %s158 = smul.u32 4, %s18
      %p159 = scmp.lt.s32.totalorder %s158, 7
      %s160 = scalar_select %p159, %s158, 7
      %s161 = smul.addr %s160, 4
      %s162 = scalar_lea.vmem %s0, %s161
      %p163 = pneg %p47
      %p164 = pneg %p44
      %p165 = pneg %p68
      %p166 = pneg %p65
      %p167 = pneg %p89
      %p168 = pneg %p86
      %p169 = pneg %p117
      %p170 = pneg %p114
      %s171 = smul.u32 4, %s18
      %p172 = scmp.lt.s32.totalorder %s19, 1
      %s173 = scalar_select %p172, %s19, 1
      %p174 = scmp.lt.s32.totalorder %s171, 7
      %s175 = scalar_select %p174, %s171, 7
      %s176 = smul.addr %s173, 8
      %s177 = sadd.s32 %s175, %s176
      %s178 = smul.addr %s177, 4
      %s179 = scalar_lea.vmem %s3, %s178
      %s180 = smul.u32 4, %s18
      %p181 = scmp.lt.s32.totalorder %s180, 7
      %s182 = scalar_select %p181, %s180, 7
      %s183 = smul.addr %s182, 4
      %s184 = scalar_lea.vmem %s0, %s183
      %s185 = smul.u32 4, %s18
      %s186 = smul.u32 4, %s18
      %p187 = scmp.lt.s32.totalorder %s19, 1
      %s188 = scalar_select %p187, %s19, 1
      %p189 = scmp.lt.s32.totalorder %s186, 7
      %s190 = scalar_select %p189, %s186, 7
      %s191 = smul.addr %s188, 8
      %s192 = sadd.s32 %s190, %s191
      %s193 = smul.addr %s192, 4
      %s194 = scalar_lea.vmem %s3, %s193
      %s195 = smul.u32 4, %s18
      %p196 = scmp.eq.s32.totalorder %s19, 0
      // Predicated region
      $region33: #{spike_driven_transformer.22} parent=31 // pred_check
        %p197 = pneg %p196
      $region34: #{spike_driven_transformer.22} parent=31 // pred_check_branch
        %199 = sbr.rel (%p197) target = $region36
      $region35: #{spike_driven_transformer.22} parent=31 // pred_region
        %200 = vst [vmem:[#allocation2] sm:$0xff] 0.0
        %201 = vst [vmem:[#allocation2 + $0x8] sm:$0xff] 0.0
        %202 = vst [vmem:[#allocation2 + $0x10] sm:$0xff] 0.0
        %203 = vst [vmem:[#allocation2 + $0x18] sm:$0xff] 0.0
      $region36: #{spike_driven_transformer.22} parent=31 // pred_fallthru
        _
      %v204 = vld [vmem:[%s184] sm:$0xf]
      %v205 = vld [vmem:[%s184 + $0x4] sm:$0xf]
      %v206 = vld [vmem:[%s184 + $0x8] sm:$0xf]
      %v207 = vld [vmem:[%s184 + $0xc] sm:$0xf]
      %v208 = vunpack.c.l.bf16 %v204
      %v209 = vunpack.c.l.bf16 %v205
      %v210 = vunpack.c.l.bf16 %v206
      %v211 = vunpack.c.l.bf16 %v207
      %v212 = vld [vmem:[%s1] sm:$0x1]
      %v214 = vperm.slane %v212, 0
      %v216 = vmul.f32 %v208, %v214
      %v217 = vmul.f32 %v209, %v214
      %v218 = vmul.f32 %v210, %v214
      %v219 = vmul.f32 %v211, %v214
      %v220 = vld [vmem:[%s2] sm:$0x1]
      %v222 = vperm.slane %v220, 0
      %v224 = vadd.f32 %v216, %v222
      %v225 = vadd.f32 %v217, %v222
      %v226 = vadd.f32 %v218, %v222
      %v227 = vadd.f32 %v219, %v222
      %v228 = vld [vmem:[#allocation2] sm:$0xff]
      %v229 = vld [vmem:[#allocation2 + $0x8] sm:$0xff]
      %v230 = vld [vmem:[#allocation2 + $0x10] sm:$0xff]
      %v231 = vld [vmem:[#allocation2 + $0x18] sm:$0xff]
      %v232 = vsub.f32 %v224, %v228
      %v233 = vsub.f32 %v225, %v229
      %v234 = vsub.f32 %v226, %v230
      %v235 = vsub.f32 %v227, %v231
      %v236 = vmul.f32 %v232, 0.5
      %v237 = vmul.f32 %v233, 0.5
      %v238 = vmul.f32 %v234, 0.5
      %v239 = vmul.f32 %v235, 0.5
      %v240 = vadd.f32 %v228, %v236
      %v241 = vadd.f32 %v229, %v237
      %v242 = vadd.f32 %v230, %v238
      %v243 = vadd.f32 %v231, %v239
      %vm244 = vcmp.ge.f32.partialorder %v240, 1.0
      %vm245 = vcmp.ge.f32.partialorder %v241, 1.0
      %vm246 = vcmp.ge.f32.partialorder %v242, 1.0
      %vm247 = vcmp.ge.f32.partialorder %v243, 1.0
      %v248 = vsel %vm244, 1, 0
      %v249 = vsel %vm245, 1, 0
      %v250 = vsel %vm246, 1, 0
      %v251 = vsel %vm247, 1, 0
      %v252 = vcvt.s32.f32 %v248
      %v253 = vcvt.s32.f32 %v249
      %v254 = vcvt.s32.f32 %v250
      %v255 = vcvt.s32.f32 %v251
      %v256 = vpack.c.bf16 %v252, %v252
      %v257 = vpack.c.bf16 %v253, %v253
      %v258 = vpack.c.bf16 %v254, %v254
      %v259 = vpack.c.bf16 %v255, %v255
      %260 = vst [vmem:[%s194] sm:$0xf] %v256
      %261 = vst [vmem:[%s194 + $0x4] sm:$0xf] %v257
      %262 = vst [vmem:[%s194 + $0x8] sm:$0xf] %v258
      %263 = vst [vmem:[%s194 + $0xc] sm:$0xf] %v259
      %v264 = vsel %vm244, 0.0, %v240
      %v265 = vsel %vm245, 0.0, %v241
      %v266 = vsel %vm246, 0.0, %v242
      %v267 = vsel %vm247, 0.0, %v243
      %268 = vst [vmem:[#allocation2] sm:$0xff] %v264
      %269 = vst [vmem:[#allocation2 + $0x8] sm:$0xff] %v265
      %270 = vst [vmem:[#allocation2 + $0x10] sm:$0xff] %v266
      %271 = vst [vmem:[#allocation2 + $0x18] sm:$0xff] %v267
      %s272 = smul.u32 4, %s18
      %p273 = scmp.lt.s32.totalorder %s19, 1
      %s274 = scalar_select %p273, %s19, 1
      %p275 = scmp.lt.s32.totalorder %s272, 7
      %s276 = scalar_select %p275, %s272, 7
      %s277 = smul.addr %s274, 8
      %s278 = sadd.s32 %s276, %s277
      %s279 = smul.addr %s278, 4
      %s280 = scalar_lea.vmem %s3, %s279
      // Predicated region
      $region37: #{spike_driven_transformer.22} parent=31 // pred_check
        %p281 = pneg %p114
      $region38: #{spike_driven_transformer.22} parent=31 // pred_check_branch
        %283 = sbr.rel (%p281) target = $region40
      $region39: #{spike_driven_transformer.22} parent=31 // pred_region
        %s284 = smul.u32 4, %s18
      $region40: #{spike_driven_transformer.22} parent=31 // pred_fallthru
        _
    $region32: #{spike_driven_transformer.22} parent=5 // pred_fallthru
      _
    %p285 = scmp.le.s32.totalorder 2, %s9
    // Predicated region
    $region41: #{spike_driven_transformer.22} parent=5 // pred_check
      %p286 = pneg %p285
    $region42: #{spike_driven_transformer.22} parent=5 // pred_check_branch
      %288 = sbr.rel (%p286) target = $region44
    $region43: #{spike_driven_transformer.22} parent=5 // pred_region
      %s289 = ssub.s32 %s9, 2
      // Predicated region
      $region45: #{spike_driven_transformer.22} parent=43 // pred_check
        %p290 = pneg %p120
      $region46: #{spike_driven_transformer.22} parent=43 // pred_check_branch
        %292 = sbr.rel (%p290) target = $region48
      $region47: #{spike_driven_transformer.22} parent=43 // pred_region
        %s293 = smul.u32 4, %s20
        %p294 = scmp.lt.s32.totalorder %s21, 1
        %s295 = scalar_select %p294, %s21, 1
        %p296 = scmp.lt.s32.totalorder %s293, 7
        %s297 = scalar_select %p296, %s293, 7
        %s298 = smul.addr %s295, 8
        %s299 = sadd.s32 %s297, %s298
        %s300 = smul.addr %s299, 4
        %s301 = scalar_lea.vmem %s3, %s300
      $region48: #{spike_driven_transformer.22} parent=43 // pred_fallthru
        _
    $region44: #{spike_driven_transformer.22} parent=5 // pred_fallthru
      _
  $region6: #{spike_driven_transformer.22} parent=0 // loop_footer
    %s13 = sadd.s32 1, %s9
  $region7: #{spike_driven_transformer.22} parent=0 // loop_footer_branch
    %8 = sbr.rel target = $region3
  $region8: #{spike_driven_transformer.22} parent=0 // loop_exit
    _

// kernel: tile.77
$region0: #{tile.77}
  #allocation0 [shape = 's32[1]{0}', space=sflag, size = 0x4, scoped, tag = 'scoped memory for tile.77']
  %s0 = inlined_call_operand.vmem [shape: f32[8], index: 0, kind: input, shape index: {}]
  %s1 = inlined_call_operand.vmem [shape: f32[16,8], index: 1, kind: output, shape index: {}]
  // Predicated region
  $region2: #{tile.77} parent=0 // pred_check
    _
  $region3: #{tile.77} parent=0 // pred_check_branch
    %3 = sbr.rel (0) target = $region5
  $region4: #{tile.77} parent=0 // pred_region
    _
  $region5: #{tile.77} parent=0 // pred_fallthru
    _
  %v4 = vld [vmem:[%s0] ss:$0 sm:$0xff]
  %5 = vst [vmem:[%s1] sm:$0xff] %v4
  %s6 = scalar_lea.vmem %s1, 8
  %7 = vst [vmem:[%s6] sm:$0xff] %v4

// kernel: tile.78
$region0: #{tile.78}
  %s0 = inlined_call_operand.vmem [shape: f32[16,8], index: 0, kind: input, shape index: {}]
  %s1 = inlined_call_operand.vmem [shape: f32[1,128], index: 1, kind: output, shape index: {}]
  $region1: #{tile.78} parent=0
    #allocation0 [shape = 'u8[4096]{0}', space=vmem, size = 0x1000, scoped, tag = 'scoped mem for output reshape']
    %v2 = vld [vmem:[%s0] sm:$0x1]
    %vm3 = vcmask 64512
    %4 = vst.msk [vmem:[#allocation0] sm:$0x1] %vm3, %v2
    %s5 = scalar_lea.vmem %s0, 15
    %v6 = vld [vmem:[%s5] sm:$0x1]
    %7 = vrot.lane.b32.xlu0 %v6, 120
    %v8 = vpop.permute.xlu0 %7
    %vm9 = vcmask 1048512
    %10 = vst.msk [vmem:[#allocation0] sm:$0x1] %vm9, %v8
    %s11 = scalar_lea.vmem %s0, 14
    %v12 = vld [vmem:[%s11] sm:$0x1]
    %13 = vrot.lane.b32.xlu0 %v12, 112
    %v14 = vpop.permute.xlu0 %13
    %vm15 = vcmask 982912
    %16 = vst.msk [vmem:[#allocation0] sm:$0x1] %vm15, %v14
    %s17 = scalar_lea.vmem %s0, 13
    %v18 = vld [vmem:[%s17] sm:$0x1]
    %19 = vrot.lane.b32.xlu0 %v18, 104
    %v20 = vpop.permute.xlu0 %19
    %vm21 = vcmask 917312
    %22 = vst.msk [vmem:[#allocation0] sm:$0x1] %vm21, %v20
    %s23 = scalar_lea.vmem %s0, 12
    %v24 = vld [vmem:[%s23] sm:$0x1]
    %25 = vrot.lane.b32.xlu0 %v24, 96
    %v26 = vpop.permute.xlu0 %25
    %vm27 = vcmask 851712
    %28 = vst.msk [vmem:[#allocation0] sm:$0x1] %vm27, %v26
    %s29 = scalar_lea.vmem %s0, 11
    %v30 = vld [vmem:[%s29] sm:$0x1]
    %31 = vrot.lane.b32.xlu0 %v30, 88
    %v32 = vpop.permute.xlu0 %31
    %vm33 = vcmask 786112
    %34 = vst.msk [vmem:[#allocation0] sm:$0x1] %vm33, %v32
    %s35 = scalar_lea.vmem %s0, 10
    %v36 = vld [vmem:[%s35] sm:$0x1]
    %37 = vrot.lane.b32.xlu0 %v36, 80
    %v38 = vpop.permute.xlu0 %37
    %vm39 = vcmask 720512
    %40 = vst.msk [vmem:[#allocation0] sm:$0x1] %vm39, %v38
    %s41 = scalar_lea.vmem %s0, 9
    %v42 = vld [vmem:[%s41] sm:$0x1]
    %43 = vrot.lane.b32.xlu0 %v42, 72
    %v44 = vpop.permute.xlu0 %43
    %vm45 = vcmask 654912
    %46 = vst.msk [vmem:[#allocation0] sm:$0x1] %vm45, %v44
    %s47 = scalar_lea.vmem %s0, 8
    %v48 = vld [vmem:[%s47] sm:$0x1]
    %49 = vrot.lane.b32.xlu0 %v48, 64
    %v50 = vpop.permute.xlu0 %49
    %vm51 = vcmask 589312
    %52 = vst.msk [vmem:[#allocation0] sm:$0x1] %vm51, %v50
    %s53 = scalar_lea.vmem %s0, 7
    %v54 = vld [vmem:[%s53] sm:$0x1]
    %55 = vrot.lane.b32.xlu0 %v54, 56
    %v56 = vpop.permute.xlu0 %55
    %vm57 = vcmask 523712
    %58 = vst.msk [vmem:[#allocation0] sm:$0x1] %vm57, %v56
    %s59 = scalar_lea.vmem %s0, 6
    %v60 = vld [vmem:[%s59] sm:$0x1]
    %61 = vrot.lane.b32.xlu0 %v60, 48
    %v62 = vpop.permute.xlu0 %61
    %vm63 = vcmask 458112
    %64 = vst.msk [vmem:[#allocation0] sm:$0x1] %vm63, %v62
    %s65 = scalar_lea.vmem %s0, 5
    %v66 = vld [vmem:[%s65] sm:$0x1]
    %67 = vrot.lane.b32.xlu0 %v66, 40
    %v68 = vpop.permute.xlu0 %67
    %vm69 = vcmask 392512
    %70 = vst.msk [vmem:[#allocation0] sm:$0x1] %vm69, %v68
    %s71 = scalar_lea.vmem %s0, 4
    %v72 = vld [vmem:[%s71] sm:$0x1]
    %73 = vrot.lane.b32.xlu0 %v72, 32
    %v74 = vpop.permute.xlu0 %73
    %vm75 = vcmask 326912
    %76 = vst.msk [vmem:[#allocation0] sm:$0x1] %vm75, %v74
    %s77 = scalar_lea.vmem %s0, 3
    %v78 = vld [vmem:[%s77] sm:$0x1]
    %79 = vrot.lane.b32.xlu0 %v78, 24
    %v80 = vpop.permute.xlu0 %79
    %vm81 = vcmask 261312
    %82 = vst.msk [vmem:[#allocation0] sm:$0x1] %vm81, %v80
    %s83 = scalar_lea.vmem %s0, 2
    %v84 = vld [vmem:[%s83] sm:$0x1]
    %85 = vrot.lane.b32.xlu0 %v84, 16
    %v86 = vpop.permute.xlu0 %85
    %vm87 = vcmask 195712
    %88 = vst.msk [vmem:[#allocation0] sm:$0x1] %vm87, %v86
    %s89 = scalar_lea.vmem %s0, 1
    %v90 = vld [vmem:[%s89] sm:$0x1]
    %91 = vrot.lane.b32.xlu0 %v90, 8
    %v92 = vpop.permute.xlu0 %91
    %vm93 = vcmask 130112
    %94 = vst.msk [vmem:[#allocation0] sm:$0x1] %vm93, %v92
    %s96 = ssub.s32 2, 1
    %v97 = vld [vmem:[#allocation0] sm:%s96]
    %s99 = ssub.s32 2, 1
    %100 = vst [vmem:[%s1] sm:%s99] %v97

// kernel: spike_driven_transformer.23
$region0: #{spike_driven_transformer.23}
  #allocation0 [shape = 'u32[]', space=smem, size = 0x4, offset = 0x4, fixed_abs, tag = 'smem constant byte address 0x4 - core index']
  #allocation1 [shape = 'u32[72,128]{1,0:T(1,128)}', space=vmem, size = 0x9000, scoped, tag = 'internal scratch']
  #allocation2 [shape = 'f32[16,128]{1,0:T(8,128)}', space=vmem, size = 0x2000, scoped, tag = 'scratch operand']
  %s0 = inlined_call_operand.vmem [shape: bf16[2,32,128], index: 0, kind: input, shape index: {}]
  %s1 = inlined_call_operand.vmem [shape: f32[1,128], index: 1, kind: input, shape index: {}]
  %s2 = inlined_call_operand.vmem [shape: f32[1,128], index: 2, kind: input, shape index: {}]
  %s3 = inlined_call_operand.vmem [shape: bf16[2,32,128], index: 3, kind: output, shape index: {}]
  %s4 = sld [smem:[#allocation0]]
  $region49: #{spike_driven_transformer.23} parent=0
    _
  %s6 = ssub.s32 1, %s4
  %s7 = scalar_select 0, %s6, %s4
  loop: start=0, step=1, limit=6
  $region2: #{spike_driven_transformer.23} parent=0 // loop_pre_header
    _
  $region3: #{spike_driven_transformer.23} parent=0 // loop_header
    %s9 = sphi 0, %s13
    %p10 = scmp.ge.s32.totalorder %s9, 6
    %s16 = sphi 0, %s28
    %s17 = sphi 0, %s24
    %s18 = sphi 0, %s16
    %s19 = sphi 0, %s17
    %s20 = sphi 0, %s18
    %s21 = sphi 0, %s19
    %s33 = sphi 0, %s35
    %s36 = sphi 0, %s33
    %s37 = sphi 0, %s36
    %s53 = sphi 0, %s37
    %s57 = sphi 0, %s57
    %s59 = sphi 0, %s57
    %s60 = sphi 0, %s59
    %s74 = sphi 0, %s60
    %s78 = sphi 0, %s78
    %s80 = sphi 0, %s78
    %s81 = sphi 0, %s80
    %s95 = sphi 0, %s81
    %s103 = sphi 0, %s105
    %s106 = sphi 0, %s103
    %s107 = sphi 0, %s106
    %s123 = sphi 0, %s107
  $region4: #{spike_driven_transformer.23} parent=0 // loop_header_branch
    %12 = sbr.rel (%p10) target = $region8
  $region5: #{spike_driven_transformer.23} parent=0 // loop_body
    %s14 = ssub.s32 %s9, 1
    %s15 = ssub.s32 %s9, 2
    %s22 = sadd.s32 1, %s17
    %p23 = scmp.ge.s32.totalorder %s22, 2
    %s24 = scalar_select %p23, 0, %s22
    %s25 = sadd.s32 1, %s16
    %s26 = scalar_select %p23, %s25, %s16
    %p27 = scmp.ge.s32.totalorder %s26, 2
    %s28 = scalar_select %p27, 0, %s26
    %s29 = ssub.s32 %s17, %s24
    %s30 = ssub.s32 %s16, %s28
    %s31 = sor.u32 %s29, %s30
    %p32 = scmp.eq.s32.totalorder %s31, 0
    %s34 = sadd.s32 %s33, 1
    %s35 = scalar_select %p32, %s33, %s34
    %p38 = pneg %p32
    %p39 = scmp.eq.s32.totalorder %s9, 3
    %p40 = por %p38, %p39
    %p41 = scmp.ne.s32.totalorder %s33, %s36
    %p42 = scmp.eq.s32.totalorder %s9, 0
    %p43 = por %p41, %p42
    %p44 = scmp.ne.s32.totalorder %s33, %s36
    %p45 = scmp.eq.s32.totalorder %s14, 3
    %p46 = por %p44, %p45
    %p47 = scmp.ne.s32.totalorder %s36, %s37
    %p48 = scmp.eq.s32.totalorder %s14, 0
    %p49 = por %p47, %p48
    %p50 = scmp.ne.s32.totalorder %s36, %s37
    %p51 = scmp.eq.s32.totalorder %s15, 3
    %p52 = por %p50, %p51
    %p54 = scmp.ne.s32.totalorder %s37, %s53
    %p55 = scmp.eq.s32.totalorder %s15, 0
    %p56 = por %p54, %p55
    %s58 = sadd.s32 %s57, 1
    %p61 = scmp.eq.s32.totalorder %s9, 3
    %p62 = scmp.ne.s32.totalorder %s57, %s59
    %p63 = scmp.eq.s32.totalorder %s9, 0
    %p64 = por %p62, %p63
    %p65 = scmp.ne.s32.totalorder %s57, %s59
    %p66 = scmp.eq.s32.totalorder %s14, 3
    %p67 = por %p65, %p66
    %p68 = scmp.ne.s32.totalorder %s59, %s60
    %p69 = scmp.eq.s32.totalorder %s14, 0
    %p70 = por %p68, %p69
    %p71 = scmp.ne.s32.totalorder %s59, %s60
    %p72 = scmp.eq.s32.totalorder %s15, 3
    %p73 = por %p71, %p72
    %p75 = scmp.ne.s32.totalorder %s60, %s74
    %p76 = scmp.eq.s32.totalorder %s15, 0
    %p77 = por %p75, %p76
    %s79 = sadd.s32 %s78, 1
    %p82 = scmp.eq.s32.totalorder %s9, 3
    %p83 = scmp.ne.s32.totalorder %s78, %s80
    %p84 = scmp.eq.s32.totalorder %s9, 0
    %p85 = por %p83, %p84
    %p86 = scmp.ne.s32.totalorder %s78, %s80
    %p87 = scmp.eq.s32.totalorder %s14, 3
    %p88 = por %p86, %p87
    %p89 = scmp.ne.s32.totalorder %s80, %s81
    %p90 = scmp.eq.s32.totalorder %s14, 0
    %p91 = por %p89, %p90
    %p92 = scmp.ne.s32.totalorder %s80, %s81
    %p93 = scmp.eq.s32.totalorder %s15, 3
    %p94 = por %p92, %p93
    %p96 = scmp.ne.s32.totalorder %s81, %s95
    %p97 = scmp.eq.s32.totalorder %s15, 0
    %p98 = por %p96, %p97
    %s99 = ssub.s32 %s17, %s24
    %s100 = ssub.s32 %s16, %s28
    %s101 = sor.u32 %s99, %s100
    %p102 = scmp.eq.s32.totalorder %s101, 0
    %s104 = sadd.s32 %s103, 1
    %s105 = scalar_select %p102, %s103, %s104
    %p108 = pneg %p102
    %p109 = scmp.eq.s32.totalorder %s9, 3
    %p110 = por %p108, %p109
    %p111 = scmp.ne.s32.totalorder %s103, %s106
    %p112 = scmp.eq.s32.totalorder %s9, 0
    %p113 = por %p111, %p112
    %p114 = scmp.ne.s32.totalorder %s103, %s106
    %p115 = scmp.eq.s32.totalorder %s14, 3
    %p116 = por %p114, %p115
    %p117 = scmp.ne.s32.totalorder %s106, %s107
    %p118 = scmp.eq.s32.totalorder %s14, 0
    %p119 = por %p117, %p118
    %p120 = scmp.ne.s32.totalorder %s106, %s107
    %p121 = scmp.eq.s32.totalorder %s15, 3
    %p122 = por %p120, %p121
    %p124 = scmp.ne.s32.totalorder %s107, %s123
    %p125 = scmp.eq.s32.totalorder %s15, 0
    %p126 = por %p124, %p125
    %p127 = scmp.le.s32.totalorder 1, %s9
    %p128 = scmp.lt.s32.totalorder %s9, 5
    %p129 = pnand %p127, %p128
    %p130 = pneg %p129
    // Predicated region
    $region9: #{spike_driven_transformer.23} parent=5 // pred_check
      _
    $region10: #{spike_driven_transformer.23} parent=5 // pred_check_branch
      %132 = sbr.rel (%p129) target = $region12
    $region11: #{spike_driven_transformer.23} parent=5 // pred_region
      %s133 = ssub.s32 %s9, 1
      // Predicated region
      $region13: #{spike_driven_transformer.23} parent=11 // pred_check
        %p134 = pneg %p70
      $region14: #{spike_driven_transformer.23} parent=11 // pred_check_branch
        %136 = sbr.rel (%p134) target = $region16
      $region15: #{spike_driven_transformer.23} parent=11 // pred_region
        _
      $region16: #{spike_driven_transformer.23} parent=11 // pred_fallthru
        _
      // Predicated region
      $region17: #{spike_driven_transformer.23} parent=11 // pred_check
        %p137 = pneg %p91
      $region18: #{spike_driven_transformer.23} parent=11 // pred_check_branch
        %139 = sbr.rel (%p137) target = $region20
      $region19: #{spike_driven_transformer.23} parent=11 // pred_region
        _
      $region20: #{spike_driven_transformer.23} parent=11 // pred_fallthru
        _
    $region12: #{spike_driven_transformer.23} parent=5 // pred_fallthru
      _
    %p140 = scmp.lt.s32.totalorder %s9, 4
    // Predicated region
    $region21: #{spike_driven_transformer.23} parent=5 // pred_check
      %p141 = pneg %p140
    $region22: #{spike_driven_transformer.23} parent=5 // pred_check_branch
      %143 = sbr.rel (%p141) target = $region24
    $region23: #{spike_driven_transformer.23} parent=5 // pred_region
      // Predicated region
      $region25: #{spike_driven_transformer.23} parent=23 // pred_check
        %p144 = pneg %p43
      $region26: #{spike_driven_transformer.23} parent=23 // pred_check_branch
        %146 = sbr.rel (%p144) target = $region28
      $region27: #{spike_driven_transformer.23} parent=23 // pred_region
        %s147 = smul.u32 2, %s16
        %p148 = scmp.lt.s32.totalorder %s17, 1
        %s149 = scalar_select %p148, %s17, 1
        %p150 = scmp.lt.s32.totalorder %s147, 3
        %s151 = scalar_select %p150, %s147, 3
        %s152 = smul.addr %s149, 4
        %s153 = sadd.s32 %s151, %s152
        %s154 = smul.addr %s153, 4
        %s155 = scalar_lea.vmem %s0, %s154
        %s156 = smul.u32 2, %s16
      $region28: #{spike_driven_transformer.23} parent=23 // pred_fallthru
        _
    $region24: #{spike_driven_transformer.23} parent=5 // pred_fallthru
      _
    %p157 = scmp.le.s32.totalorder 1, %s9
    %p158 = scmp.lt.s32.totalorder %s9, 5
    %p159 = pnand %p157, %p158
    %p160 = pneg %p159
    // Predicated region
    $region29: #{spike_driven_transformer.23} parent=5 // pred_check
      _
    $region30: #{spike_driven_transformer.23} parent=5 // pred_check_branch
      %162 = sbr.rel (%p159) target = $region32
    $region31: #{spike_driven_transformer.23} parent=5 // pred_region
      %s163 = ssub.s32 %s9, 1
      %s164 = smul.u32 2, %s18
      %p165 = scmp.lt.s32.totalorder %s19, 1
      %s166 = scalar_select %p165, %s19, 1
      %p167 = scmp.lt.s32.totalorder %s164, 3
      %s168 = scalar_select %p167, %s164, 3
      %s169 = smul.addr %s166, 4
      %s170 = sadd.s32 %s168, %s169
      %s171 = smul.addr %s170, 4
      %s172 = scalar_lea.vmem %s0, %s171
      %p173 = pneg %p49
      %p174 = pneg %p46
      %p175 = pneg %p70
      %p176 = pneg %p67
      %p177 = pneg %p91
      %p178 = pneg %p88
      %p179 = pneg %p119
      %p180 = pneg %p116
      %s181 = smul.u32 2, %s18
      %p182 = scmp.lt.s32.totalorder %s19, 1
      %s183 = scalar_select %p182, %s19, 1
      %p184 = scmp.lt.s32.totalorder %s181, 3
      %s185 = scalar_select %p184, %s181, 3
      %s186 = smul.addr %s183, 4
      %s187 = sadd.s32 %s185, %s186
      %s188 = smul.addr %s187, 4
      %s189 = scalar_lea.vmem %s3, %s188
      %s190 = smul.u32 2, %s18
      %p191 = scmp.lt.s32.totalorder %s19, 1
      %s192 = scalar_select %p191, %s19, 1
      %p193 = scmp.lt.s32.totalorder %s190, 3
      %s194 = scalar_select %p193, %s190, 3
      %s195 = smul.addr %s192, 4
      %s196 = sadd.s32 %s194, %s195
      %s197 = smul.addr %s196, 4
      %s198 = scalar_lea.vmem %s0, %s197
      %s199 = smul.u32 2, %s18
      %s200 = smul.u32 2, %s18
      %p201 = scmp.lt.s32.totalorder %s19, 1
      %s202 = scalar_select %p201, %s19, 1
      %p203 = scmp.lt.s32.totalorder %s200, 3
      %s204 = scalar_select %p203, %s200, 3
      %s205 = smul.addr %s202, 4
      %s206 = sadd.s32 %s204, %s205
      %s207 = smul.addr %s206, 4
      %s208 = scalar_lea.vmem %s3, %s207
      %s209 = smul.u32 2, %s18
      %p210 = scmp.eq.s32.totalorder %s19, 0
      // Predicated region
      $region33: #{spike_driven_transformer.23} parent=31 // pred_check
        %p211 = pneg %p210
      $region34: #{spike_driven_transformer.23} parent=31 // pred_check_branch
        %213 = sbr.rel (%p211) target = $region36
      $region35: #{spike_driven_transformer.23} parent=31 // pred_region
        %214 = vst [vmem:[#allocation2] sm:$0xff] 0.0
        %215 = vst [vmem:[#allocation2 + $0x8] sm:$0xff] 0.0
      $region36: #{spike_driven_transformer.23} parent=31 // pred_fallthru
        _
      %v216 = vld [vmem:[%s198] sm:$0xf]
      %v217 = vld [vmem:[%s198 + $0x4] sm:$0xf]
      %v218 = vunpack.c.l.bf16 %v216
      %v219 = vunpack.c.l.bf16 %v217
      %v220 = vld [vmem:[%s1] sm:$0x1]
      %v222 = vperm.slane %v220, 0
      %v224 = vmul.f32 %v218, %v222
      %v225 = vmul.f32 %v219, %v222
      %v226 = vld [vmem:[%s2] sm:$0x1]
      %v228 = vperm.slane %v226, 0
      %v230 = vadd.f32 %v224, %v228
      %v231 = vadd.f32 %v225, %v228
      %v232 = vld [vmem:[#allocation2] sm:$0xff]
      %v233 = vld [vmem:[#allocation2 + $0x8] sm:$0xff]
      %v234 = vsub.f32 %v230, %v232
      %v235 = vsub.f32 %v231, %v233
      %v236 = vmul.f32 %v234, 0.5
      %v237 = vmul.f32 %v235, 0.5
      %v238 = vadd.f32 %v232, %v236
      %v239 = vadd.f32 %v233, %v237
      %vm240 = vcmp.ge.f32.partialorder %v238, 1.0
      %vm241 = vcmp.ge.f32.partialorder %v239, 1.0
      %v242 = vsel %vm240, 1, 0
      %v243 = vsel %vm241, 1, 0
      %v244 = vcvt.s32.f32 %v242
      %v245 = vcvt.s32.f32 %v243
      %v246 = vpack.c.bf16 %v244, %v244
      %v247 = vpack.c.bf16 %v245, %v245
      %248 = vst [vmem:[%s208] sm:$0xf] %v246
      %249 = vst [vmem:[%s208 + $0x4] sm:$0xf] %v247
      %v250 = vsel %vm240, 0.0, %v238
      %v251 = vsel %vm241, 0.0, %v239
      %252 = vst [vmem:[#allocation2] sm:$0xff] %v250
      %253 = vst [vmem:[#allocation2 + $0x8] sm:$0xff] %v251
      %s254 = smul.u32 2, %s18
      %p255 = scmp.lt.s32.totalorder %s19, 1
      %s256 = scalar_select %p255, %s19, 1
      %p257 = scmp.lt.s32.totalorder %s254, 3
      %s258 = scalar_select %p257, %s254, 3
      %s259 = smul.addr %s256, 4
      %s260 = sadd.s32 %s258, %s259
      %s261 = smul.addr %s260, 4
      %s262 = scalar_lea.vmem %s3, %s261
      // Predicated region
      $region37: #{spike_driven_transformer.23} parent=31 // pred_check
        %p263 = pneg %p116
      $region38: #{spike_driven_transformer.23} parent=31 // pred_check_branch
        %265 = sbr.rel (%p263) target = $region40
      $region39: #{spike_driven_transformer.23} parent=31 // pred_region
        %s266 = smul.u32 2, %s18
      $region40: #{spike_driven_transformer.23} parent=31 // pred_fallthru
        _
    $region32: #{spike_driven_transformer.23} parent=5 // pred_fallthru
      _
    %p267 = scmp.le.s32.totalorder 2, %s9
    // Predicated region
    $region41: #{spike_driven_transformer.23} parent=5 // pred_check
      %p268 = pneg %p267
    $region42: #{spike_driven_transformer.23} parent=5 // pred_check_branch
      %270 = sbr.rel (%p268) target = $region44
    $region43: #{spike_driven_transformer.23} parent=5 // pred_region
      %s271 = ssub.s32 %s9, 2
      // Predicated region
      $region45: #{spike_driven_transformer.23} parent=43 // pred_check
        %p272 = pneg %p122
      $region46: #{spike_driven_transformer.23} parent=43 // pred_check_branch
        %274 = sbr.rel (%p272) target = $region48
      $region47: #{spike_driven_transformer.23} parent=43 // pred_region
        %s275 = smul.u32 2, %s20
        %p276 = scmp.lt.s32.totalorder %s21, 1
        %s277 = scalar_select %p276, %s21, 1
        %p278 = scmp.lt.s32.totalorder %s275, 3
        %s279 = scalar_select %p278, %s275, 3
        %s280 = smul.addr %s277, 4
        %s281 = sadd.s32 %s279, %s280
        %s282 = smul.addr %s281, 4
        %s283 = scalar_lea.vmem %s3, %s282
      $region48: #{spike_driven_transformer.23} parent=43 // pred_fallthru
        _
    $region44: #{spike_driven_transformer.23} parent=5 // pred_fallthru
      _
  $region6: #{spike_driven_transformer.23} parent=0 // loop_footer
    %s13 = sadd.s32 1, %s9
  $region7: #{spike_driven_transformer.23} parent=0 // loop_footer_branch
    %8 = sbr.rel target = $region3
  $region8: #{spike_driven_transformer.23} parent=0 // loop_exit
    _

// kernel: tile.87
$region0: #{tile.87}
  #allocation0 [shape = 's32[1]{0}', space=sflag, size = 0x4, scoped, tag = 'scoped memory for tile.87']
  %s0 = inlined_call_operand.vmem [shape: f32[16], index: 0, kind: input, shape index: {}]
  %s1 = inlined_call_operand.vmem [shape: f32[8,16], index: 1, kind: output, shape index: {}]
  // Predicated region
  $region2: #{tile.87} parent=0 // pred_check
    _
  $region3: #{tile.87} parent=0 // pred_check_branch
    %3 = sbr.rel (0) target = $region5
  $region4: #{tile.87} parent=0 // pred_region
    _
  $region5: #{tile.87} parent=0 // pred_fallthru
    _
  %v4 = vld [vmem:[%s0] ss:$0 sm:$0xff]
  %5 = vst [vmem:[%s1] sm:$0xff] %v4

// kernel: tile.88
$region0: #{tile.88}
  %s0 = inlined_call_operand.vmem [shape: f32[8,16], index: 0, kind: input, shape index: {}]
  %s1 = inlined_call_operand.vmem [shape: f32[1,128], index: 1, kind: output, shape index: {}]
  $region1: #{tile.88} parent=0
    #allocation0 [shape = 'u8[4096]{0}', space=vmem, size = 0x1000, scoped, tag = 'scoped mem for output reshape']
    %v2 = vld [vmem:[%s0] sm:$0x1]
    %vm3 = vcmask 130048
    %4 = vst.msk [vmem:[#allocation0] sm:$0x1] %vm3, %v2
    %s5 = scalar_lea.vmem %s0, 7
    %v6 = vld [vmem:[%s5] sm:$0x1]
    %7 = vrot.lane.b32.xlu0 %v6, 112
    %v8 = vpop.permute.xlu0 %7
    %vm9 = vcmask 1048448
    %10 = vst.msk [vmem:[#allocation0] sm:$0x1] %vm9, %v8
    %s11 = scalar_lea.vmem %s0, 6
    %v12 = vld [vmem:[%s11] sm:$0x1]
    %13 = vrot.lane.b32.xlu0 %v12, 96
    %v14 = vpop.permute.xlu0 %13
    %vm15 = vcmask 917248
    %16 = vst.msk [vmem:[#allocation0] sm:$0x1] %vm15, %v14
    %s17 = scalar_lea.vmem %s0, 5
    %v18 = vld [vmem:[%s17] sm:$0x1]
    %19 = vrot.lane.b32.xlu0 %v18, 80
    %v20 = vpop.permute.xlu0 %19
    %vm21 = vcmask 786048
    %22 = vst.msk [vmem:[#allocation0] sm:$0x1] %vm21, %v20
    %s23 = scalar_lea.vmem %s0, 4
    %v24 = vld [vmem:[%s23] sm:$0x1]
    %25 = vrot.lane.b32.xlu0 %v24, 64
    %v26 = vpop.permute.xlu0 %25
    %vm27 = vcmask 654848
    %28 = vst.msk [vmem:[#allocation0] sm:$0x1] %vm27, %v26
    %s29 = scalar_lea.vmem %s0, 3
    %v30 = vld [vmem:[%s29] sm:$0x1]
    %31 = vrot.lane.b32.xlu0 %v30, 48
    %v32 = vpop.permute.xlu0 %31
    %vm33 = vcmask 523648
    %34 = vst.msk [vmem:[#allocation0] sm:$0x1] %vm33, %v32
    %s35 = scalar_lea.vmem %s0, 2
    %v36 = vld [vmem:[%s35] sm:$0x1]
    %37 = vrot.lane.b32.xlu0 %v36, 32
    %v38 = vpop.permute.xlu0 %37
    %vm39 = vcmask 392448
    %40 = vst.msk [vmem:[#allocation0] sm:$0x1] %vm39, %v38
    %s41 = scalar_lea.vmem %s0, 1
    %v42 = vld [vmem:[%s41] sm:$0x1]
    %43 = vrot.lane.b32.xlu0 %v42, 16
    %v44 = vpop.permute.xlu0 %43
    %vm45 = vcmask 261248
    %46 = vst.msk [vmem:[#allocation0] sm:$0x1] %vm45, %v44
    %s48 = ssub.s32 2, 1
    %v49 = vld [vmem:[#allocation0] sm:%s48]
    %s51 = ssub.s32 2, 1
    %52 = vst [vmem:[%s1] sm:%s51] %v49

// kernel: spike_driven_transformer.24
$region0: #{spike_driven_transformer.24}
  #allocation0 [shape = 'u32[]', space=smem, size = 0x4, offset = 0x4, fixed_abs, tag = 'smem constant byte address 0x4 - core index']
  #allocation1 [shape = 'u32[72,128]{1,0:T(1,128)}', space=vmem, size = 0x9000, scoped, tag = 'internal scratch']
  #allocation2 [shape = 'f32[8,128]{1,0:T(8,128)}', space=vmem, size = 0x1000, scoped, tag = 'scratch operand']
  %s0 = inlined_call_operand.vmem [shape: bf16[2,16,128], index: 0, kind: input, shape index: {}]
  %s1 = inlined_call_operand.vmem [shape: f32[1,128], index: 1, kind: input, shape index: {}]
  %s2 = inlined_call_operand.vmem [shape: f32[1,128], index: 2, kind: input, shape index: {}]
  %s3 = inlined_call_operand.vmem [shape: bf16[2,16,128], index: 3, kind: output, shape index: {}]
  %s4 = sld [smem:[#allocation0]]
  $region49: #{spike_driven_transformer.24} parent=0
    _
  %s6 = ssub.s32 1, %s4
  %s7 = scalar_select 0, %s6, %s4
  loop: start=0, step=1, limit=6
  $region2: #{spike_driven_transformer.24} parent=0 // loop_pre_header
    _
  $region3: #{spike_driven_transformer.24} parent=0 // loop_header
    %s9 = sphi 0, %s13
    %p10 = scmp.ge.s32.totalorder %s9, 6
    %s16 = sphi 0, %s28
    %s17 = sphi 0, %s24
    %s18 = sphi 0, %s16
    %s19 = sphi 0, %s17
    %s20 = sphi 0, %s18
    %s21 = sphi 0, %s19
    %s33 = sphi 0, %s35
    %s36 = sphi 0, %s33
    %s37 = sphi 0, %s36
    %s53 = sphi 0, %s37
    %s57 = sphi 0, %s57
    %s59 = sphi 0, %s57
    %s60 = sphi 0, %s59
    %s74 = sphi 0, %s60
    %s78 = sphi 0, %s78
    %s80 = sphi 0, %s78
    %s81 = sphi 0, %s80
    %s95 = sphi 0, %s81
    %s103 = sphi 0, %s105
    %s106 = sphi 0, %s103
    %s107 = sphi 0, %s106
    %s123 = sphi 0, %s107
  $region4: #{spike_driven_transformer.24} parent=0 // loop_header_branch
    %12 = sbr.rel (%p10) target = $region8
  $region5: #{spike_driven_transformer.24} parent=0 // loop_body
    %s14 = ssub.s32 %s9, 1
    %s15 = ssub.s32 %s9, 2
    %s22 = sadd.s32 1, %s17
    %p23 = scmp.ge.s32.totalorder %s22, 2
    %s24 = scalar_select %p23, 0, %s22
    %s25 = sadd.s32 1, %s16
    %s26 = scalar_select %p23, %s25, %s16
    %p27 = scmp.ge.s32.totalorder %s26, 2
    %s28 = scalar_select %p27, 0, %s26
    %s29 = ssub.s32 %s17, %s24
    %s30 = ssub.s32 %s16, %s28
    %s31 = sor.u32 %s29, %s30
    %p32 = scmp.eq.s32.totalorder %s31, 0
    %s34 = sadd.s32 %s33, 1
    %s35 = scalar_select %p32, %s33, %s34
    %p38 = pneg %p32
    %p39 = scmp.eq.s32.totalorder %s9, 3
    %p40 = por %p38, %p39
    %p41 = scmp.ne.s32.totalorder %s33, %s36
    %p42 = scmp.eq.s32.totalorder %s9, 0
    %p43 = por %p41, %p42
    %p44 = scmp.ne.s32.totalorder %s33, %s36
    %p45 = scmp.eq.s32.totalorder %s14, 3
    %p46 = por %p44, %p45
    %p47 = scmp.ne.s32.totalorder %s36, %s37
    %p48 = scmp.eq.s32.totalorder %s14, 0
    %p49 = por %p47, %p48
    %p50 = scmp.ne.s32.totalorder %s36, %s37
    %p51 = scmp.eq.s32.totalorder %s15, 3
    %p52 = por %p50, %p51
    %p54 = scmp.ne.s32.totalorder %s37, %s53
    %p55 = scmp.eq.s32.totalorder %s15, 0
    %p56 = por %p54, %p55
    %s58 = sadd.s32 %s57, 1
    %p61 = scmp.eq.s32.totalorder %s9, 3
    %p62 = scmp.ne.s32.totalorder %s57, %s59
    %p63 = scmp.eq.s32.totalorder %s9, 0
    %p64 = por %p62, %p63
    %p65 = scmp.ne.s32.totalorder %s57, %s59
    %p66 = scmp.eq.s32.totalorder %s14, 3
    %p67 = por %p65, %p66
    %p68 = scmp.ne.s32.totalorder %s59, %s60
    %p69 = scmp.eq.s32.totalorder %s14, 0
    %p70 = por %p68, %p69
    %p71 = scmp.ne.s32.totalorder %s59, %s60
    %p72 = scmp.eq.s32.totalorder %s15, 3
    %p73 = por %p71, %p72
    %p75 = scmp.ne.s32.totalorder %s60, %s74
    %p76 = scmp.eq.s32.totalorder %s15, 0
    %p77 = por %p75, %p76
    %s79 = sadd.s32 %s78, 1
    %p82 = scmp.eq.s32.totalorder %s9, 3
    %p83 = scmp.ne.s32.totalorder %s78, %s80
    %p84 = scmp.eq.s32.totalorder %s9, 0
    %p85 = por %p83, %p84
    %p86 = scmp.ne.s32.totalorder %s78, %s80
    %p87 = scmp.eq.s32.totalorder %s14, 3
    %p88 = por %p86, %p87
    %p89 = scmp.ne.s32.totalorder %s80, %s81
    %p90 = scmp.eq.s32.totalorder %s14, 0
    %p91 = por %p89, %p90
    %p92 = scmp.ne.s32.totalorder %s80, %s81
    %p93 = scmp.eq.s32.totalorder %s15, 3
    %p94 = por %p92, %p93
    %p96 = scmp.ne.s32.totalorder %s81, %s95
    %p97 = scmp.eq.s32.totalorder %s15, 0
    %p98 = por %p96, %p97
    %s99 = ssub.s32 %s17, %s24
    %s100 = ssub.s32 %s16, %s28
    %s101 = sor.u32 %s99, %s100
    %p102 = scmp.eq.s32.totalorder %s101, 0
    %s104 = sadd.s32 %s103, 1
    %s105 = scalar_select %p102, %s103, %s104
    %p108 = pneg %p102
    %p109 = scmp.eq.s32.totalorder %s9, 3
    %p110 = por %p108, %p109
    %p111 = scmp.ne.s32.totalorder %s103, %s106
    %p112 = scmp.eq.s32.totalorder %s9, 0
    %p113 = por %p111, %p112
    %p114 = scmp.ne.s32.totalorder %s103, %s106
    %p115 = scmp.eq.s32.totalorder %s14, 3
    %p116 = por %p114, %p115
    %p117 = scmp.ne.s32.totalorder %s106, %s107
    %p118 = scmp.eq.s32.totalorder %s14, 0
    %p119 = por %p117, %p118
    %p120 = scmp.ne.s32.totalorder %s106, %s107
    %p121 = scmp.eq.s32.totalorder %s15, 3
    %p122 = por %p120, %p121
    %p124 = scmp.ne.s32.totalorder %s107, %s123
    %p125 = scmp.eq.s32.totalorder %s15, 0
    %p126 = por %p124, %p125
    %p127 = scmp.le.s32.totalorder 1, %s9
    %p128 = scmp.lt.s32.totalorder %s9, 5
    %p129 = pnand %p127, %p128
    %p130 = pneg %p129
    // Predicated region
    $region9: #{spike_driven_transformer.24} parent=5 // pred_check
      _
    $region10: #{spike_driven_transformer.24} parent=5 // pred_check_branch
      %132 = sbr.rel (%p129) target = $region12
    $region11: #{spike_driven_transformer.24} parent=5 // pred_region
      %s133 = ssub.s32 %s9, 1
      // Predicated region
      $region13: #{spike_driven_transformer.24} parent=11 // pred_check
        %p134 = pneg %p70
      $region14: #{spike_driven_transformer.24} parent=11 // pred_check_branch
        %136 = sbr.rel (%p134) target = $region16
      $region15: #{spike_driven_transformer.24} parent=11 // pred_region
        _
      $region16: #{spike_driven_transformer.24} parent=11 // pred_fallthru
        _
      // Predicated region
      $region17: #{spike_driven_transformer.24} parent=11 // pred_check
        %p137 = pneg %p91
      $region18: #{spike_driven_transformer.24} parent=11 // pred_check_branch
        %139 = sbr.rel (%p137) target = $region20
      $region19: #{spike_driven_transformer.24} parent=11 // pred_region
        _
      $region20: #{spike_driven_transformer.24} parent=11 // pred_fallthru
        _
    $region12: #{spike_driven_transformer.24} parent=5 // pred_fallthru
      _
    %p140 = scmp.lt.s32.totalorder %s9, 4
    // Predicated region
    $region21: #{spike_driven_transformer.24} parent=5 // pred_check
      %p141 = pneg %p140
    $region22: #{spike_driven_transformer.24} parent=5 // pred_check_branch
      %143 = sbr.rel (%p141) target = $region24
    $region23: #{spike_driven_transformer.24} parent=5 // pred_region
      // Predicated region
      $region25: #{spike_driven_transformer.24} parent=23 // pred_check
        %p144 = pneg %p43
      $region26: #{spike_driven_transformer.24} parent=23 // pred_check_branch
        %146 = sbr.rel (%p144) target = $region28
      $region27: #{spike_driven_transformer.24} parent=23 // pred_region
        %p147 = scmp.lt.s32.totalorder %s17, 1
        %s148 = scalar_select %p147, %s17, 1
        %p149 = scmp.lt.s32.totalorder %s16, 1
        %s150 = scalar_select %p149, %s16, 1
        %s151 = smul.addr %s148, 2
        %s152 = sadd.s32 %s150, %s151
        %s153 = smul.addr %s152, 4
        %s154 = scalar_lea.vmem %s0, %s153
      $region28: #{spike_driven_transformer.24} parent=23 // pred_fallthru
        _
    $region24: #{spike_driven_transformer.24} parent=5 // pred_fallthru
      _
    %p155 = scmp.le.s32.totalorder 1, %s9
    %p156 = scmp.lt.s32.totalorder %s9, 5
    %p157 = pnand %p155, %p156
    %p158 = pneg %p157
    // Predicated region
    $region29: #{spike_driven_transformer.24} parent=5 // pred_check
      _
    $region30: #{spike_driven_transformer.24} parent=5 // pred_check_branch
      %160 = sbr.rel (%p157) target = $region32
    $region31: #{spike_driven_transformer.24} parent=5 // pred_region
      %s161 = ssub.s32 %s9, 1
      %p162 = scmp.lt.s32.totalorder %s19, 1
      %s163 = scalar_select %p162, %s19, 1
      %p164 = scmp.lt.s32.totalorder %s18, 1
      %s165 = scalar_select %p164, %s18, 1
      %s166 = smul.addr %s163, 2
      %s167 = sadd.s32 %s165, %s166
      %s168 = smul.addr %s167, 4
      %s169 = scalar_lea.vmem %s0, %s168
      %p170 = pneg %p49
      %p171 = pneg %p46
      %p172 = pneg %p70
      %p173 = pneg %p67
      %p174 = pneg %p91
      %p175 = pneg %p88
      %p176 = pneg %p119
      %p177 = pneg %p116
      %p178 = scmp.lt.s32.totalorder %s19, 1
      %s179 = scalar_select %p178, %s19, 1
      %p180 = scmp.lt.s32.totalorder %s18, 1
      %s181 = scalar_select %p180, %s18, 1
      %s182 = smul.addr %s179, 2
      %s183 = sadd.s32 %s181, %s182
      %s184 = smul.addr %s183, 4
      %s185 = scalar_lea.vmem %s3, %s184
      %p186 = scmp.lt.s32.totalorder %s19, 1
      %s187 = scalar_select %p186, %s19, 1
      %p188 = scmp.lt.s32.totalorder %s18, 1
      %s189 = scalar_select %p188, %s18, 1
      %s190 = smul.addr %s187, 2
      %s191 = sadd.s32 %s189, %s190
      %s192 = smul.addr %s191, 4
      %s193 = scalar_lea.vmem %s0, %s192
      %p194 = scmp.lt.s32.totalorder %s19, 1
      %s195 = scalar_select %p194, %s19, 1
      %p196 = scmp.lt.s32.totalorder %s18, 1
      %s197 = scalar_select %p196, %s18, 1
      %s198 = smul.addr %s195, 2
      %s199 = sadd.s32 %s197, %s198
      %s200 = smul.addr %s199, 4
      %s201 = scalar_lea.vmem %s3, %s200
      %p202 = scmp.eq.s32.totalorder %s19, 0
      // Predicated region
      $region33: #{spike_driven_transformer.24} parent=31 // pred_check
        %p203 = pneg %p202
      $region34: #{spike_driven_transformer.24} parent=31 // pred_check_branch
        %205 = sbr.rel (%p203) target = $region36
      $region35: #{spike_driven_transformer.24} parent=31 // pred_region
        %206 = vst [vmem:[#allocation2] sm:$0xff] 0.0
      $region36: #{spike_driven_transformer.24} parent=31 // pred_fallthru
        _
      %v207 = vld [vmem:[%s193] sm:$0xf]
      %v208 = vunpack.c.l.bf16 %v207
      %v209 = vld [vmem:[%s1] sm:$0x1]
      %v211 = vperm.slane %v209, 0
      %v213 = vmul.f32 %v208, %v211
      %v214 = vld [vmem:[%s2] sm:$0x1]
      %v216 = vperm.slane %v214, 0
      %v218 = vadd.f32 %v213, %v216
      %v219 = vld [vmem:[#allocation2] sm:$0xff]
      %v220 = vsub.f32 %v218, %v219
      %v221 = vmul.f32 %v220, 0.5
      %v222 = vadd.f32 %v219, %v221
      %vm223 = vcmp.ge.f32.partialorder %v222, 1.0
      %v224 = vsel %vm223, 1, 0
      %v225 = vcvt.s32.f32 %v224
      %v226 = vpack.c.bf16 %v225, %v225
      %227 = vst [vmem:[%s201] sm:$0xf] %v226
      %v228 = vsel %vm223, 0.0, %v222
      %229 = vst [vmem:[#allocation2] sm:$0xff] %v228
      %p230 = scmp.lt.s32.totalorder %s19, 1
      %s231 = scalar_select %p230, %s19, 1
      %p232 = scmp.lt.s32.totalorder %s18, 1
      %s233 = scalar_select %p232, %s18, 1
      %s234 = smul.addr %s231, 2
      %s235 = sadd.s32 %s233, %s234
      %s236 = smul.addr %s235, 4
      %s237 = scalar_lea.vmem %s3, %s236
      // Predicated region
      $region37: #{spike_driven_transformer.24} parent=31 // pred_check
        %p238 = pneg %p116
      $region38: #{spike_driven_transformer.24} parent=31 // pred_check_branch
        %240 = sbr.rel (%p238) target = $region40
      $region39: #{spike_driven_transformer.24} parent=31 // pred_region
        _
      $region40: #{spike_driven_transformer.24} parent=31 // pred_fallthru
        _
    $region32: #{spike_driven_transformer.24} parent=5 // pred_fallthru
      _
    %p241 = scmp.le.s32.totalorder 2, %s9
    // Predicated region
    $region41: #{spike_driven_transformer.24} parent=5 // pred_check
      %p242 = pneg %p241
    $region42: #{spike_driven_transformer.24} parent=5 // pred_check_branch
      %244 = sbr.rel (%p242) target = $region44
    $region43: #{spike_driven_transformer.24} parent=5 // pred_region
      %s245 = ssub.s32 %s9, 2
      // Predicated region
      $region45: #{spike_driven_transformer.24} parent=43 // pred_check
        %p246 = pneg %p122
      $region46: #{spike_driven_transformer.24} parent=43 // pred_check_branch
        %248 = sbr.rel (%p246) target = $region48
      $region47: #{spike_driven_transformer.24} parent=43 // pred_region
        %p249 = scmp.lt.s32.totalorder %s21, 1
        %s250 = scalar_select %p249, %s21, 1
        %p251 = scmp.lt.s32.totalorder %s20, 1
        %s252 = scalar_select %p251, %s20, 1
        %s253 = smul.addr %s250, 2
        %s254 = sadd.s32 %s252, %s253
        %s255 = smul.addr %s254, 4
        %s256 = scalar_lea.vmem %s3, %s255
      $region48: #{spike_driven_transformer.24} parent=43 // pred_fallthru
        _
    $region44: #{spike_driven_transformer.24} parent=5 // pred_fallthru
      _
  $region6: #{spike_driven_transformer.24} parent=0 // loop_footer
    %s13 = sadd.s32 1, %s9
  $region7: #{spike_driven_transformer.24} parent=0 // loop_footer_branch
    %8 = sbr.rel target = $region3
  $region8: #{spike_driven_transformer.24} parent=0 // loop_exit
    _

// kernel: tile.102
$region0: #{tile.102}
  #allocation0 [shape = 's32[1]{0}', space=sflag, size = 0x4, scoped, tag = 'scoped memory for tile.102']
  %s0 = inlined_call_operand.vmem [shape: f32[32], index: 0, kind: input, shape index: {}]
  %s1 = inlined_call_operand.vmem [shape: f32[4,32], index: 1, kind: output, shape index: {}]
  // Predicated region
  $region2: #{tile.102} parent=0 // pred_check
    _
  $region3: #{tile.102} parent=0 // pred_check_branch
    %3 = sbr.rel (0) target = $region5
  $region4: #{tile.102} parent=0 // pred_region
    _
  $region5: #{tile.102} parent=0 // pred_fallthru
    _
  %v4 = vld [vmem:[%s0] ss:$0 sm:$0xff]
  %5 = vst [vmem:[%s1] sm:$0xf] %v4

// kernel: tile.103
$region0: #{tile.103}
  %s0 = inlined_call_operand.vmem [shape: f32[4,32], index: 0, kind: input, shape index: {}]
  %s1 = inlined_call_operand.vmem [shape: f32[1,128], index: 1, kind: output, shape index: {}]
  $region1: #{tile.103} parent=0
    #allocation0 [shape = 'u8[4096]{0}', space=vmem, size = 0x1000, scoped, tag = 'scoped mem for output reshape']
    #allocation1 [shape = 'u8[4096]{0}', space=vmem, size = 0x1000, scoped, tag = 'scoped mem for input reshape']
    %s3 = ssub.s32 16, 1
    %v4 = vld [vmem:[%s0] sm:%s3]
    %5 = vst [vmem:[#allocation1] sm:%s3] %v4
    %v6 = vld [vmem:[#allocation1] sm:$0x1]
    %vm7 = vcmask 261120
    %8 = vst.msk [vmem:[#allocation0] sm:$0x1] %vm7, %v6
    %s9 = scalar_lea.vmem [#allocation1], 3
    %v10 = vld [vmem:[%s9] sm:$0x1]
    %11 = vrot.lane.b32.xlu0 %v10, 96
    %v12 = vpop.permute.xlu0 %11
    %vm13 = vcmask 1048320
    %14 = vst.msk [vmem:[#allocation0] sm:$0x1] %vm13, %v12
    %s15 = scalar_lea.vmem [#allocation1], 2
    %v16 = vld [vmem:[%s15] sm:$0x1]
    %17 = vrot.lane.b32.xlu0 %v16, 64
    %v18 = vpop.permute.xlu0 %17
    %vm19 = vcmask 785920
    %20 = vst.msk [vmem:[#allocation0] sm:$0x1] %vm19, %v18
    %s21 = scalar_lea.vmem [#allocation1], 1
    %v22 = vld [vmem:[%s21] sm:$0x1]
    %23 = vrot.lane.b32.xlu0 %v22, 32
    %v24 = vpop.permute.xlu0 %23
    %vm25 = vcmask 523520
    %26 = vst.msk [vmem:[#allocation0] sm:$0x1] %vm25, %v24
    %s28 = ssub.s32 2, 1
    %v29 = vld [vmem:[#allocation0] sm:%s28]
    %s31 = ssub.s32 2, 1
    %32 = vst [vmem:[%s1] sm:%s31] %v29

// kernel: reverse
$region0: #{reverse}
  #allocation0 [shape = 's32[1]{0}', space=sflag, size = 0x4, scoped, tag = 'scoped memory for reverse']
  %s0 = inlined_call_operand.vmem [shape: bf16[3,3,32,32], index: 0, kind: input, shape index: {}]
  %s1 = inlined_call_operand.vmem [shape: bf16[3,3,32,32], index: 1, kind: output, shape index: {}]
  %s2 = scalar_lea.vmem %s0, 128
  %v3 = vld [vmem:[%s2] sm:$0xf]
  %v4 = vunpack.c.l.bf16 %v3
  %v5 = vunpack.c.h.bf16 %v3
  %v6 = vpack.c.bf16 0.0, %v4
  %7 = vst [vmem:[%s1] sm:$0xf] %v6
  %s8 = scalar_lea.vmem %s0, 80
  %v9 = vld [vmem:[%s8] sm:$0xf]
  %v10 = vunpack.c.l.bf16 %v9
  %v11 = vunpack.c.h.bf16 %v9
  %s12 = scalar_lea.vmem %s1, 48
  %v13 = vpack.c.bf16 0.0, %v10
  %14 = vst [vmem:[%s12] sm:$0xf] %v13
  %s15 = scalar_lea.vmem %s0, 32
  %v16 = vld [vmem:[%s15] sm:$0xf]
  %v17 = vunpack.c.l.bf16 %v16
  %v18 = vunpack.c.h.bf16 %v16
  %s19 = scalar_lea.vmem %s1, 96
  %v20 = vpack.c.bf16 0.0, %v17
  %21 = vst [vmem:[%s19] sm:$0xf] %v20
  %s22 = scalar_lea.vmem %s0, 112
  %v23 = vld [vmem:[%s22] sm:$0xf]
  %v24 = vunpack.c.l.bf16 %v23
  %v25 = vunpack.c.h.bf16 %v23
  %s26 = scalar_lea.vmem %s1, 16
  %v27 = vpack.c.bf16 0.0, %v24
  %28 = vst [vmem:[%s26] sm:$0xf] %v27
  %s29 = scalar_lea.vmem %s0, 64
  %v30 = vld [vmem:[%s29] sm:$0xf]
  %v31 = vunpack.c.l.bf16 %v30
  %v32 = vunpack.c.h.bf16 %v30
  %s33 = scalar_lea.vmem %s1, 64
  %v34 = vpack.c.bf16 0.0, %v31
  %35 = vst [vmem:[%s33] sm:$0xf] %v34
  %s36 = scalar_lea.vmem %s0, 16
  %v37 = vld [vmem:[%s36] sm:$0xf]
  %v38 = vunpack.c.l.bf16 %v37
  %v39 = vunpack.c.h.bf16 %v37
  %s40 = scalar_lea.vmem %s1, 112
  %v41 = vpack.c.bf16 0.0, %v38
  %42 = vst [vmem:[%s40] sm:$0xf] %v41
  %s43 = scalar_lea.vmem %s0, 96
  %v44 = vld [vmem:[%s43] sm:$0xf]
  %v45 = vunpack.c.l.bf16 %v44
  %v46 = vunpack.c.h.bf16 %v44
  %s47 = scalar_lea.vmem %s1, 32
  %v48 = vpack.c.bf16 0.0, %v45
  %49 = vst [vmem:[%s47] sm:$0xf] %v48
  %s50 = scalar_lea.vmem %s0, 48
  %v51 = vld [vmem:[%s50] sm:$0xf]
  %v52 = vunpack.c.l.bf16 %v51
  %v53 = vunpack.c.h.bf16 %v51
  %s54 = scalar_lea.vmem %s1, 80
  %v55 = vpack.c.bf16 0.0, %v52
  %56 = vst [vmem:[%s54] sm:$0xf] %v55
  %v57 = vld [vmem:[%s0] sm:$0xf]
  %v58 = vunpack.c.l.bf16 %v57
  %v59 = vunpack.c.h.bf16 %v57
  %s60 = scalar_lea.vmem %s1, 128
  %v61 = vpack.c.bf16 0.0, %v58
  %62 = vst [vmem:[%s60] sm:$0xf] %v61
  %s63 = scalar_lea.vmem %s0, 132
  %v64 = vld [vmem:[%s63] sm:$0xf]
  %v65 = vunpack.c.l.bf16 %v64
  %v66 = vunpack.c.h.bf16 %v64
  %s67 = scalar_lea.vmem %s1, 4
  %v68 = vpack.c.bf16 0.0, %v65
  %69 = vst [vmem:[%s67] sm:$0xf] %v68
  %s70 = scalar_lea.vmem %s0, 84
  %v71 = vld [vmem:[%s70] sm:$0xf]
  %v72 = vunpack.c.l.bf16 %v71
  %v73 = vunpack.c.h.bf16 %v71
  %s74 = scalar_lea.vmem %s1, 52
  %v75 = vpack.c.bf16 0.0, %v72
  %76 = vst [vmem:[%s74] sm:$0xf] %v75
  %s77 = scalar_lea.vmem %s0, 36
  %v78 = vld [vmem:[%s77] sm:$0xf]
  %v79 = vunpack.c.l.bf16 %v78
  %v80 = vunpack.c.h.bf16 %v78
  %s81 = scalar_lea.vmem %s1, 100
  %v82 = vpack.c.bf16 0.0, %v79
  %83 = vst [vmem:[%s81] sm:$0xf] %v82
  %s84 = scalar_lea.vmem %s0, 116
  %v85 = vld [vmem:[%s84] sm:$0xf]
  %v86 = vunpack.c.l.bf16 %v85
  %v87 = vunpack.c.h.bf16 %v85
  %s88 = scalar_lea.vmem %s1, 20
  %v89 = vpack.c.bf16 0.0, %v86
  %90 = vst [vmem:[%s88] sm:$0xf] %v89
  %s91 = scalar_lea.vmem %s0, 68
  %v92 = vld [vmem:[%s91] sm:$0xf]
  %v93 = vunpack.c.l.bf16 %v92
  %v94 = vunpack.c.h.bf16 %v92
  %s95 = scalar_lea.vmem %s1, 68
  %v96 = vpack.c.bf16 0.0, %v93
  %97 = vst [vmem:[%s95] sm:$0xf] %v96
  %s98 = scalar_lea.vmem %s0, 20
  %v99 = vld [vmem:[%s98] sm:$0xf]
  %v100 = vunpack.c.l.bf16 %v99
  %v101 = vunpack.c.h.bf16 %v99
  %s102 = scalar_lea.vmem %s1, 116
  %v103 = vpack.c.bf16 0.0, %v100
  %104 = vst [vmem:[%s102] sm:$0xf] %v103
  %s105 = scalar_lea.vmem %s0, 100
  %v106 = vld [vmem:[%s105] sm:$0xf]
  %v107 = vunpack.c.l.bf16 %v106
  %v108 = vunpack.c.h.bf16 %v106
  %s109 = scalar_lea.vmem %s1, 36
  %v110 = vpack.c.bf16 0.0, %v107
  %111 = vst [vmem:[%s109] sm:$0xf] %v110
  %s112 = scalar_lea.vmem %s0, 52
  %v113 = vld [vmem:[%s112] sm:$0xf]
  %v114 = vunpack.c.l.bf16 %v113
  %v115 = vunpack.c.h.bf16 %v113
  %s116 = scalar_lea.vmem %s1, 84
  %v117 = vpack.c.bf16 0.0, %v114
  %118 = vst [vmem:[%s116] sm:$0xf] %v117
  %s119 = scalar_lea.vmem %s0, 4
  %v120 = vld [vmem:[%s119] sm:$0xf]
  %v121 = vunpack.c.l.bf16 %v120
  %v122 = vunpack.c.h.bf16 %v120
  %s123 = scalar_lea.vmem %s1, 132
  %v124 = vpack.c.bf16 0.0, %v121
  %125 = vst [vmem:[%s123] sm:$0xf] %v124
  %s126 = scalar_lea.vmem %s0, 136
  %v127 = vld [vmem:[%s126] sm:$0xf]
  %v128 = vunpack.c.l.bf16 %v127
  %v129 = vunpack.c.h.bf16 %v127
  %s130 = scalar_lea.vmem %s1, 8
  %v131 = vpack.c.bf16 0.0, %v128
  %132 = vst [vmem:[%s130] sm:$0xf] %v131
  %s133 = scalar_lea.vmem %s0, 88
  %v134 = vld [vmem:[%s133] sm:$0xf]
  %v135 = vunpack.c.l.bf16 %v134
  %v136 = vunpack.c.h.bf16 %v134
  %s137 = scalar_lea.vmem %s1, 56
  %v138 = vpack.c.bf16 0.0, %v135
  %139 = vst [vmem:[%s137] sm:$0xf] %v138
  %s140 = scalar_lea.vmem %s0, 40
  %v141 = vld [vmem:[%s140] sm:$0xf]
  %v142 = vunpack.c.l.bf16 %v141
  %v143 = vunpack.c.h.bf16 %v141
  %s144 = scalar_lea.vmem %s1, 104
  %v145 = vpack.c.bf16 0.0, %v142
  %146 = vst [vmem:[%s144] sm:$0xf] %v145
  %s147 = scalar_lea.vmem %s0, 120
  %v148 = vld [vmem:[%s147] sm:$0xf]
  %v149 = vunpack.c.l.bf16 %v148
  %v150 = vunpack.c.h.bf16 %v148
  %s151 = scalar_lea.vmem %s1, 24
  %v152 = vpack.c.bf16 0.0, %v149
  %153 = vst [vmem:[%s151] sm:$0xf] %v152
  %s154 = scalar_lea.vmem %s0, 72
  %v155 = vld [vmem:[%s154] sm:$0xf]
  %v156 = vunpack.c.l.bf16 %v155
  %v157 = vunpack.c.h.bf16 %v155
  %s158 = scalar_lea.vmem %s1, 72
  %v159 = vpack.c.bf16 0.0, %v156
  %160 = vst [vmem:[%s158] sm:$0xf] %v159
  %s161 = scalar_lea.vmem %s0, 24
  %v162 = vld [vmem:[%s161] sm:$0xf]
  %v163 = vunpack.c.l.bf16 %v162
  %v164 = vunpack.c.h.bf16 %v162
  %s165 = scalar_lea.vmem %s1, 120
  %v166 = vpack.c.bf16 0.0, %v163
  %167 = vst [vmem:[%s165] sm:$0xf] %v166
  %s168 = scalar_lea.vmem %s0, 104
  %v169 = vld [vmem:[%s168] sm:$0xf]
  %v170 = vunpack.c.l.bf16 %v169
  %v171 = vunpack.c.h.bf16 %v169
  %s172 = scalar_lea.vmem %s1, 40
  %v173 = vpack.c.bf16 0.0, %v170
  %174 = vst [vmem:[%s172] sm:$0xf] %v173
  %s175 = scalar_lea.vmem %s0, 56
  %v176 = vld [vmem:[%s175] sm:$0xf]
  %v177 = vunpack.c.l.bf16 %v176
  %v178 = vunpack.c.h.bf16 %v176
  %s179 = scalar_lea.vmem %s1, 88
  %v180 = vpack.c.bf16 0.0, %v177
  %181 = vst [vmem:[%s179] sm:$0xf] %v180
  %s182 = scalar_lea.vmem %s0, 8
  %v183 = vld [vmem:[%s182] sm:$0xf]
  %v184 = vunpack.c.l.bf16 %v183
  %v185 = vunpack.c.h.bf16 %v183
  %s186 = scalar_lea.vmem %s1, 136
  %v187 = vpack.c.bf16 0.0, %v184
  %188 = vst [vmem:[%s186] sm:$0xf] %v187
  %s189 = scalar_lea.vmem %s0, 140
  %v190 = vld [vmem:[%s189] sm:$0xf]
  %v191 = vunpack.c.l.bf16 %v190
  %v192 = vunpack.c.h.bf16 %v190
  %s193 = scalar_lea.vmem %s1, 12
  %v194 = vpack.c.bf16 0.0, %v191
  %195 = vst [vmem:[%s193] sm:$0xf] %v194
  %s196 = scalar_lea.vmem %s0, 92
  %v197 = vld [vmem:[%s196] sm:$0xf]
  %v198 = vunpack.c.l.bf16 %v197
  %v199 = vunpack.c.h.bf16 %v197
  %s200 = scalar_lea.vmem %s1, 60
  %v201 = vpack.c.bf16 0.0, %v198
  %202 = vst [vmem:[%s200] sm:$0xf] %v201
  %s203 = scalar_lea.vmem %s0, 44
  %v204 = vld [vmem:[%s203] sm:$0xf]
  %v205 = vunpack.c.l.bf16 %v204
  %v206 = vunpack.c.h.bf16 %v204
  %s207 = scalar_lea.vmem %s1, 108
  %v208 = vpack.c.bf16 0.0, %v205
  %209 = vst [vmem:[%s207] sm:$0xf] %v208
  %s210 = scalar_lea.vmem %s0, 124
  %v211 = vld [vmem:[%s210] sm:$0xf]
  %v212 = vunpack.c.l.bf16 %v211
  %v213 = vunpack.c.h.bf16 %v211
  %s214 = scalar_lea.vmem %s1, 28
  %v215 = vpack.c.bf16 0.0, %v212
  %216 = vst [vmem:[%s214] sm:$0xf] %v215
  %s217 = scalar_lea.vmem %s0, 76
  %v218 = vld [vmem:[%s217] sm:$0xf]
  %v219 = vunpack.c.l.bf16 %v218
  %v220 = vunpack.c.h.bf16 %v218
  %s221 = scalar_lea.vmem %s1, 76
  %v222 = vpack.c.bf16 0.0, %v219
  %223 = vst [vmem:[%s221] sm:$0xf] %v222
  %s224 = scalar_lea.vmem %s0, 28
  %v225 = vld [vmem:[%s224] sm:$0xf]
  %v226 = vunpack.c.l.bf16 %v225
  %v227 = vunpack.c.h.bf16 %v225
  %s228 = scalar_lea.vmem %s1, 124
  %v229 = vpack.c.bf16 0.0, %v226
  %230 = vst [vmem:[%s228] sm:$0xf] %v229
  %s231 = scalar_lea.vmem %s0, 108
  %v232 = vld [vmem:[%s231] sm:$0xf]
  %v233 = vunpack.c.l.bf16 %v232
  %v234 = vunpack.c.h.bf16 %v232
  %s235 = scalar_lea.vmem %s1, 44
  %v236 = vpack.c.bf16 0.0, %v233
  %237 = vst [vmem:[%s235] sm:$0xf] %v236
  %s238 = scalar_lea.vmem %s0, 60
  %v239 = vld [vmem:[%s238] sm:$0xf]
  %v240 = vunpack.c.l.bf16 %v239
  %v241 = vunpack.c.h.bf16 %v239
  %s242 = scalar_lea.vmem %s1, 92
  %v243 = vpack.c.bf16 0.0, %v240
  %244 = vst [vmem:[%s242] sm:$0xf] %v243
  %s245 = scalar_lea.vmem %s0, 12
  %v246 = vld [vmem:[%s245] sm:$0xf]
  %v247 = vunpack.c.l.bf16 %v246
  %v248 = vunpack.c.h.bf16 %v246
  %s249 = scalar_lea.vmem %s1, 140
  %v250 = vpack.c.bf16 0.0, %v247
  %251 = vst [vmem:[%s249] sm:$0xf] %v250

// kernel: spike_driven_transformer.25
$region0: #{spike_driven_transformer.25}
  #allocation0 [shape = 'u32[]', space=smem, size = 0x4, offset = 0x4, fixed_abs, tag = 'smem constant byte address 0x4 - core index']
  #allocation1 [shape = 'u32[72,128]{1,0:T(1,128)}', space=vmem, size = 0x9000, scoped, tag = 'internal scratch']
  #allocation2 [shape = 'f32[8,128]{1,0:T(8,128)}', space=vmem, size = 0x1000, scoped, tag = 'scratch operand']
  %s0 = inlined_call_operand.vmem [shape: bf16[2,8,128], index: 0, kind: input, shape index: {}]
  %s1 = inlined_call_operand.vmem [shape: f32[1,128], index: 1, kind: input, shape index: {}]
  %s2 = inlined_call_operand.vmem [shape: f32[1,128], index: 2, kind: input, shape index: {}]
  %s3 = inlined_call_operand.vmem [shape: bf16[2,8,128], index: 3, kind: output, shape index: {}]
  %s4 = sld [smem:[#allocation0]]
  $region49: #{spike_driven_transformer.25} parent=0
    _
  %s6 = ssub.s32 1, %s4
  %s7 = scalar_select 0, %s6, %s4
  loop: start=0, step=1, limit=4
  $region2: #{spike_driven_transformer.25} parent=0 // loop_pre_header
    _
  $region3: #{spike_driven_transformer.25} parent=0 // loop_header
    %s9 = sphi 0, %s13
    %p10 = scmp.ge.s32.totalorder %s9, 4
    %s16 = sphi 0, %s28
    %s17 = sphi 0, %s24
    %s18 = sphi 0, %s16
    %s19 = sphi 0, %s17
    %s20 = sphi 0, %s18
    %s21 = sphi 0, %s19
    %s33 = sphi 0, %s35
    %s36 = sphi 0, %s33
    %s37 = sphi 0, %s36
    %s53 = sphi 0, %s37
    %s57 = sphi 0, %s57
    %s59 = sphi 0, %s57
    %s60 = sphi 0, %s59
    %s74 = sphi 0, %s60
    %s78 = sphi 0, %s78
    %s80 = sphi 0, %s78
    %s81 = sphi 0, %s80
    %s95 = sphi 0, %s81
    %s103 = sphi 0, %s105
    %s106 = sphi 0, %s103
    %s107 = sphi 0, %s106
    %s123 = sphi 0, %s107
  $region4: #{spike_driven_transformer.25} parent=0 // loop_header_branch
    %12 = sbr.rel (%p10) target = $region8
  $region5: #{spike_driven_transformer.25} parent=0 // loop_body
    %s14 = ssub.s32 %s9, 1
    %s15 = ssub.s32 %s9, 2
    %s22 = sadd.s32 1, %s17
    %p23 = scmp.ge.s32.totalorder %s22, 2
    %s24 = scalar_select %p23, 0, %s22
    %s25 = sadd.s32 1, %s16
    %s26 = scalar_select %p23, %s25, %s16
    %p27 = scmp.ge.s32.totalorder %s26, 1
    %s28 = scalar_select %p27, 0, %s26
    %s29 = ssub.s32 %s17, %s24
    %s30 = ssub.s32 %s16, %s28
    %s31 = sor.u32 %s29, %s30
    %p32 = scmp.eq.s32.totalorder %s31, 0
    %s34 = sadd.s32 %s33, 1
    %s35 = scalar_select %p32, %s33, %s34
    %p38 = pneg %p32
    %p39 = scmp.eq.s32.totalorder %s9, 1
    %p40 = por %p38, %p39
    %p41 = scmp.ne.s32.totalorder %s33, %s36
    %p42 = scmp.eq.s32.totalorder %s9, 0
    %p43 = por %p41, %p42
    %p44 = scmp.ne.s32.totalorder %s33, %s36
    %p45 = scmp.eq.s32.totalorder %s14, 1
    %p46 = por %p44, %p45
    %p47 = scmp.ne.s32.totalorder %s36, %s37
    %p48 = scmp.eq.s32.totalorder %s14, 0
    %p49 = por %p47, %p48
    %p50 = scmp.ne.s32.totalorder %s36, %s37
    %p51 = scmp.eq.s32.totalorder %s15, 1
    %p52 = por %p50, %p51
    %p54 = scmp.ne.s32.totalorder %s37, %s53
    %p55 = scmp.eq.s32.totalorder %s15, 0
    %p56 = por %p54, %p55
    %s58 = sadd.s32 %s57, 1
    %p61 = scmp.eq.s32.totalorder %s9, 1
    %p62 = scmp.ne.s32.totalorder %s57, %s59
    %p63 = scmp.eq.s32.totalorder %s9, 0
    %p64 = por %p62, %p63
    %p65 = scmp.ne.s32.totalorder %s57, %s59
    %p66 = scmp.eq.s32.totalorder %s14, 1
    %p67 = por %p65, %p66
    %p68 = scmp.ne.s32.totalorder %s59, %s60
    %p69 = scmp.eq.s32.totalorder %s14, 0
    %p70 = por %p68, %p69
    %p71 = scmp.ne.s32.totalorder %s59, %s60
    %p72 = scmp.eq.s32.totalorder %s15, 1
    %p73 = por %p71, %p72
    %p75 = scmp.ne.s32.totalorder %s60, %s74
    %p76 = scmp.eq.s32.totalorder %s15, 0
    %p77 = por %p75, %p76
    %s79 = sadd.s32 %s78, 1
    %p82 = scmp.eq.s32.totalorder %s9, 1
    %p83 = scmp.ne.s32.totalorder %s78, %s80
    %p84 = scmp.eq.s32.totalorder %s9, 0
    %p85 = por %p83, %p84
    %p86 = scmp.ne.s32.totalorder %s78, %s80
    %p87 = scmp.eq.s32.totalorder %s14, 1
    %p88 = por %p86, %p87
    %p89 = scmp.ne.s32.totalorder %s80, %s81
    %p90 = scmp.eq.s32.totalorder %s14, 0
    %p91 = por %p89, %p90
    %p92 = scmp.ne.s32.totalorder %s80, %s81
    %p93 = scmp.eq.s32.totalorder %s15, 1
    %p94 = por %p92, %p93
    %p96 = scmp.ne.s32.totalorder %s81, %s95
    %p97 = scmp.eq.s32.totalorder %s15, 0
    %p98 = por %p96, %p97
    %s99 = ssub.s32 %s17, %s24
    %s100 = ssub.s32 %s16, %s28
    %s101 = sor.u32 %s99, %s100
    %p102 = scmp.eq.s32.totalorder %s101, 0
    %s104 = sadd.s32 %s103, 1
    %s105 = scalar_select %p102, %s103, %s104
    %p108 = pneg %p102
    %p109 = scmp.eq.s32.totalorder %s9, 1
    %p110 = por %p108, %p109
    %p111 = scmp.ne.s32.totalorder %s103, %s106
    %p112 = scmp.eq.s32.totalorder %s9, 0
    %p113 = por %p111, %p112
    %p114 = scmp.ne.s32.totalorder %s103, %s106
    %p115 = scmp.eq.s32.totalorder %s14, 1
    %p116 = por %p114, %p115
    %p117 = scmp.ne.s32.totalorder %s106, %s107
    %p118 = scmp.eq.s32.totalorder %s14, 0
    %p119 = por %p117, %p118
    %p120 = scmp.ne.s32.totalorder %s106, %s107
    %p121 = scmp.eq.s32.totalorder %s15, 1
    %p122 = por %p120, %p121
    %p124 = scmp.ne.s32.totalorder %s107, %s123
    %p125 = scmp.eq.s32.totalorder %s15, 0
    %p126 = por %p124, %p125
    %p127 = scmp.le.s32.totalorder 1, %s9
    %p128 = scmp.lt.s32.totalorder %s9, 3
    %p129 = pnand %p127, %p128
    %p130 = pneg %p129
    // Predicated region
    $region9: #{spike_driven_transformer.25} parent=5 // pred_check
      _
    $region10: #{spike_driven_transformer.25} parent=5 // pred_check_branch
      %132 = sbr.rel (%p129) target = $region12
    $region11: #{spike_driven_transformer.25} parent=5 // pred_region
      %s133 = ssub.s32 %s9, 1
      // Predicated region
      $region13: #{spike_driven_transformer.25} parent=11 // pred_check
        %p134 = pneg %p70
      $region14: #{spike_driven_transformer.25} parent=11 // pred_check_branch
        %136 = sbr.rel (%p134) target = $region16
      $region15: #{spike_driven_transformer.25} parent=11 // pred_region
        _
      $region16: #{spike_driven_transformer.25} parent=11 // pred_fallthru
        _
      // Predicated region
      $region17: #{spike_driven_transformer.25} parent=11 // pred_check
        %p137 = pneg %p91
      $region18: #{spike_driven_transformer.25} parent=11 // pred_check_branch
        %139 = sbr.rel (%p137) target = $region20
      $region19: #{spike_driven_transformer.25} parent=11 // pred_region
        _
      $region20: #{spike_driven_transformer.25} parent=11 // pred_fallthru
        _
    $region12: #{spike_driven_transformer.25} parent=5 // pred_fallthru
      _
    %p140 = scmp.lt.s32.totalorder %s9, 2
    // Predicated region
    $region21: #{spike_driven_transformer.25} parent=5 // pred_check
      %p141 = pneg %p140
    $region22: #{spike_driven_transformer.25} parent=5 // pred_check_branch
      %143 = sbr.rel (%p141) target = $region24
    $region23: #{spike_driven_transformer.25} parent=5 // pred_region
      // Predicated region
      $region25: #{spike_driven_transformer.25} parent=23 // pred_check
        %p144 = pneg %p43
      $region26: #{spike_driven_transformer.25} parent=23 // pred_check_branch
        %146 = sbr.rel (%p144) target = $region28
      $region27: #{spike_driven_transformer.25} parent=23 // pred_region
        %p147 = scmp.lt.s32.totalorder %s17, 1
        %s148 = scalar_select %p147, %s17, 1
        %p149 = scmp.lt.s32.totalorder %s16, 0
        %s150 = scalar_select %p149, %s16, 0
        %s151 = sadd.s32 %s150, %s148
        %s152 = smul.addr %s151, 4
        %s153 = scalar_lea.vmem %s0, %s152
      $region28: #{spike_driven_transformer.25} parent=23 // pred_fallthru
        _
    $region24: #{spike_driven_transformer.25} parent=5 // pred_fallthru
      _
    %p154 = scmp.le.s32.totalorder 1, %s9
    %p155 = scmp.lt.s32.totalorder %s9, 3
    %p156 = pnand %p154, %p155
    %p157 = pneg %p156
    // Predicated region
    $region29: #{spike_driven_transformer.25} parent=5 // pred_check
      _
    $region30: #{spike_driven_transformer.25} parent=5 // pred_check_branch
      %159 = sbr.rel (%p156) target = $region32
    $region31: #{spike_driven_transformer.25} parent=5 // pred_region
      %s160 = ssub.s32 %s9, 1
      %p161 = scmp.lt.s32.totalorder %s19, 1
      %s162 = scalar_select %p161, %s19, 1
      %p163 = scmp.lt.s32.totalorder %s18, 0
      %s164 = scalar_select %p163, %s18, 0
      %s165 = sadd.s32 %s164, %s162
      %s166 = smul.addr %s165, 4
      %s167 = scalar_lea.vmem %s0, %s166
      %p168 = pneg %p49
      %p169 = pneg %p46
      %p170 = pneg %p70
      %p171 = pneg %p67
      %p172 = pneg %p91
      %p173 = pneg %p88
      %p174 = pneg %p119
      %p175 = pneg %p116
      %p176 = scmp.lt.s32.totalorder %s19, 1
      %s177 = scalar_select %p176, %s19, 1
      %p178 = scmp.lt.s32.totalorder %s18, 0
      %s179 = scalar_select %p178, %s18, 0
      %s180 = sadd.s32 %s179, %s177
      %s181 = smul.addr %s180, 4
      %s182 = scalar_lea.vmem %s3, %s181
      %p183 = scmp.lt.s32.totalorder %s19, 1
      %s184 = scalar_select %p183, %s19, 1
      %p185 = scmp.lt.s32.totalorder %s18, 0
      %s186 = scalar_select %p185, %s18, 0
      %s187 = sadd.s32 %s186, %s184
      %s188 = smul.addr %s187, 4
      %s189 = scalar_lea.vmem %s0, %s188
      %p190 = scmp.lt.s32.totalorder %s19, 1
      %s191 = scalar_select %p190, %s19, 1
      %p192 = scmp.lt.s32.totalorder %s18, 0
      %s193 = scalar_select %p192, %s18, 0
      %s194 = sadd.s32 %s193, %s191
      %s195 = smul.addr %s194, 4
      %s196 = scalar_lea.vmem %s3, %s195
      %p197 = scmp.eq.s32.totalorder %s19, 0
      // Predicated region
      $region33: #{spike_driven_transformer.25} parent=31 // pred_check
        %p198 = pneg %p197
      $region34: #{spike_driven_transformer.25} parent=31 // pred_check_branch
        %200 = sbr.rel (%p198) target = $region36
      $region35: #{spike_driven_transformer.25} parent=31 // pred_region
        %201 = vst [vmem:[#allocation2] sm:$0xff] 0.0
      $region36: #{spike_driven_transformer.25} parent=31 // pred_fallthru
        _
      %v202 = vld [vmem:[%s189] sm:$0xf]
      %v203 = vunpack.c.l.bf16 %v202
      %v204 = vld [vmem:[%s1] sm:$0x1]
      %v206 = vperm.slane %v204, 0
      %v208 = vmul.f32 %v203, %v206
      %v209 = vld [vmem:[%s2] sm:$0x1]
      %v211 = vperm.slane %v209, 0
      %v213 = vadd.f32 %v208, %v211
      %v214 = vld [vmem:[#allocation2] sm:$0xff]
      %v215 = vsub.f32 %v213, %v214
      %v216 = vmul.f32 %v215, 0.5
      %v217 = vadd.f32 %v214, %v216
      %vm218 = vcmp.ge.f32.partialorder %v217, 1.0
      %v219 = vsel %vm218, 1, 0
      %v220 = vcvt.s32.f32 %v219
      %v221 = vpack.c.bf16 %v220, %v220
      %222 = vst [vmem:[%s196] sm:$0xf] %v221
      %v223 = vsel %vm218, 0.0, %v217
      %224 = vst [vmem:[#allocation2] sm:$0xff] %v223
      %p225 = scmp.lt.s32.totalorder %s19, 1
      %s226 = scalar_select %p225, %s19, 1
      %p227 = scmp.lt.s32.totalorder %s18, 0
      %s228 = scalar_select %p227, %s18, 0
      %s229 = sadd.s32 %s228, %s226
      %s230 = smul.addr %s229, 4
      %s231 = scalar_lea.vmem %s3, %s230
      // Predicated region
      $region37: #{spike_driven_transformer.25} parent=31 // pred_check
        %p232 = pneg %p116
      $region38: #{spike_driven_transformer.25} parent=31 // pred_check_branch
        %234 = sbr.rel (%p232) target = $region40
      $region39: #{spike_driven_transformer.25} parent=31 // pred_region
        _
      $region40: #{spike_driven_transformer.25} parent=31 // pred_fallthru
        _
    $region32: #{spike_driven_transformer.25} parent=5 // pred_fallthru
      _
    %p235 = scmp.le.s32.totalorder 2, %s9
    // Predicated region
    $region41: #{spike_driven_transformer.25} parent=5 // pred_check
      %p236 = pneg %p235
    $region42: #{spike_driven_transformer.25} parent=5 // pred_check_branch
      %238 = sbr.rel (%p236) target = $region44
    $region43: #{spike_driven_transformer.25} parent=5 // pred_region
      %s239 = ssub.s32 %s9, 2
      // Predicated region
      $region45: #{spike_driven_transformer.25} parent=43 // pred_check
        %p240 = pneg %p122
      $region46: #{spike_driven_transformer.25} parent=43 // pred_check_branch
        %242 = sbr.rel (%p240) target = $region48
      $region47: #{spike_driven_transformer.25} parent=43 // pred_region
        %p243 = scmp.lt.s32.totalorder %s21, 1
        %s244 = scalar_select %p243, %s21, 1
        %p245 = scmp.lt.s32.totalorder %s20, 0
        %s246 = scalar_select %p245, %s20, 0
        %s247 = sadd.s32 %s246, %s244
        %s248 = smul.addr %s247, 4
        %s249 = scalar_lea.vmem %s3, %s248
      $region48: #{spike_driven_transformer.25} parent=43 // pred_fallthru
        _
    $region44: #{spike_driven_transformer.25} parent=5 // pred_fallthru
      _
  $region6: #{spike_driven_transformer.25} parent=0 // loop_footer
    %s13 = sadd.s32 1, %s9
  $region7: #{spike_driven_transformer.25} parent=0 // loop_footer_branch
    %8 = sbr.rel target = $region3
  $region8: #{spike_driven_transformer.25} parent=0 // loop_exit
    _

// kernel: spike_driven_transformer.27
$region0: #{spike_driven_transformer.27}
  #allocation0 [shape = 'u32[]', space=smem, size = 0x4, offset = 0x4, fixed_abs, tag = 'smem constant byte address 0x4 - core index']
  #allocation1 [shape = 'u32[72,128]{1,0:T(1,128)}', space=vmem, size = 0x9000, scoped, tag = 'internal scratch']
  %s0 = inlined_call_operand.vmem [shape: bf16[16,128], index: 0, kind: input, shape index: {}]
  %s1 = inlined_call_operand.vmem [shape: bf16[128,128], index: 1, kind: input, shape index: {}]
  %s2 = inlined_call_operand.vmem [shape: bf16[16,128], index: 2, kind: output, shape index: {0}]
  %s3 = inlined_call_operand.vmem [shape: f32[1,8,128], index: 3, kind: output, shape index: {1}]
  %4 = xla_tuple %s2, %s3
  %s5 = sld [smem:[#allocation0]]
  $region26: #{spike_driven_transformer.27} parent=0
    _
  %s7 = ssub.s32 1, %s5
  %s8 = scalar_select 0, %s7, %s5
  // Predicated region
  $region2: #{spike_driven_transformer.27} parent=0 // pred_check
    _
  $region3: #{spike_driven_transformer.27} parent=0 // pred_check_branch
    %10 = sbr.rel (0) target = $region5
  $region4: #{spike_driven_transformer.27} parent=0 // pred_region
    _
  $region5: #{spike_driven_transformer.27} parent=0 // pred_fallthru
    _
  // Predicated region
  $region6: #{spike_driven_transformer.27} parent=0 // pred_check
    _
  $region7: #{spike_driven_transformer.27} parent=0 // pred_check_branch
    %12 = sbr.rel (0) target = $region9
  $region8: #{spike_driven_transformer.27} parent=0 // pred_region
    _
  $region9: #{spike_driven_transformer.27} parent=0 // pred_fallthru
    _
  %v13 = vld [vmem:[%s0] sm:$0xf]
  %v14 = vld [vmem:[%s0 + $0x4] sm:$0xf]
  %v15 = vld [vmem:[%s1] sm:$0xf]
  %v16 = vld [vmem:[%s1 + $0x4] sm:$0xf]
  %v17 = vld [vmem:[%s1 + $0x8] sm:$0xf]
  %v18 = vld [vmem:[%s1 + $0xc] sm:$0xf]
  %v19 = vld [vmem:[%s1 + $0x10] sm:$0xf]
  %v20 = vld [vmem:[%s1 + $0x14] sm:$0xf]
  %v21 = vld [vmem:[%s1 + $0x18] sm:$0xf]
  %v22 = vld [vmem:[%s1 + $0x1c] sm:$0xf]
  %v23 = vld [vmem:[%s1 + $0x20] sm:$0xf]
  %v24 = vld [vmem:[%s1 + $0x24] sm:$0xf]
  %v25 = vld [vmem:[%s1 + $0x28] sm:$0xf]
  %v26 = vld [vmem:[%s1 + $0x2c] sm:$0xf]
  %v27 = vld [vmem:[%s1 + $0x30] sm:$0xf]
  %v28 = vld [vmem:[%s1 + $0x34] sm:$0xf]
  %v29 = vld [vmem:[%s1 + $0x38] sm:$0xf]
  %v30 = vld [vmem:[%s1 + $0x3c] sm:$0xf]
  %v33 = vunpack.c.l.b16 %v13
  %v34 = vunpack.c.l.b16 %v14
  %v35 = vpack.c.b16 %v34, %v33
  %v53 = vunpack.c.l.b16 %v15
  %v54 = vunpack.c.l.b16 %v16
  %v55 = vunpack.c.l.b16 %v17
  %v56 = vunpack.c.l.b16 %v18
  %v57 = vunpack.c.l.b16 %v19
  %v58 = vunpack.c.l.b16 %v20
  %v59 = vunpack.c.l.b16 %v21
  %v60 = vunpack.c.l.b16 %v22
  %v61 = vunpack.c.l.b16 %v23
  %v62 = vunpack.c.l.b16 %v24
  %v63 = vunpack.c.l.b16 %v25
  %v64 = vunpack.c.l.b16 %v26
  %v65 = vunpack.c.l.b16 %v27
  %v66 = vunpack.c.l.b16 %v28
  %v67 = vunpack.c.l.b16 %v29
  %v68 = vunpack.c.l.b16 %v30
  %v69 = vpack.c.b16 %v54, %v53
  %v70 = vpack.c.b16 %v56, %v55
  %v71 = vpack.c.b16 %v58, %v57
  %v72 = vpack.c.b16 %v60, %v59
  %v73 = vpack.c.b16 %v62, %v61
  %v74 = vpack.c.b16 %v64, %v63
  %v75 = vpack.c.b16 %v66, %v65
  %v76 = vpack.c.b16 %v68, %v67
  %85 = vmatpush.bf16.msra.mxu0 %v76
  %86 = vmatpush.bf16.msra.mxu0 %v75
  %87 = vmatpush.bf16.msra.mxu0 %v74
  %88 = vmatpush.bf16.msra.mxu0 %v73
  %89 = vmatpush.bf16.msra.mxu0 %v72
  %90 = vmatpush.bf16.msra.mxu0 %v71
  %91 = vmatpush.bf16.msra.mxu0 %v70
  %92 = vmatpush.bf16.msra.mxu0 %v69
  %93 = vmatmul.bf16.gmra.mxu0 %v35
  %v94 = vpop.f32.mrf.mxu0
  %v95 = vadd.f32 0.0, %v94
  %v96 = vpop.f32.mrf.mxu0
  %v97 = vadd.f32 0.0, %v96
  %98 = vdwg.mxu0
  %v99 = vpack.c.bf16 %v95, %v95
  %v100 = vpack.c.bf16 %v97, %v97
  %101 = vst [vmem:[%s2] sm:$0xf] %v99
  %102 = vst [vmem:[%s2 + $0x4] sm:$0xf] %v100
  %v103 = vadd.f32 %v95, %v97
  %v104 = vrot.slane %v103, 4
  %v105 = vadd.f32 %v103, %v104
  %v106 = vrot.slane %v105, 2
  %v107 = vadd.f32 %v105, %v106
  %v108 = vrot.slane %v107, 1
  %v109 = vadd.f32 %v107, %v108
  %v110 = vmul.f32 %v95, %v95
  %v111 = vmul.f32 %v97, %v97
  %v112 = vadd.f32 %v110, %v111
  %v113 = vrot.slane %v112, 4
  %v114 = vadd.f32 %v112, %v113
  %v115 = vrot.slane %v114, 2
  %v116 = vadd.f32 %v114, %v115
  %v117 = vrot.slane %v116, 1
  %v118 = vadd.f32 %v116, %v117
  %v119 = vlaneseq
  %v120 = vshrl.u32 %v119, 7
  %vm121 = vcmp.eq.s32.totalorder %v120, 0
  %vm122 = vcmp.eq.s32.totalorder %v120, 1
  %v123 = vsel %vm122, %v118, 0.0
  %v124 = vsel %vm121, %v109, %v123
  %125 = vst [vmem:[%s3] sm:$0xff] %v124
  // Predicated region
  $region10: #{spike_driven_transformer.27} parent=0 // pred_check
    _
  $region11: #{spike_driven_transformer.27} parent=0 // pred_check_branch
    %127 = sbr.rel (0) target = $region13
  $region12: #{spike_driven_transformer.27} parent=0 // pred_region
    _
  $region13: #{spike_driven_transformer.27} parent=0 // pred_fallthru
    _
  // Predicated region
  $region14: #{spike_driven_transformer.27} parent=0 // pred_check
    _
  $region15: #{spike_driven_transformer.27} parent=0 // pred_check_branch
    %129 = sbr.rel (0) target = $region17
  $region16: #{spike_driven_transformer.27} parent=0 // pred_region
    _
  $region17: #{spike_driven_transformer.27} parent=0 // pred_fallthru
    _
  // Predicated region
  $region18: #{spike_driven_transformer.27} parent=0 // pred_check
    _
  $region19: #{spike_driven_transformer.27} parent=0 // pred_check_branch
    %131 = sbr.rel (0) target = $region21
  $region20: #{spike_driven_transformer.27} parent=0 // pred_region
    _
  $region21: #{spike_driven_transformer.27} parent=0 // pred_fallthru
    _
  // Predicated region
  $region22: #{spike_driven_transformer.27} parent=0 // pred_check
    _
  $region23: #{spike_driven_transformer.27} parent=0 // pred_check_branch
    %133 = sbr.rel (0) target = $region25
  $region24: #{spike_driven_transformer.27} parent=0 // pred_region
    _
  $region25: #{spike_driven_transformer.27} parent=0 // pred_fallthru
    _

// kernel: spike_driven_transformer.28
$region0: #{spike_driven_transformer.28}
  #allocation0 [shape = 'u32[]', space=smem, size = 0x4, offset = 0x4, fixed_abs, tag = 'smem constant byte address 0x4 - core index']
  #allocation1 [shape = 'u32[72,128]{1,0:T(1,128)}', space=vmem, size = 0x9000, scoped, tag = 'internal scratch']
  #allocation2 [shape = 'f32[4,96]{1,0:T(4,128)}', space=vmem, size = 0x800, scoped, tag = 'scratch operand']
  #allocation3 [shape = 'f32[1,32]{1,0:T(1,128)}', space=vmem, size = 0x200, scoped, tag = 'scratch operand']
  %s0 = inlined_call_operand.vmem [shape: bf16[2,2,4,96], index: 0, kind: input, shape index: {}]
  %s1 = inlined_call_operand.vmem [shape: f32[1,96], index: 1, kind: input, shape index: {}]
  %s2 = inlined_call_operand.vmem [shape: f32[1,96], index: 2, kind: input, shape index: {}]
  %s3 = inlined_call_operand.vmem [shape: bf16[2,2,4,32], index: 3, kind: output, shape index: {}]
  %s4 = sld [smem:[#allocation0]]
  $region49: #{spike_driven_transformer.28} parent=0
    _
  %s6 = ssub.s32 1, %s4
  %s7 = scalar_select 0, %s6, %s4
  loop: start=0, step=1, limit=6
  $region2: #{spike_driven_transformer.28} parent=0 // loop_pre_header
    _
  $region3: #{spike_driven_transformer.28} parent=0 // loop_header
    %s9 = sphi 0, %s13
    %p10 = scmp.ge.s32.totalorder %s9, 6
    %s16 = sphi 0, %s28
    %s17 = sphi 0, %s24
    %s18 = sphi 0, %s16
    %s19 = sphi 0, %s17
    %s20 = sphi 0, %s18
    %s21 = sphi 0, %s19
    %s33 = sphi 0, %s35
    %s36 = sphi 0, %s33
    %s37 = sphi 0, %s36
    %s53 = sphi 0, %s37
    %s57 = sphi 0, %s57
    %s59 = sphi 0, %s57
    %s60 = sphi 0, %s59
    %s74 = sphi 0, %s60
    %s78 = sphi 0, %s78
    %s80 = sphi 0, %s78
    %s81 = sphi 0, %s80
    %s95 = sphi 0, %s81
    %s103 = sphi 0, %s105
    %s106 = sphi 0, %s103
    %s107 = sphi 0, %s106
    %s123 = sphi 0, %s107
  $region4: #{spike_driven_transformer.28} parent=0 // loop_header_branch
    %12 = sbr.rel (%p10) target = $region8
  $region5: #{spike_driven_transformer.28} parent=0 // loop_body
    %s14 = ssub.s32 %s9, 1
    %s15 = ssub.s32 %s9, 2
    %s22 = sadd.s32 1, %s17
    %p23 = scmp.ge.s32.totalorder %s22, 2
    %s24 = scalar_select %p23, 0, %s22
    %s25 = sadd.s32 1, %s16
    %s26 = scalar_select %p23, %s25, %s16
    %p27 = scmp.ge.s32.totalorder %s26, 2
    %s28 = scalar_select %p27, 0, %s26
    %s29 = ssub.s32 %s17, %s24
    %s30 = ssub.s32 %s16, %s28
    %s31 = sor.u32 %s29, %s30
    %p32 = scmp.eq.s32.totalorder %s31, 0
    %s34 = sadd.s32 %s33, 1
    %s35 = scalar_select %p32, %s33, %s34
    %p38 = pneg %p32
    %p39 = scmp.eq.s32.totalorder %s9, 3
    %p40 = por %p38, %p39
    %p41 = scmp.ne.s32.totalorder %s33, %s36
    %p42 = scmp.eq.s32.totalorder %s9, 0
    %p43 = por %p41, %p42
    %p44 = scmp.ne.s32.totalorder %s33, %s36
    %p45 = scmp.eq.s32.totalorder %s14, 3
    %p46 = por %p44, %p45
    %p47 = scmp.ne.s32.totalorder %s36, %s37
    %p48 = scmp.eq.s32.totalorder %s14, 0
    %p49 = por %p47, %p48
    %p50 = scmp.ne.s32.totalorder %s36, %s37
    %p51 = scmp.eq.s32.totalorder %s15, 3
    %p52 = por %p50, %p51
    %p54 = scmp.ne.s32.totalorder %s37, %s53
    %p55 = scmp.eq.s32.totalorder %s15, 0
    %p56 = por %p54, %p55
    %s58 = sadd.s32 %s57, 1
    %p61 = scmp.eq.s32.totalorder %s9, 3
    %p62 = scmp.ne.s32.totalorder %s57, %s59
    %p63 = scmp.eq.s32.totalorder %s9, 0
    %p64 = por %p62, %p63
    %p65 = scmp.ne.s32.totalorder %s57, %s59
    %p66 = scmp.eq.s32.totalorder %s14, 3
    %p67 = por %p65, %p66
    %p68 = scmp.ne.s32.totalorder %s59, %s60
    %p69 = scmp.eq.s32.totalorder %s14, 0
    %p70 = por %p68, %p69
    %p71 = scmp.ne.s32.totalorder %s59, %s60
    %p72 = scmp.eq.s32.totalorder %s15, 3
    %p73 = por %p71, %p72
    %p75 = scmp.ne.s32.totalorder %s60, %s74
    %p76 = scmp.eq.s32.totalorder %s15, 0
    %p77 = por %p75, %p76
    %s79 = sadd.s32 %s78, 1
    %p82 = scmp.eq.s32.totalorder %s9, 3
    %p83 = scmp.ne.s32.totalorder %s78, %s80
    %p84 = scmp.eq.s32.totalorder %s9, 0
    %p85 = por %p83, %p84
    %p86 = scmp.ne.s32.totalorder %s78, %s80
    %p87 = scmp.eq.s32.totalorder %s14, 3
    %p88 = por %p86, %p87
    %p89 = scmp.ne.s32.totalorder %s80, %s81
    %p90 = scmp.eq.s32.totalorder %s14, 0
    %p91 = por %p89, %p90
    %p92 = scmp.ne.s32.totalorder %s80, %s81
    %p93 = scmp.eq.s32.totalorder %s15, 3
    %p94 = por %p92, %p93
    %p96 = scmp.ne.s32.totalorder %s81, %s95
    %p97 = scmp.eq.s32.totalorder %s15, 0
    %p98 = por %p96, %p97
    %s99 = ssub.s32 %s17, %s24
    %s100 = ssub.s32 %s16, %s28
    %s101 = sor.u32 %s99, %s100
    %p102 = scmp.eq.s32.totalorder %s101, 0
    %s104 = sadd.s32 %s103, 1
    %s105 = scalar_select %p102, %s103, %s104
    %p108 = pneg %p102
    %p109 = scmp.eq.s32.totalorder %s9, 3
    %p110 = por %p108, %p109
    %p111 = scmp.ne.s32.totalorder %s103, %s106
    %p112 = scmp.eq.s32.totalorder %s9, 0
    %p113 = por %p111, %p112
    %p114 = scmp.ne.s32.totalorder %s103, %s106
    %p115 = scmp.eq.s32.totalorder %s14, 3
    %p116 = por %p114, %p115
    %p117 = scmp.ne.s32.totalorder %s106, %s107
    %p118 = scmp.eq.s32.totalorder %s14, 0
    %p119 = por %p117, %p118
    %p120 = scmp.ne.s32.totalorder %s106, %s107
    %p121 = scmp.eq.s32.totalorder %s15, 3
    %p122 = por %p120, %p121
    %p124 = scmp.ne.s32.totalorder %s107, %s123
    %p125 = scmp.eq.s32.totalorder %s15, 0
    %p126 = por %p124, %p125
    %p127 = scmp.le.s32.totalorder 1, %s9
    %p128 = scmp.lt.s32.totalorder %s9, 5
    %p129 = pnand %p127, %p128
    %p130 = pneg %p129
    // Predicated region
    $region9: #{spike_driven_transformer.28} parent=5 // pred_check
      _
    $region10: #{spike_driven_transformer.28} parent=5 // pred_check_branch
      %132 = sbr.rel (%p129) target = $region12
    $region11: #{spike_driven_transformer.28} parent=5 // pred_region
      %s133 = ssub.s32 %s9, 1
      // Predicated region
      $region13: #{spike_driven_transformer.28} parent=11 // pred_check
        %p134 = pneg %p70
      $region14: #{spike_driven_transformer.28} parent=11 // pred_check_branch
        %136 = sbr.rel (%p134) target = $region16
      $region15: #{spike_driven_transformer.28} parent=11 // pred_region
        _
      $region16: #{spike_driven_transformer.28} parent=11 // pred_fallthru
        _
      // Predicated region
      $region17: #{spike_driven_transformer.28} parent=11 // pred_check
        %p137 = pneg %p91
      $region18: #{spike_driven_transformer.28} parent=11 // pred_check_branch
        %139 = sbr.rel (%p137) target = $region20
      $region19: #{spike_driven_transformer.28} parent=11 // pred_region
        _
      $region20: #{spike_driven_transformer.28} parent=11 // pred_fallthru
        _
    $region12: #{spike_driven_transformer.28} parent=5 // pred_fallthru
      _
    %p140 = scmp.lt.s32.totalorder %s9, 4
    // Predicated region
    $region21: #{spike_driven_transformer.28} parent=5 // pred_check
      %p141 = pneg %p140
    $region22: #{spike_driven_transformer.28} parent=5 // pred_check_branch
      %143 = sbr.rel (%p141) target = $region24
    $region23: #{spike_driven_transformer.28} parent=5 // pred_region
      // Predicated region
      $region25: #{spike_driven_transformer.28} parent=23 // pred_check
        %p144 = pneg %p43
      $region26: #{spike_driven_transformer.28} parent=23 // pred_check_branch
        %146 = sbr.rel (%p144) target = $region28
      $region27: #{spike_driven_transformer.28} parent=23 // pred_region
        %p147 = scmp.lt.s32.totalorder %s17, 1
        %s148 = scalar_select %p147, %s17, 1
        %p149 = scmp.lt.s32.totalorder %s16, 1
        %s150 = scalar_select %p149, %s16, 1
        %s151 = smul.addr %s148, 2
        %s152 = sadd.s32 %s150, %s151
        %s153 = smul.addr %s152, 2
        %s154 = scalar_lea.vmem %s0, %s153
      $region28: #{spike_driven_transformer.28} parent=23 // pred_fallthru
        _
    $region24: #{spike_driven_transformer.28} parent=5 // pred_fallthru
      _
    %p155 = scmp.le.s32.totalorder 1, %s9
    %p156 = scmp.lt.s32.totalorder %s9, 5
    %p157 = pnand %p155, %p156
    %p158 = pneg %p157
    // Predicated region
    $region29: #{spike_driven_transformer.28} parent=5 // pred_check
      _
    $region30: #{spike_driven_transformer.28} parent=5 // pred_check_branch
      %160 = sbr.rel (%p157) target = $region32
    $region31: #{spike_driven_transformer.28} parent=5 // pred_region
      %s161 = ssub.s32 %s9, 1
      %p162 = scmp.lt.s32.totalorder %s19, 1
      %s163 = scalar_select %p162, %s19, 1
      %p164 = scmp.lt.s32.totalorder %s18, 1
      %s165 = scalar_select %p164, %s18, 1
      %s166 = smul.addr %s163, 2
      %s167 = sadd.s32 %s165, %s166
      %s168 = smul.addr %s167, 2
      %s169 = scalar_lea.vmem %s0, %s168
      %p170 = pneg %p49
      %p171 = pneg %p46
      %p172 = pneg %p70
      %p173 = pneg %p67
      %p174 = pneg %p91
      %p175 = pneg %p88
      %p176 = pneg %p119
      %p177 = pneg %p116
      %p178 = scmp.lt.s32.totalorder %s19, 1
      %s179 = scalar_select %p178, %s19, 1
      %p180 = scmp.lt.s32.totalorder %s18, 1
      %s181 = scalar_select %p180, %s18, 1
      %s182 = smul.addr %s179, 2
      %s183 = sadd.s32 %s181, %s182
      %s184 = smul.addr %s183, 2
      %s185 = scalar_lea.vmem %s3, %s184
      %p186 = scmp.lt.s32.totalorder %s19, 1
      %s187 = scalar_select %p186, %s19, 1
      %p188 = scmp.lt.s32.totalorder %s18, 1
      %s189 = scalar_select %p188, %s18, 1
      %s190 = smul.addr %s187, 2
      %s191 = sadd.s32 %s189, %s190
      %s192 = smul.addr %s191, 2
      %s193 = scalar_lea.vmem %s0, %s192
      %p194 = scmp.lt.s32.totalorder %s19, 1
      %s195 = scalar_select %p194, %s19, 1
      %p196 = scmp.lt.s32.totalorder %s18, 1
      %s197 = scalar_select %p196, %s18, 1
      %s198 = smul.addr %s195, 2
      %s199 = sadd.s32 %s197, %s198
      %s200 = smul.addr %s199, 2
      %s201 = scalar_lea.vmem %s3, %s200
      %p202 = scmp.eq.s32.totalorder %s19, 0
      // Predicated region
      $region33: #{spike_driven_transformer.28} parent=31 // pred_check
        %p203 = pneg %p202
      $region34: #{spike_driven_transformer.28} parent=31 // pred_check_branch
        %205 = sbr.rel (%p203) target = $region36
      $region35: #{spike_driven_transformer.28} parent=31 // pred_region
        %vm206 = vcmask 781312
        %207 = vst.msk [vmem:[#allocation2] sm:$0xf] %vm206, 0.0
        %vm208 = vcmask 253952
        %209 = vst.msk [vmem:[#allocation3] sm:$0x1] %vm208, 0.0
      $region36: #{spike_driven_transformer.28} parent=31 // pred_fallthru
        _
      %v210 = vld [vmem:[%s193] sm:$0x3]
      %v211 = vunpack.c.l.bf16 %v210
      %v212 = vld [vmem:[%s1] sm:$0x1]
      %v214 = vperm.slane %v212, 0
      %v216 = vmul.f32 %v211, %v214
      %v217 = vld [vmem:[%s2] sm:$0x1]
      %v219 = vperm.slane %v217, 0
      %v221 = vadd.f32 %v216, %v219
      %v222 = vld [vmem:[#allocation2] sm:$0xf]
      %v223 = vsub.f32 %v221, %v222
      %v224 = vmul.f32 %v223, 0.5
      %v225 = vadd.f32 %v222, %v224
      %vm226 = vcmp.ge.f32.partialorder %v225, 1.0
      %v227 = vsel %vm226, 1, 0
      %v228 = vcvt.s32.f32 %v227
      %v229 = vsub.f32 1.0, %v228
      %v230 = vmul.f32 %v225, %v229
      %vm231 = vcmask 781312
      %232 = vst.msk [vmem:[#allocation2] sm:$0xf] %vm231, %v230
      %234 = vrot.lane.b32.xlu0 %v228, 96
      %v235 = vpop.permute.xlu0 %234
      %v237 = vmul.f32 %v228, %v235
      %vm238 = vcmask 519424
      %v239 = vsel %vm238, %v237, 0.0
      %v240 = vrot.slane %v239, 4
      %v241 = vadd.f32 %v239, %v240
      %v242 = vrot.slane %v241, 2
      %v243 = vadd.f32 %v241, %v242
      %v244 = vrot.slane %v243, 1
      %v245 = vadd.f32 %v243, %v244
      %v246 = vld [vmem:[#allocation3] sm:$0x1]
      %v248 = vperm.slane %v246, 0
      %249 = vrot.lane.b32.xlu0 %v248, 32
      %v250 = vpop.permute.xlu0 %249
      %v252 = vsub.f32 %v245, %v250
      %v253 = vmul.f32 %v252, 0.5
      %255 = vrot.lane.b32.xlu0 %v253, 96
      %v256 = vpop.permute.xlu0 %255
      %v258 = vadd.f32 %v246, %v256
      %vm259 = vcmp.ge.f32.partialorder %v258, 1.0
      %v260 = vsel %vm259, 1, 0
      %v261 = vcvt.s32.f32 %v260
      %v262 = vsub.f32 1.0, %v261
      %v263 = vmul.f32 %v258, %v262
      %vm264 = vcmask 253952
      %265 = vst.msk [vmem:[#allocation3] sm:$0x1] %vm264, %v263
      %v267 = vperm.slane %v261, 0
      %v269 = vmul.f32 %v228, %v267
      %v270 = vpack.c.bf16 %v269, %v269
      %vm271 = vcmask 254976
      %272 = vst.msk [vmem:[%s201] sm:$0x3] %vm271, %v270
      %p273 = scmp.lt.s32.totalorder %s19, 1
      %s274 = scalar_select %p273, %s19, 1
      %p275 = scmp.lt.s32.totalorder %s18, 1
      %s276 = scalar_select %p275, %s18, 1
      %s277 = smul.addr %s274, 2
      %s278 = sadd.s32 %s276, %s277
      %s279 = smul.addr %s278, 2
      %s280 = scalar_lea.vmem %s3, %s279
      // Predicated region
      $region37: #{spike_driven_transformer.28} parent=31 // pred_check
        %p281 = pneg %p116
      $region38: #{spike_driven_transformer.28} parent=31 // pred_check_branch
        %283 = sbr.rel (%p281) target = $region40
      $region39: #{spike_driven_transformer.28} parent=31 // pred_region
        _
      $region40: #{spike_driven_transformer.28} parent=31 // pred_fallthru
        _
    $region32: #{spike_driven_transformer.28} parent=5 // pred_fallthru
      _
    %p284 = scmp.le.s32.totalorder 2, %s9
    // Predicated region
    $region41: #{spike_driven_transformer.28} parent=5 // pred_check
      %p285 = pneg %p284
    $region42: #{spike_driven_transformer.28} parent=5 // pred_check_branch
      %287 = sbr.rel (%p285) target = $region44
    $region43: #{spike_driven_transformer.28} parent=5 // pred_region
      %s288 = ssub.s32 %s9, 2
      // Predicated region
      $region45: #{spike_driven_transformer.28} parent=43 // pred_check
        %p289 = pneg %p122
      $region46: #{spike_driven_transformer.28} parent=43 // pred_check_branch
        %291 = sbr.rel (%p289) target = $region48
      $region47: #{spike_driven_transformer.28} parent=43 // pred_region
        %p292 = scmp.lt.s32.totalorder %s21, 1
        %s293 = scalar_select %p292, %s21, 1
        %p294 = scmp.lt.s32.totalorder %s20, 1
        %s295 = scalar_select %p294, %s20, 1
        %s296 = smul.addr %s293, 2
        %s297 = sadd.s32 %s295, %s296
        %s298 = smul.addr %s297, 2
        %s299 = scalar_lea.vmem %s3, %s298
      $region48: #{spike_driven_transformer.28} parent=43 // pred_fallthru
        _
    $region44: #{spike_driven_transformer.28} parent=5 // pred_fallthru
      _
  $region6: #{spike_driven_transformer.28} parent=0 // loop_footer
    %s13 = sadd.s32 1, %s9
  $region7: #{spike_driven_transformer.28} parent=0 // loop_footer_branch
    %8 = sbr.rel target = $region3
  $region8: #{spike_driven_transformer.28} parent=0 // loop_exit
    _

// kernel: spike_driven_transformer.42
$region0: #{spike_driven_transformer.42}
  #allocation0 [shape = 'u32[]', space=smem, size = 0x4, offset = 0x4, fixed_abs, tag = 'smem constant byte address 0x4 - core index']
  #allocation1 [shape = 'u32[72,128]{1,0:T(1,128)}', space=vmem, size = 0x9000, scoped, tag = 'internal scratch']
  #allocation2 [shape = 'f32[8,32]{1,0:T(8,128)}', space=vmem, size = 0x1000, scoped, tag = 'scratch operand']
  %s0 = inlined_call_operand.vmem [shape: f32[2,8,32], index: 0, kind: input, shape index: {}]
  %s1 = inlined_call_operand.vmem [shape: f32[1,32], index: 1, kind: input, shape index: {}]
  %s2 = inlined_call_operand.vmem [shape: f32[1,32], index: 2, kind: input, shape index: {}]
  %s3 = inlined_call_operand.vmem [shape: bf16[2,8,32], index: 3, kind: output, shape index: {}]
  %s4 = sld [smem:[#allocation0]]
  $region49: #{spike_driven_transformer.42} parent=0
    _
  %s6 = ssub.s32 1, %s4
  %s7 = scalar_select 0, %s6, %s4
  loop: start=0, step=1, limit=4
  $region2: #{spike_driven_transformer.42} parent=0 // loop_pre_header
    _
  $region3: #{spike_driven_transformer.42} parent=0 // loop_header
    %s9 = sphi 0, %s13
    %p10 = scmp.ge.s32.totalorder %s9, 4
    %s16 = sphi 0, %s28
    %s17 = sphi 0, %s24
    %s18 = sphi 0, %s16
    %s19 = sphi 0, %s17
    %s20 = sphi 0, %s18
    %s21 = sphi 0, %s19
    %s33 = sphi 0, %s35
    %s36 = sphi 0, %s33
    %s37 = sphi 0, %s36
    %s53 = sphi 0, %s37
    %s57 = sphi 0, %s57
    %s59 = sphi 0, %s57
    %s60 = sphi 0, %s59
    %s74 = sphi 0, %s60
    %s78 = sphi 0, %s78
    %s80 = sphi 0, %s78
    %s81 = sphi 0, %s80
    %s95 = sphi 0, %s81
    %s103 = sphi 0, %s105
    %s106 = sphi 0, %s103
    %s107 = sphi 0, %s106
    %s123 = sphi 0, %s107
  $region4: #{spike_driven_transformer.42} parent=0 // loop_header_branch
    %12 = sbr.rel (%p10) target = $region8
  $region5: #{spike_driven_transformer.42} parent=0 // loop_body
    %s14 = ssub.s32 %s9, 1
    %s15 = ssub.s32 %s9, 2
    %s22 = sadd.s32 1, %s17
    %p23 = scmp.ge.s32.totalorder %s22, 2
    %s24 = scalar_select %p23, 0, %s22
    %s25 = sadd.s32 1, %s16
    %s26 = scalar_select %p23, %s25, %s16
    %p27 = scmp.ge.s32.totalorder %s26, 1
    %s28 = scalar_select %p27, 0, %s26
    %s29 = ssub.s32 %s17, %s24
    %s30 = ssub.s32 %s16, %s28
    %s31 = sor.u32 %s29, %s30
    %p32 = scmp.eq.s32.totalorder %s31, 0
    %s34 = sadd.s32 %s33, 1
    %s35 = scalar_select %p32, %s33, %s34
    %p38 = pneg %p32
    %p39 = scmp.eq.s32.totalorder %s9, 1
    %p40 = por %p38, %p39
    %p41 = scmp.ne.s32.totalorder %s33, %s36
    %p42 = scmp.eq.s32.totalorder %s9, 0
    %p43 = por %p41, %p42
    %p44 = scmp.ne.s32.totalorder %s33, %s36
    %p45 = scmp.eq.s32.totalorder %s14, 1
    %p46 = por %p44, %p45
    %p47 = scmp.ne.s32.totalorder %s36, %s37
    %p48 = scmp.eq.s32.totalorder %s14, 0
    %p49 = por %p47, %p48
    %p50 = scmp.ne.s32.totalorder %s36, %s37
    %p51 = scmp.eq.s32.totalorder %s15, 1
    %p52 = por %p50, %p51
    %p54 = scmp.ne.s32.totalorder %s37, %s53
    %p55 = scmp.eq.s32.totalorder %s15, 0
    %p56 = por %p54, %p55
    %s58 = sadd.s32 %s57, 1
    %p61 = scmp.eq.s32.totalorder %s9, 1
    %p62 = scmp.ne.s32.totalorder %s57, %s59
    %p63 = scmp.eq.s32.totalorder %s9, 0
    %p64 = por %p62, %p63
    %p65 = scmp.ne.s32.totalorder %s57, %s59
    %p66 = scmp.eq.s32.totalorder %s14, 1
    %p67 = por %p65, %p66
    %p68 = scmp.ne.s32.totalorder %s59, %s60
    %p69 = scmp.eq.s32.totalorder %s14, 0
    %p70 = por %p68, %p69
    %p71 = scmp.ne.s32.totalorder %s59, %s60
    %p72 = scmp.eq.s32.totalorder %s15, 1
    %p73 = por %p71, %p72
    %p75 = scmp.ne.s32.totalorder %s60, %s74
    %p76 = scmp.eq.s32.totalorder %s15, 0
    %p77 = por %p75, %p76
    %s79 = sadd.s32 %s78, 1
    %p82 = scmp.eq.s32.totalorder %s9, 1
    %p83 = scmp.ne.s32.totalorder %s78, %s80
    %p84 = scmp.eq.s32.totalorder %s9, 0
    %p85 = por %p83, %p84
    %p86 = scmp.ne.s32.totalorder %s78, %s80
    %p87 = scmp.eq.s32.totalorder %s14, 1
    %p88 = por %p86, %p87
    %p89 = scmp.ne.s32.totalorder %s80, %s81
    %p90 = scmp.eq.s32.totalorder %s14, 0
    %p91 = por %p89, %p90
    %p92 = scmp.ne.s32.totalorder %s80, %s81
    %p93 = scmp.eq.s32.totalorder %s15, 1
    %p94 = por %p92, %p93
    %p96 = scmp.ne.s32.totalorder %s81, %s95
    %p97 = scmp.eq.s32.totalorder %s15, 0
    %p98 = por %p96, %p97
    %s99 = ssub.s32 %s17, %s24
    %s100 = ssub.s32 %s16, %s28
    %s101 = sor.u32 %s99, %s100
    %p102 = scmp.eq.s32.totalorder %s101, 0
    %s104 = sadd.s32 %s103, 1
    %s105 = scalar_select %p102, %s103, %s104
    %p108 = pneg %p102
    %p109 = scmp.eq.s32.totalorder %s9, 1
    %p110 = por %p108, %p109
    %p111 = scmp.ne.s32.totalorder %s103, %s106
    %p112 = scmp.eq.s32.totalorder %s9, 0
    %p113 = por %p111, %p112
    %p114 = scmp.ne.s32.totalorder %s103, %s106
    %p115 = scmp.eq.s32.totalorder %s14, 1
    %p116 = por %p114, %p115
    %p117 = scmp.ne.s32.totalorder %s106, %s107
    %p118 = scmp.eq.s32.totalorder %s14, 0
    %p119 = por %p117, %p118
    %p120 = scmp.ne.s32.totalorder %s106, %s107
    %p121 = scmp.eq.s32.totalorder %s15, 1
    %p122 = por %p120, %p121
    %p124 = scmp.ne.s32.totalorder %s107, %s123
    %p125 = scmp.eq.s32.totalorder %s15, 0
    %p126 = por %p124, %p125
    %p127 = scmp.le.s32.totalorder 1, %s9
    %p128 = scmp.lt.s32.totalorder %s9, 3
    %p129 = pnand %p127, %p128
    %p130 = pneg %p129
    // Predicated region
    $region9: #{spike_driven_transformer.42} parent=5 // pred_check
      _
    $region10: #{spike_driven_transformer.42} parent=5 // pred_check_branch
      %132 = sbr.rel (%p129) target = $region12
    $region11: #{spike_driven_transformer.42} parent=5 // pred_region
      %s133 = ssub.s32 %s9, 1
      // Predicated region
      $region13: #{spike_driven_transformer.42} parent=11 // pred_check
        %p134 = pneg %p70
      $region14: #{spike_driven_transformer.42} parent=11 // pred_check_branch
        %136 = sbr.rel (%p134) target = $region16
      $region15: #{spike_driven_transformer.42} parent=11 // pred_region
        _
      $region16: #{spike_driven_transformer.42} parent=11 // pred_fallthru
        _
      // Predicated region
      $region17: #{spike_driven_transformer.42} parent=11 // pred_check
        %p137 = pneg %p91
      $region18: #{spike_driven_transformer.42} parent=11 // pred_check_branch
        %139 = sbr.rel (%p137) target = $region20
      $region19: #{spike_driven_transformer.42} parent=11 // pred_region
        _
      $region20: #{spike_driven_transformer.42} parent=11 // pred_fallthru
        _
    $region12: #{spike_driven_transformer.42} parent=5 // pred_fallthru
      _
    %p140 = scmp.lt.s32.totalorder %s9, 2
    // Predicated region
    $region21: #{spike_driven_transformer.42} parent=5 // pred_check
      %p141 = pneg %p140
    $region22: #{spike_driven_transformer.42} parent=5 // pred_check_branch
      %143 = sbr.rel (%p141) target = $region24
    $region23: #{spike_driven_transformer.42} parent=5 // pred_region
      // Predicated region
      $region25: #{spike_driven_transformer.42} parent=23 // pred_check
        %p144 = pneg %p43
      $region26: #{spike_driven_transformer.42} parent=23 // pred_check_branch
        %146 = sbr.rel (%p144) target = $region28
      $region27: #{spike_driven_transformer.42} parent=23 // pred_region
        %p147 = scmp.lt.s32.totalorder %s17, 1
        %s148 = scalar_select %p147, %s17, 1
        %p149 = scmp.lt.s32.totalorder %s16, 0
        %s150 = scalar_select %p149, %s16, 0
        %s151 = sadd.s32 %s150, %s148
        %s152 = smul.addr %s151, 8
        %s153 = scalar_lea.vmem %s0, %s152
      $region28: #{spike_driven_transformer.42} parent=23 // pred_fallthru
        _
    $region24: #{spike_driven_transformer.42} parent=5 // pred_fallthru
      _
    %p154 = scmp.le.s32.totalorder 1, %s9
    %p155 = scmp.lt.s32.totalorder %s9, 3
    %p156 = pnand %p154, %p155
    %p157 = pneg %p156
    // Predicated region
    $region29: #{spike_driven_transformer.42} parent=5 // pred_check
      _
    $region30: #{spike_driven_transformer.42} parent=5 // pred_check_branch
      %159 = sbr.rel (%p156) target = $region32
    $region31: #{spike_driven_transformer.42} parent=5 // pred_region
      %s160 = ssub.s32 %s9, 1
      %p161 = scmp.lt.s32.totalorder %s19, 1
      %s162 = scalar_select %p161, %s19, 1
      %p163 = scmp.lt.s32.totalorder %s18, 0
      %s164 = scalar_select %p163, %s18, 0
      %s165 = sadd.s32 %s164, %s162
      %s166 = smul.addr %s165, 8
      %s167 = scalar_lea.vmem %s0, %s166
      %p168 = pneg %p49
      %p169 = pneg %p46
      %p170 = pneg %p70
      %p171 = pneg %p67
      %p172 = pneg %p91
      %p173 = pneg %p88
      %p174 = pneg %p119
      %p175 = pneg %p116
      %p176 = scmp.lt.s32.totalorder %s19, 1
      %s177 = scalar_select %p176, %s19, 1
      %p178 = scmp.lt.s32.totalorder %s18, 0
      %s179 = scalar_select %p178, %s18, 0
      %s180 = sadd.s32 %s179, %s177
      %s181 = smul.addr %s180, 4
      %s182 = scalar_lea.vmem %s3, %s181
      %p183 = scmp.lt.s32.totalorder %s19, 1
      %s184 = scalar_select %p183, %s19, 1
      %p185 = scmp.lt.s32.totalorder %s18, 0
      %s186 = scalar_select %p185, %s18, 0
      %s187 = sadd.s32 %s186, %s184
      %s188 = smul.addr %s187, 8
      %s189 = scalar_lea.vmem %s0, %s188
      %p190 = scmp.lt.s32.totalorder %s19, 1
      %s191 = scalar_select %p190, %s19, 1
      %p192 = scmp.lt.s32.totalorder %s18, 0
      %s193 = scalar_select %p192, %s18, 0
      %s194 = sadd.s32 %s193, %s191
      %s195 = smul.addr %s194, 4
      %s196 = scalar_lea.vmem %s3, %s195
      %p197 = scmp.eq.s32.totalorder %s19, 0
      // Predicated region
      $region33: #{spike_driven_transformer.42} parent=31 // pred_check
        %p198 = pneg %p197
      $region34: #{spike_driven_transformer.42} parent=31 // pred_check_branch
        %200 = sbr.rel (%p198) target = $region36
      $region35: #{spike_driven_transformer.42} parent=31 // pred_region
        %vm201 = vcmask 261120
        %202 = vst.msk [vmem:[#allocation2] sm:$0xff] %vm201, 0.0
      $region36: #{spike_driven_transformer.42} parent=31 // pred_fallthru
        _
      %v203 = vld [vmem:[%s189] sm:$0xff]
      %v204 = vld [vmem:[%s1] sm:$0x1]
      %v206 = vperm.slane %v204, 0
      %v208 = vmul.f32 %v203, %v206
      %v209 = vld [vmem:[%s2] sm:$0x1]
      %v211 = vperm.slane %v209, 0
      %v213 = vadd.f32 %v208, %v211
      %v214 = vld [vmem:[#allocation2] sm:$0xff]
      %v215 = vsub.f32 %v213, %v214
      %v216 = vmul.f32 %v215, 0.5
      %v217 = vadd.f32 %v214, %v216
      %vm218 = vcmp.ge.f32.partialorder %v217, 1.0
      %v219 = vsel %vm218, 1, 0
      %v220 = vcvt.s32.f32 %v219
      %v221 = vpack.c.bf16 %v220, %v220
      %vm222 = vcmask 257024
      %223 = vst.msk [vmem:[%s196] sm:$0xf] %vm222, %v221
      %v224 = vsel %vm218, 0.0, %v217
      %vm225 = vcmask 261120
      %226 = vst.msk [vmem:[#allocation2] sm:$0xff] %vm225, %v224
      %p227 = scmp.lt.s32.totalorder %s19, 1
      %s228 = scalar_select %p227, %s19, 1
      %p229 = scmp.lt.s32.totalorder %s18, 0
      %s230 = scalar_select %p229, %s18, 0
      %s231 = sadd.s32 %s230, %s228
      %s232 = smul.addr %s231, 4
      %s233 = scalar_lea.vmem %s3, %s232
      // Predicated region
      $region37: #{spike_driven_transformer.42} parent=31 // pred_check
        %p234 = pneg %p116
      $region38: #{spike_driven_transformer.42} parent=31 // pred_check_branch
        %236 = sbr.rel (%p234) target = $region40
      $region39: #{spike_driven_transformer.42} parent=31 // pred_region
        _
      $region40: #{spike_driven_transformer.42} parent=31 // pred_fallthru
        _
    $region32: #{spike_driven_transformer.42} parent=5 // pred_fallthru
      _
    %p237 = scmp.le.s32.totalorder 2, %s9
    // Predicated region
    $region41: #{spike_driven_transformer.42} parent=5 // pred_check
      %p238 = pneg %p237
    $region42: #{spike_driven_transformer.42} parent=5 // pred_check_branch
      %240 = sbr.rel (%p238) target = $region44
    $region43: #{spike_driven_transformer.42} parent=5 // pred_region
      %s241 = ssub.s32 %s9, 2
      // Predicated region
      $region45: #{spike_driven_transformer.42} parent=43 // pred_check
        %p242 = pneg %p122
      $region46: #{spike_driven_transformer.42} parent=43 // pred_check_branch
        %244 = sbr.rel (%p242) target = $region48
      $region47: #{spike_driven_transformer.42} parent=43 // pred_region
        %p245 = scmp.lt.s32.totalorder %s21, 1
        %s246 = scalar_select %p245, %s21, 1
        %p247 = scmp.lt.s32.totalorder %s20, 0
        %s248 = scalar_select %p247, %s20, 0
        %s249 = sadd.s32 %s248, %s246
        %s250 = smul.addr %s249, 4
        %s251 = scalar_lea.vmem %s3, %s250
      $region48: #{spike_driven_transformer.42} parent=43 // pred_fallthru
        _
    $region44: #{spike_driven_transformer.42} parent=5 // pred_fallthru
      _
  $region6: #{spike_driven_transformer.42} parent=0 // loop_footer
    %s13 = sadd.s32 1, %s9
  $region7: #{spike_driven_transformer.42} parent=0 // loop_footer_branch
    %8 = sbr.rel target = $region3
  $region8: #{spike_driven_transformer.42} parent=0 // loop_exit
    _

// kernel: spike_driven_transformer.43
$region0: #{spike_driven_transformer.43}
  #allocation0 [shape = 'u32[]', space=smem, size = 0x4, offset = 0x4, fixed_abs, tag = 'smem constant byte address 0x4 - core index']
  #allocation1 [shape = 'u32[72,128]{1,0:T(1,128)}', space=vmem, size = 0x9000, scoped, tag = 'internal scratch']
  %s0 = inlined_call_operand.vmem [shape: bf16[8,128], index: 0, kind: input, shape index: {}]
  %s1 = inlined_call_operand.vmem [shape: bf16[128,128], index: 1, kind: input, shape index: {}]
  %s2 = inlined_call_operand.vmem [shape: f32[8,128], index: 2, kind: output, shape index: {}]
  %s3 = sld [smem:[#allocation0]]
  $region18: #{spike_driven_transformer.43} parent=0
    _
  %s5 = ssub.s32 1, %s3
  %s6 = scalar_select 0, %s5, %s3
  // Predicated region
  $region2: #{spike_driven_transformer.43} parent=0 // pred_check
    _
  $region3: #{spike_driven_transformer.43} parent=0 // pred_check_branch
    %8 = sbr.rel (0) target = $region5
  $region4: #{spike_driven_transformer.43} parent=0 // pred_region
    _
  $region5: #{spike_driven_transformer.43} parent=0 // pred_fallthru
    _
  // Predicated region
  $region6: #{spike_driven_transformer.43} parent=0 // pred_check
    _
  $region7: #{spike_driven_transformer.43} parent=0 // pred_check_branch
    %10 = sbr.rel (0) target = $region9
  $region8: #{spike_driven_transformer.43} parent=0 // pred_region
    _
  $region9: #{spike_driven_transformer.43} parent=0 // pred_fallthru
    _
  %v11 = vld [vmem:[%s0] sm:$0xf]
  %v12 = vld [vmem:[%s1] sm:$0xf]
  %v13 = vld [vmem:[%s1 + $0x4] sm:$0xf]
  %v14 = vld [vmem:[%s1 + $0x8] sm:$0xf]
  %v15 = vld [vmem:[%s1 + $0xc] sm:$0xf]
  %v16 = vld [vmem:[%s1 + $0x10] sm:$0xf]
  %v17 = vld [vmem:[%s1 + $0x14] sm:$0xf]
  %v18 = vld [vmem:[%s1 + $0x18] sm:$0xf]
  %v19 = vld [vmem:[%s1 + $0x1c] sm:$0xf]
  %v20 = vld [vmem:[%s1 + $0x20] sm:$0xf]
  %v21 = vld [vmem:[%s1 + $0x24] sm:$0xf]
  %v22 = vld [vmem:[%s1 + $0x28] sm:$0xf]
  %v23 = vld [vmem:[%s1 + $0x2c] sm:$0xf]
  %v24 = vld [vmem:[%s1 + $0x30] sm:$0xf]
  %v25 = vld [vmem:[%s1 + $0x34] sm:$0xf]
  %v26 = vld [vmem:[%s1 + $0x38] sm:$0xf]
  %v27 = vld [vmem:[%s1 + $0x3c] sm:$0xf]
  %v44 = vunpack.c.l.b16 %v12
  %v45 = vunpack.c.l.b16 %v13
  %v46 = vunpack.c.l.b16 %v14
  %v47 = vunpack.c.l.b16 %v15
  %v48 = vunpack.c.l.b16 %v16
  %v49 = vunpack.c.l.b16 %v17
  %v50 = vunpack.c.l.b16 %v18
  %v51 = vunpack.c.l.b16 %v19
  %v52 = vunpack.c.l.b16 %v20
  %v53 = vunpack.c.l.b16 %v21
  %v54 = vunpack.c.l.b16 %v22
  %v55 = vunpack.c.l.b16 %v23
  %v56 = vunpack.c.l.b16 %v24
  %v57 = vunpack.c.l.b16 %v25
  %v58 = vunpack.c.l.b16 %v26
  %v59 = vunpack.c.l.b16 %v27
  %v60 = vpack.c.b16 %v45, %v44
  %v61 = vpack.c.b16 %v47, %v46
  %v62 = vpack.c.b16 %v49, %v48
  %v63 = vpack.c.b16 %v51, %v50
  %v64 = vpack.c.b16 %v53, %v52
  %v65 = vpack.c.b16 %v55, %v54
  %v66 = vpack.c.b16 %v57, %v56
  %v67 = vpack.c.b16 %v59, %v58
  %76 = vmatpush.bf16.msra.mxu0 %v67
  %77 = vmatpush.bf16.msra.mxu0 %v66
  %78 = vmatpush.bf16.msra.mxu0 %v65
  %79 = vmatpush.bf16.msra.mxu0 %v64
  %80 = vmatpush.bf16.msra.mxu0 %v63
  %81 = vmatpush.bf16.msra.mxu0 %v62
  %82 = vmatpush.bf16.msra.mxu0 %v61
  %83 = vmatpush.bf16.msra.mxu0 %v60
  %84 = vmatmul.bf16.gmra.mxu0 %v11
  %v85 = vpop.f32.mrf.mxu0
  %v86 = vadd.f32 0.0, %v85
  %v87 = vpop.f32.mrf.mxu0
  %88 = vdwg.mxu0
  %89 = vst [vmem:[%s2] sm:$0xff] %v86
  // Predicated region
  $region10: #{spike_driven_transformer.43} parent=0 // pred_check
    _
  $region11: #{spike_driven_transformer.43} parent=0 // pred_check_branch
    %91 = sbr.rel (0) target = $region13
  $region12: #{spike_driven_transformer.43} parent=0 // pred_region
    _
  $region13: #{spike_driven_transformer.43} parent=0 // pred_fallthru
    _
  // Predicated region
  $region14: #{spike_driven_transformer.43} parent=0 // pred_check
    _
  $region15: #{spike_driven_transformer.43} parent=0 // pred_check_branch
    %93 = sbr.rel (0) target = $region17
  $region16: #{spike_driven_transformer.43} parent=0 // pred_region
    _
  $region17: #{spike_driven_transformer.43} parent=0 // pred_fallthru
    _

</llo_original>
